<compile_context>
chip_gen: v7x
topology: tpu7x:2x2x1
jax: 0.10.0
libtpu: 0.0.40
codegen_flags: <defaults>
</compile_context>

<pallas_src>
import functools
import math

import jax
import jax.numpy as jnp
from jax.experimental import pallas as pl
from jax.experimental.pallas import tpu as pltpu

NEG_SLOPE = 0.2


def _leaky(x):
    return jnp.where(x > 0, x, NEG_SLOPE * x)


# ------------------------------- pass 1 kernel -------------------------------
# x block: (1, K, 6, tile_N)  channels-first, N on lanes.
# Outputs: h3 (1, 256, tile_N) bf16 ; g (1, 256, 1) f32 accumulated over tiles.
def pass1_kernel(x_ref, w1_ref, b1_ref, w2_ref, b2_ref, w3_ref, b3_ref,
                 h3_ref, g_ref):
    K = x_ref.shape[1]
    bf16 = jnp.bfloat16

    # Running max over the neighbor dimension K (static unrolled loop).
    p = None
    for k in range(K):
        xk = x_ref[0, k]                                    # (6, tile_N) f32
        # conv1: 6 -> 64 (tiny contraction; MXU-underfilled but cheap).
        h1 = _leaky(jnp.dot(w1_ref[...], xk,
                            preferred_element_type=jnp.float32) + b1_ref[...])
        # conv2: 64 -> 128, bf16 MXU, f32 accumulate.
        h2 = _leaky(jnp.dot(w2_ref[...], h1.astype(bf16),
                            preferred_element_type=jnp.float32) + b2_ref[...])
        p = h2 if p is None else jnp.maximum(p, h2)         # (128, tile_N)

    # conv3: 128 -> 256.
    h3 = _leaky(jnp.dot(w3_ref[...], p.astype(bf16),
                        preferred_element_type=jnp.float32) + b3_ref[...])  # (256, tile_N) f32

    h3_ref[0] = h3.astype(bf16)                             # lane-dense store

    # Per-batch global max, accumulated across N tiles (t axis is "arbitrary").
    g_tile = jnp.max(h3, axis=1, keepdims=True)             # (256, 1)

    @pl.when(pl.program_id(1) == 0)
    def _init():
        g_ref[0] = jnp.full_like(g_tile, -jnp.inf)

    g_ref[0] = jnp.maximum(g_ref[0], g_tile)


# ------------------------------- pass 2 kernel -------------------------------
# h3 block: (1, 256, tile_N) bf16 ; gc block: (1, 128, 1) f32 = W4b @ g + b4.
# Output block: (1, 3, tile_N)  -> final (B, 3, N), N on lanes (unmasked vst).
def pass2_kernel(h3_ref, gc_ref, w4a_ref, w5_ref, b5_ref, w6_ref, b6_ref,
                 out_ref):
    bf16 = jnp.bfloat16
    h3 = h3_ref[0]                                          # (256, tile_N) bf16

    # deconv1: per-point part + hoisted global contribution (bias-like).
    h4 = _leaky(jnp.dot(w4a_ref[...], h3,
                        preferred_element_type=jnp.float32) + gc_ref[0])      # (128, tile_N)
    # deconv2: 128 -> 64.
    h5 = _leaky(jnp.dot(w5_ref[...], h4.astype(bf16),
                        preferred_element_type=jnp.float32) + b5_ref[...])    # (64, tile_N)
    # deconv3: 64 -> 3, plain conv (no BN / activation), f32.
    out_ref[0] = jnp.dot(w6_ref[...], h5,
                         preferred_element_type=jnp.float32) + b6_ref[...]    # (3, tile_N)


# --------------------------------- wrapper -----------------------------------
def _pick_tile_n(n, cap=1024):
    """Largest multiple of 128 dividing n (capped); fall back to full n."""
    if n % 128 == 0:
        t = min(cap, n)
        t -= t % 128
        while n % t:
            t -= 128
        return t
    return n  # non-128-multiple N: single tile along N (still correct)


@functools.partial(jax.jit, static_argnames=("tile_n",))
def point_shift_net(x, params, tile_n=None):
    """x: (B, 6, N, K) float32 (PyTorch NCHW). Returns (B, 3, N)."""
    (w1, b1, w2, b2, w3, b3, w4a, w4b, b4, w5, b5, w6, b6) = params
    B, C, N, K = x.shape
    if tile_n is None:
        tile_n = _pick_tile_n(N)
    assert N % tile_n == 0 and (tile_n % 128 == 0 or tile_n == N)
    nt = N // tile_n

    # Single relayout of the input so all kernel tiles are lane-dense in N and
    # per-neighbor slices are leading-dim indexing (no in-kernel relayout).
    xt = jnp.transpose(x, (0, 3, 1, 2))                     # (B, K, 6, N)

    cp1 = pltpu.CompilerParams(
        dimension_semantics=("parallel", "arbitrary"),      # t accumulates g
        vmem_limit_bytes=32 * 1024 * 1024)
    cp2 = pltpu.CompilerParams(
        dimension_semantics=("parallel", "parallel"),       # fully parallel
        vmem_limit_bytes=32 * 1024 * 1024)

    p1_params = (w1, b1, w2, b2, w3, b3)
    h3, g = pl.pallas_call(
        pass1_kernel,
        out_shape=(jax.ShapeDtypeStruct((B, 256, N), jnp.bfloat16),
                   jax.ShapeDtypeStruct((B, 256, 1), jnp.float32)),
        grid=(B, nt),
        in_specs=[pl.BlockSpec((1, K, C, tile_n), lambda b, t: (b, 0, 0, t))]
                 + [pl.BlockSpec(p.shape, lambda b, t: (0, 0)) for p in p1_params],
        out_specs=(pl.BlockSpec((1, 256, tile_n), lambda b, t: (b, 0, t)),
                   pl.BlockSpec((1, 256, 1), lambda b, t: (b, 0, 0))),
        compiler_params=cp1,
    )(xt, *p1_params)

    # Hoisted per-batch global-feature contribution (tiny: B x 256 x 128).
    gc = jnp.einsum('oc,bcx->box', w4b, g,
                    preferred_element_type=jnp.float32) + b4[None]  # (B, 128, 1)

    p2_params = (w4a, w5, b5, w6, b6)
    out = pl.pallas_call(
        pass2_kernel,
        out_shape=jax.ShapeDtypeStruct((B, 3, N), jnp.float32),
        grid=(B, nt),
        in_specs=[pl.BlockSpec((1, 256, tile_n), lambda b, t: (b, 0, t)),
                  pl.BlockSpec((1, 128, 1), lambda b, t: (b, 0, 0))]
                 + [pl.BlockSpec(p.shape, lambda b, t: (0, 0)) for p in p2_params],
        out_specs=pl.BlockSpec((1, 3, tile_n), lambda b, t: (b, 0, t)),
        compiler_params=cp2,
    )(h3, gc, *p2_params)

    return out                                              # (B, 3, N), PyTorch layout


# ----------------------------- parameter setup ------------------------------
def _conv_init(key, cin, cout):
    k1, k2 = jax.random.split(key)
    bound = 1.0 / math.sqrt(cin)
    w = jax.random.uniform(k1, (cout, cin), jnp.float32, -bound, bound)  # (Cout, Cin)
    b = jax.random.uniform(k2, (cout,), jnp.float32, -bound, bound)
    return w, b


def _bn_init(key, c):
    k1, k2 = jax.random.split(key)
    gamma = 1.0 + 0.1 * jax.random.normal(k1, (c,), jnp.float32)
    beta = 0.1 * jax.random.normal(k2, (c,), jnp.float32)
    mean = jnp.zeros((c,), jnp.float32)
    var = jnp.ones((c,), jnp.float32)
    return gamma, beta, mean, var


def _fold_bn(w, b, gamma, beta, mean, var, eps=1e-5):
    # TODO(synk): BatchNorm is implemented in eval mode (running statistics) and
    # folded into the preceding 1x1 conv; training-mode batch stats are not reproduced.
    scale = gamma / jnp.sqrt(var + eps)
    w_f = w * scale[:, None]
    b_f = (b - mean) * scale + beta
    return w_f.astype(jnp.float32), b_f.reshape(-1, 1).astype(jnp.float32)


def init_params(key):
    keys = jax.random.split(key, 12)
    bf16 = jnp.bfloat16
    # conv1: 6 -> 64 + bn1 (kept f32: tiny contraction, raw-input precision)
    w1, b1 = _conv_init(keys[0], 6, 64)
    w1, b1 = _fold_bn(w1, b1, *_bn_init(keys[1], 64))
    # conv2: 64 -> 128 + bn2
    w2, b2 = _conv_init(keys[2], 64, 128)
    w2, b2 = _fold_bn(w2, b2, *_bn_init(keys[3], 128))
    # conv3: 128 -> 256 + bn3
    w3, b3 = _conv_init(keys[4], 128, 256)
    w3, b3 = _fold_bn(w3, b3, *_bn_init(keys[5], 256))
    # deconv1: 512 -> 128 + bn4 ; split input channels into [per-point | global]
    w4, b4 = _conv_init(keys[6], 512, 128)
    w4, b4 = _fold_bn(w4, b4, *_bn_init(keys[7], 128))
    w4a, w4b = w4[:, :256], w4[:, 256:]
    # deconv2: 128 -> 64 + bn5
    w5, b5 = _conv_init(keys[8], 128, 64)
    w5, b5 = _fold_bn(w5, b5, *_bn_init(keys[9], 64))
    # deconv3: 64 -> 3 (no BN, f32)
    w6, b6 = _conv_init(keys[10], 64, 3)
    b6 = b6.reshape(-1, 1)

    return [w1, b1,
            w2.astype(bf16), b2,
            w3.astype(bf16), b3,
            w4a.astype(bf16), w4b, b4,
            w5.astype(bf16), b5,
            w6, b6]


# ------------------------------ plain-JAX reference -------------------------
def reference(x, params):
    (w1, b1, w2, b2, w3, b3, w4a, w4b, b4, w5, b5, w6, b6) = params
    bf16, f32 = jnp.bfloat16, jnp.float32
    xt = jnp.transpose(x, (0, 3, 1, 2))                          # (B, K, 6, N)
    h1 = _leaky(jnp.einsum('oc,bkcn->bkon', w1, xt,
                           preferred_element_type=f32) + b1)
    h2 = _leaky(jnp.einsum('oc,bkcn->bkon', w2, h1.astype(bf16),
                           preferred_element_type=f32) + b2)
    p = jnp.max(h2, axis=1)                                      # (B, 128, N)
    h3 = _leaky(jnp.einsum('oc,bcn->bon', w3, p.astype(bf16),
                           preferred_element_type=f32) + b3)     # (B, 256, N)
    g = jnp.max(h3, axis=2, keepdims=True)                       # (B, 256, 1)
    gc = jnp.einsum('oc,bcx->box', w4b, g,
                    preferred_element_type=f32) + b4[None]       # (B, 128, 1)
    h4 = _leaky(jnp.einsum('oc,bcn->bon', w4a, h3.astype(bf16),
                           preferred_element_type=f32) + gc)
    h5 = _leaky(jnp.einsum('oc,bcn->bon', w5, h4.astype(bf16),
                           preferred_element_type=f32) + b5)
    out = jnp.einsum('oc,bcn->bon', w6, h5,
                     preferred_element_type=f32) + b6
    return out                                                   # (B, 3, N)


if __name__ == "__main__":
    key = jax.random.PRNGKey(0)
    kx1, kx2, kp = jax.random.split(key, 3)
    params = init_params(kp)

    # Test 1: small shape, single N tile (tile_n == N).
    B, N, K = 2, 16, 8
    x = jax.random.normal(kx1, (B, 6, N, K), jnp.float32)
    out = jax.block_until_ready(point_shift_net(x, params))
    ref = reference(x, params)
    assert out.shape == (B, 3, N), out.shape
    err = float(jnp.max(jnp.abs(out - ref)))
    assert err < 2e-2, err

    # Test 2: exercises multi-tile N (forced tile_n=128 -> 2 tiles) and the
    # cross-tile global-max accumulation / two-pass split.
    B2, N2, K2 = 2, 256, 8
    x2 = jax.random.normal(kx2, (B2, 6, N2, K2), jnp.float32)
    out2 = jax.block_until_ready(point_shift_net(x2, params, tile_n=128))
    ref2 = reference(x2, params)
    assert out2.shape == (B2, 3, N2), out2.shape
    err2 = float(jnp.max(jnp.abs(out2 - ref2)))
    assert err2 < 2e-2, err2

    print("KERNEL_OK")
</pallas_src>

<mosaic_0001>
module attributes {stable_mosaic.version = 11 : i64} {
  func.func @pass1_kernel(%arg0: i32, %arg1: i32, %arg2: memref<1x8x6x16xf32, #tpu.memory_space<vmem>>, %arg3: memref<64x6xf32, #tpu.memory_space<vmem>>, %arg4: memref<64x1xf32, #tpu.memory_space<vmem>>, %arg5: memref<128x64xbf16, #tpu.memory_space<vmem>>, %arg6: memref<128x1xf32, #tpu.memory_space<vmem>>, %arg7: memref<256x128xbf16, #tpu.memory_space<vmem>>, %arg8: memref<256x1xf32, #tpu.memory_space<vmem>>, %arg9: memref<1x256x16xbf16, #tpu.memory_space<vmem>>, %arg10: memref<1x256x1xf32, #tpu.memory_space<vmem>>) attributes {dimension_semantics = [#tpu.dimension_semantics<parallel>, #tpu.dimension_semantics<arbitrary>], iteration_bounds = array<i64: 2, 1>, scalar_prefetch = 0 : i64, scratch_operands = 0 : i64, tpu.core_type = #tpu.core_type<tc>, window_params = [{transform_indices = @transform_0, window_bounds = array<i64: 1, 8, 6, 16>}, {pipeline_mode = #tpu.pipeline_mode<synchronous>, transform_indices = @transform_1, window_bounds = array<i64: 64, 6>}, {pipeline_mode = #tpu.pipeline_mode<synchronous>, transform_indices = @transform_2, window_bounds = array<i64: 64, 1>}, {pipeline_mode = #tpu.pipeline_mode<synchronous>, transform_indices = @transform_3, window_bounds = array<i64: 128, 64>}, {pipeline_mode = #tpu.pipeline_mode<synchronous>, transform_indices = @transform_4, window_bounds = array<i64: 128, 1>}, {pipeline_mode = #tpu.pipeline_mode<synchronous>, transform_indices = @transform_5, window_bounds = array<i64: 256, 128>}, {pipeline_mode = #tpu.pipeline_mode<synchronous>, transform_indices = @transform_6, window_bounds = array<i64: 256, 1>}, {transform_indices = @transform_7, window_bounds = array<i64: 1, 256, 16>}, {transform_indices = @transform_8, window_bounds = array<i64: 1, 256, 1>}]} {
    %c0 = arith.constant 0 : index
    %c0_0 = arith.constant 0 : index
    %c0_1 = arith.constant 0 : index
    %c0_2 = arith.constant 0 : index
    %0 = vector.load %arg2[%c0, %c0_0, %c0_1, %c0_2] : memref<1x8x6x16xf32, #tpu.memory_space<vmem>>, vector<1x1x6x16xf32>
    %1 = vector.shape_cast %0 : vector<1x1x6x16xf32> to vector<6x16xf32>
    %c0_3 = arith.constant 0 : index
    %c0_4 = arith.constant 0 : index
    %2 = vector.load %arg3[%c0_3, %c0_4] : memref<64x6xf32, #tpu.memory_space<vmem>>, vector<64x6xf32>
    %cst = arith.constant dense<0.000000e+00> : vector<64x16xf32>
    %3 = tpu.matmul %2, %1, %cst {dimension_numbers = #tpu.dot_dimension_numbers<[1], [0], [0], [1], [0, 0, 1, 1], [], []>} : vector<64x6xf32>, vector<6x16xf32>, vector<64x16xf32> -> vector<64x16xf32>
    %c0_5 = arith.constant 0 : index
    %c0_6 = arith.constant 0 : index
    %4 = vector.load %arg4[%c0_5, %c0_6] : memref<64x1xf32, #tpu.memory_space<vmem>>, vector<64x1xf32>
    %5 = vector.broadcast %4 : vector<64x1xf32> to vector<64x16xf32>
    %6 = arith.addf %3, %5 : vector<64x16xf32>
    %cst_7 = arith.constant 0.000000e+00 : f32
    %7 = vector.broadcast %cst_7 : f32 to vector<64x16xf32>
    %8 = arith.cmpf ogt, %6, %7 : vector<64x16xf32>
    %cst_8 = arith.constant 2.000000e-01 : f32
    %9 = vector.broadcast %cst_8 : f32 to vector<64x16xf32>
    %10 = arith.mulf %9, %6 : vector<64x16xf32>
    %11 = arith.select %8, %6, %10 : vector<64x16xi1>, vector<64x16xf32>
    %c0_9 = arith.constant 0 : index
    %c0_10 = arith.constant 0 : index
    %12 = vector.load %arg5[%c0_9, %c0_10] : memref<128x64xbf16, #tpu.memory_space<vmem>>, vector<128x64xbf16>
    %13 = arith.truncf %11 : vector<64x16xf32> to vector<64x16xbf16>
    %cst_11 = arith.constant dense<0.000000e+00> : vector<128x16xf32>
    %14 = tpu.matmul %12, %13, %cst_11 {dimension_numbers = #tpu.dot_dimension_numbers<[1], [0], [0], [1], [0, 0, 1, 1], [], []>} : vector<128x64xbf16>, vector<64x16xbf16>, vector<128x16xf32> -> vector<128x16xf32>
    %c0_12 = arith.constant 0 : index
    %c0_13 = arith.constant 0 : index
    %15 = vector.load %arg6[%c0_12, %c0_13] : memref<128x1xf32, #tpu.memory_space<vmem>>, vector<128x1xf32>
    %16 = vector.broadcast %15 : vector<128x1xf32> to vector<128x16xf32>
    %17 = arith.addf %14, %16 : vector<128x16xf32>
    %cst_14 = arith.constant 0.000000e+00 : f32
    %18 = vector.broadcast %cst_14 : f32 to vector<128x16xf32>
    %19 = arith.cmpf ogt, %17, %18 : vector<128x16xf32>
    %cst_15 = arith.constant 2.000000e-01 : f32
    %20 = vector.broadcast %cst_15 : f32 to vector<128x16xf32>
    %21 = arith.mulf %20, %17 : vector<128x16xf32>
    %22 = arith.select %19, %17, %21 : vector<128x16xi1>, vector<128x16xf32>
    %c0_16 = arith.constant 0 : index
    %c1 = arith.constant 1 : index
    %c0_17 = arith.constant 0 : index
    %c0_18 = arith.constant 0 : index
    %23 = vector.load %arg2[%c0_16, %c1, %c0_17, %c0_18] : memref<1x8x6x16xf32, #tpu.memory_space<vmem>>, vector<1x1x6x16xf32>
    %24 = vector.shape_cast %23 : vector<1x1x6x16xf32> to vector<6x16xf32>
    %c0_19 = arith.constant 0 : index
    %c0_20 = arith.constant 0 : index
    %25 = vector.load %arg3[%c0_19, %c0_20] : memref<64x6xf32, #tpu.memory_space<vmem>>, vector<64x6xf32>
    %cst_21 = arith.constant dense<0.000000e+00> : vector<64x16xf32>
    %26 = tpu.matmul %25, %24, %cst_21 {dimension_numbers = #tpu.dot_dimension_numbers<[1], [0], [0], [1], [0, 0, 1, 1], [], []>} : vector<64x6xf32>, vector<6x16xf32>, vector<64x16xf32> -> vector<64x16xf32>
    %c0_22 = arith.constant 0 : index
    %c0_23 = arith.constant 0 : index
    %27 = vector.load %arg4[%c0_22, %c0_23] : memref<64x1xf32, #tpu.memory_space<vmem>>, vector<64x1xf32>
    %28 = vector.broadcast %27 : vector<64x1xf32> to vector<64x16xf32>
    %29 = arith.addf %26, %28 : vector<64x16xf32>
    %cst_24 = arith.constant 0.000000e+00 : f32
    %30 = vector.broadcast %cst_24 : f32 to vector<64x16xf32>
    %31 = arith.cmpf ogt, %29, %30 : vector<64x16xf32>
    %cst_25 = arith.constant 2.000000e-01 : f32
    %32 = vector.broadcast %cst_25 : f32 to vector<64x16xf32>
    %33 = arith.mulf %32, %29 : vector<64x16xf32>
    %34 = arith.select %31, %29, %33 : vector<64x16xi1>, vector<64x16xf32>
    %c0_26 = arith.constant 0 : index
    %c0_27 = arith.constant 0 : index
    %35 = vector.load %arg5[%c0_26, %c0_27] : memref<128x64xbf16, #tpu.memory_space<vmem>>, vector<128x64xbf16>
    %36 = arith.truncf %34 : vector<64x16xf32> to vector<64x16xbf16>
    %cst_28 = arith.constant dense<0.000000e+00> : vector<128x16xf32>
    %37 = tpu.matmul %35, %36, %cst_28 {dimension_numbers = #tpu.dot_dimension_numbers<[1], [0], [0], [1], [0, 0, 1, 1], [], []>} : vector<128x64xbf16>, vector<64x16xbf16>, vector<128x16xf32> -> vector<128x16xf32>
    %c0_29 = arith.constant 0 : index
    %c0_30 = arith.constant 0 : index
    %38 = vector.load %arg6[%c0_29, %c0_30] : memref<128x1xf32, #tpu.memory_space<vmem>>, vector<128x1xf32>
    %39 = vector.broadcast %38 : vector<128x1xf32> to vector<128x16xf32>
    %40 = arith.addf %37, %39 : vector<128x16xf32>
    %cst_31 = arith.constant 0.000000e+00 : f32
    %41 = vector.broadcast %cst_31 : f32 to vector<128x16xf32>
    %42 = arith.cmpf ogt, %40, %41 : vector<128x16xf32>
    %cst_32 = arith.constant 2.000000e-01 : f32
    %43 = vector.broadcast %cst_32 : f32 to vector<128x16xf32>
    %44 = arith.mulf %43, %40 : vector<128x16xf32>
    %45 = arith.select %42, %40, %44 : vector<128x16xi1>, vector<128x16xf32>
    %46 = arith.maximumf %22, %45 : vector<128x16xf32>
    %c0_33 = arith.constant 0 : index
    %c2 = arith.constant 2 : index
    %c0_34 = arith.constant 0 : index
    %c0_35 = arith.constant 0 : index
    %47 = vector.load %arg2[%c0_33, %c2, %c0_34, %c0_35] : memref<1x8x6x16xf32, #tpu.memory_space<vmem>>, vector<1x1x6x16xf32>
    %48 = vector.shape_cast %47 : vector<1x1x6x16xf32> to vector<6x16xf32>
    %c0_36 = arith.constant 0 : index
    %c0_37 = arith.constant 0 : index
    %49 = vector.load %arg3[%c0_36, %c0_37] : memref<64x6xf32, #tpu.memory_space<vmem>>, vector<64x6xf32>
    %cst_38 = arith.constant dense<0.000000e+00> : vector<64x16xf32>
    %50 = tpu.matmul %49, %48, %cst_38 {dimension_numbers = #tpu.dot_dimension_numbers<[1], [0], [0], [1], [0, 0, 1, 1], [], []>} : vector<64x6xf32>, vector<6x16xf32>, vector<64x16xf32> -> vector<64x16xf32>
    %c0_39 = arith.constant 0 : index
    %c0_40 = arith.constant 0 : index
    %51 = vector.load %arg4[%c0_39, %c0_40] : memref<64x1xf32, #tpu.memory_space<vmem>>, vector<64x1xf32>
    %52 = vector.broadcast %51 : vector<64x1xf32> to vector<64x16xf32>
    %53 = arith.addf %50, %52 : vector<64x16xf32>
    %cst_41 = arith.constant 0.000000e+00 : f32
    %54 = vector.broadcast %cst_41 : f32 to vector<64x16xf32>
    %55 = arith.cmpf ogt, %53, %54 : vector<64x16xf32>
    %cst_42 = arith.constant 2.000000e-01 : f32
    %56 = vector.broadcast %cst_42 : f32 to vector<64x16xf32>
    %57 = arith.mulf %56, %53 : vector<64x16xf32>
    %58 = arith.select %55, %53, %57 : vector<64x16xi1>, vector<64x16xf32>
    %c0_43 = arith.constant 0 : index
    %c0_44 = arith.constant 0 : index
    %59 = vector.load %arg5[%c0_43, %c0_44] : memref<128x64xbf16, #tpu.memory_space<vmem>>, vector<128x64xbf16>
    %60 = arith.truncf %58 : vector<64x16xf32> to vector<64x16xbf16>
    %cst_45 = arith.constant dense<0.000000e+00> : vector<128x16xf32>
    %61 = tpu.matmul %59, %60, %cst_45 {dimension_numbers = #tpu.dot_dimension_numbers<[1], [0], [0], [1], [0, 0, 1, 1], [], []>} : vector<128x64xbf16>, vector<64x16xbf16>, vector<128x16xf32> -> vector<128x16xf32>
    %c0_46 = arith.constant 0 : index
    %c0_47 = arith.constant 0 : index
    %62 = vector.load %arg6[%c0_46, %c0_47] : memref<128x1xf32, #tpu.memory_space<vmem>>, vector<128x1xf32>
    %63 = vector.broadcast %62 : vector<128x1xf32> to vector<128x16xf32>
    %64 = arith.addf %61, %63 : vector<128x16xf32>
    %cst_48 = arith.constant 0.000000e+00 : f32
    %65 = vector.broadcast %cst_48 : f32 to vector<128x16xf32>
    %66 = arith.cmpf ogt, %64, %65 : vector<128x16xf32>
    %cst_49 = arith.constant 2.000000e-01 : f32
    %67 = vector.broadcast %cst_49 : f32 to vector<128x16xf32>
    %68 = arith.mulf %67, %64 : vector<128x16xf32>
    %69 = arith.select %66, %64, %68 : vector<128x16xi1>, vector<128x16xf32>
    %70 = arith.maximumf %46, %69 : vector<128x16xf32>
    %c0_50 = arith.constant 0 : index
    %c3 = arith.constant 3 : index
    %c0_51 = arith.constant 0 : index
    %c0_52 = arith.constant 0 : index
    %71 = vector.load %arg2[%c0_50, %c3, %c0_51, %c0_52] : memref<1x8x6x16xf32, #tpu.memory_space<vmem>>, vector<1x1x6x16xf32>
    %72 = vector.shape_cast %71 : vector<1x1x6x16xf32> to vector<6x16xf32>
    %c0_53 = arith.constant 0 : index
    %c0_54 = arith.constant 0 : index
    %73 = vector.load %arg3[%c0_53, %c0_54] : memref<64x6xf32, #tpu.memory_space<vmem>>, vector<64x6xf32>
    %cst_55 = arith.constant dense<0.000000e+00> : vector<64x16xf32>
    %74 = tpu.matmul %73, %72, %cst_55 {dimension_numbers = #tpu.dot_dimension_numbers<[1], [0], [0], [1], [0, 0, 1, 1], [], []>} : vector<64x6xf32>, vector<6x16xf32>, vector<64x16xf32> -> vector<64x16xf32>
    %c0_56 = arith.constant 0 : index
    %c0_57 = arith.constant 0 : index
    %75 = vector.load %arg4[%c0_56, %c0_57] : memref<64x1xf32, #tpu.memory_space<vmem>>, vector<64x1xf32>
    %76 = vector.broadcast %75 : vector<64x1xf32> to vector<64x16xf32>
    %77 = arith.addf %74, %76 : vector<64x16xf32>
    %cst_58 = arith.constant 0.000000e+00 : f32
    %78 = vector.broadcast %cst_58 : f32 to vector<64x16xf32>
    %79 = arith.cmpf ogt, %77, %78 : vector<64x16xf32>
    %cst_59 = arith.constant 2.000000e-01 : f32
    %80 = vector.broadcast %cst_59 : f32 to vector<64x16xf32>
    %81 = arith.mulf %80, %77 : vector<64x16xf32>
    %82 = arith.select %79, %77, %81 : vector<64x16xi1>, vector<64x16xf32>
    %c0_60 = arith.constant 0 : index
    %c0_61 = arith.constant 0 : index
    %83 = vector.load %arg5[%c0_60, %c0_61] : memref<128x64xbf16, #tpu.memory_space<vmem>>, vector<128x64xbf16>
    %84 = arith.truncf %82 : vector<64x16xf32> to vector<64x16xbf16>
    %cst_62 = arith.constant dense<0.000000e+00> : vector<128x16xf32>
    %85 = tpu.matmul %83, %84, %cst_62 {dimension_numbers = #tpu.dot_dimension_numbers<[1], [0], [0], [1], [0, 0, 1, 1], [], []>} : vector<128x64xbf16>, vector<64x16xbf16>, vector<128x16xf32> -> vector<128x16xf32>
    %c0_63 = arith.constant 0 : index
    %c0_64 = arith.constant 0 : index
    %86 = vector.load %arg6[%c0_63, %c0_64] : memref<128x1xf32, #tpu.memory_space<vmem>>, vector<128x1xf32>
    %87 = vector.broadcast %86 : vector<128x1xf32> to vector<128x16xf32>
    %88 = arith.addf %85, %87 : vector<128x16xf32>
    %cst_65 = arith.constant 0.000000e+00 : f32
    %89 = vector.broadcast %cst_65 : f32 to vector<128x16xf32>
    %90 = arith.cmpf ogt, %88, %89 : vector<128x16xf32>
    %cst_66 = arith.constant 2.000000e-01 : f32
    %91 = vector.broadcast %cst_66 : f32 to vector<128x16xf32>
    %92 = arith.mulf %91, %88 : vector<128x16xf32>
    %93 = arith.select %90, %88, %92 : vector<128x16xi1>, vector<128x16xf32>
    %94 = arith.maximumf %70, %93 : vector<128x16xf32>
    %c0_67 = arith.constant 0 : index
    %c4 = arith.constant 4 : index
    %c0_68 = arith.constant 0 : index
    %c0_69 = arith.constant 0 : index
    %95 = vector.load %arg2[%c0_67, %c4, %c0_68, %c0_69] : memref<1x8x6x16xf32, #tpu.memory_space<vmem>>, vector<1x1x6x16xf32>
    %96 = vector.shape_cast %95 : vector<1x1x6x16xf32> to vector<6x16xf32>
    %c0_70 = arith.constant 0 : index
    %c0_71 = arith.constant 0 : index
    %97 = vector.load %arg3[%c0_70, %c0_71] : memref<64x6xf32, #tpu.memory_space<vmem>>, vector<64x6xf32>
    %cst_72 = arith.constant dense<0.000000e+00> : vector<64x16xf32>
    %98 = tpu.matmul %97, %96, %cst_72 {dimension_numbers = #tpu.dot_dimension_numbers<[1], [0], [0], [1], [0, 0, 1, 1], [], []>} : vector<64x6xf32>, vector<6x16xf32>, vector<64x16xf32> -> vector<64x16xf32>
    %c0_73 = arith.constant 0 : index
    %c0_74 = arith.constant 0 : index
    %99 = vector.load %arg4[%c0_73, %c0_74] : memref<64x1xf32, #tpu.memory_space<vmem>>, vector<64x1xf32>
    %100 = vector.broadcast %99 : vector<64x1xf32> to vector<64x16xf32>
    %101 = arith.addf %98, %100 : vector<64x16xf32>
    %cst_75 = arith.constant 0.000000e+00 : f32
    %102 = vector.broadcast %cst_75 : f32 to vector<64x16xf32>
    %103 = arith.cmpf ogt, %101, %102 : vector<64x16xf32>
    %cst_76 = arith.constant 2.000000e-01 : f32
    %104 = vector.broadcast %cst_76 : f32 to vector<64x16xf32>
    %105 = arith.mulf %104, %101 : vector<64x16xf32>
    %106 = arith.select %103, %101, %105 : vector<64x16xi1>, vector<64x16xf32>
    %c0_77 = arith.constant 0 : index
    %c0_78 = arith.constant 0 : index
    %107 = vector.load %arg5[%c0_77, %c0_78] : memref<128x64xbf16, #tpu.memory_space<vmem>>, vector<128x64xbf16>
    %108 = arith.truncf %106 : vector<64x16xf32> to vector<64x16xbf16>
    %cst_79 = arith.constant dense<0.000000e+00> : vector<128x16xf32>
    %109 = tpu.matmul %107, %108, %cst_79 {dimension_numbers = #tpu.dot_dimension_numbers<[1], [0], [0], [1], [0, 0, 1, 1], [], []>} : vector<128x64xbf16>, vector<64x16xbf16>, vector<128x16xf32> -> vector<128x16xf32>
    %c0_80 = arith.constant 0 : index
    %c0_81 = arith.constant 0 : index
    %110 = vector.load %arg6[%c0_80, %c0_81] : memref<128x1xf32, #tpu.memory_space<vmem>>, vector<128x1xf32>
    %111 = vector.broadcast %110 : vector<128x1xf32> to vector<128x16xf32>
    %112 = arith.addf %109, %111 : vector<128x16xf32>
    %cst_82 = arith.constant 0.000000e+00 : f32
    %113 = vector.broadcast %cst_82 : f32 to vector<128x16xf32>
    %114 = arith.cmpf ogt, %112, %113 : vector<128x16xf32>
    %cst_83 = arith.constant 2.000000e-01 : f32
    %115 = vector.broadcast %cst_83 : f32 to vector<128x16xf32>
    %116 = arith.mulf %115, %112 : vector<128x16xf32>
    %117 = arith.select %114, %112, %116 : vector<128x16xi1>, vector<128x16xf32>
    %118 = arith.maximumf %94, %117 : vector<128x16xf32>
    %c0_84 = arith.constant 0 : index
    %c5 = arith.constant 5 : index
    %c0_85 = arith.constant 0 : index
    %c0_86 = arith.constant 0 : index
    %119 = vector.load %arg2[%c0_84, %c5, %c0_85, %c0_86] : memref<1x8x6x16xf32, #tpu.memory_space<vmem>>, vector<1x1x6x16xf32>
    %120 = vector.shape_cast %119 : vector<1x1x6x16xf32> to vector<6x16xf32>
    %c0_87 = arith.constant 0 : index
    %c0_88 = arith.constant 0 : index
    %121 = vector.load %arg3[%c0_87, %c0_88] : memref<64x6xf32, #tpu.memory_space<vmem>>, vector<64x6xf32>
    %cst_89 = arith.constant dense<0.000000e+00> : vector<64x16xf32>
    %122 = tpu.matmul %121, %120, %cst_89 {dimension_numbers = #tpu.dot_dimension_numbers<[1], [0], [0], [1], [0, 0, 1, 1], [], []>} : vector<64x6xf32>, vector<6x16xf32>, vector<64x16xf32> -> vector<64x16xf32>
    %c0_90 = arith.constant 0 : index
    %c0_91 = arith.constant 0 : index
    %123 = vector.load %arg4[%c0_90, %c0_91] : memref<64x1xf32, #tpu.memory_space<vmem>>, vector<64x1xf32>
    %124 = vector.broadcast %123 : vector<64x1xf32> to vector<64x16xf32>
    %125 = arith.addf %122, %124 : vector<64x16xf32>
    %cst_92 = arith.constant 0.000000e+00 : f32
    %126 = vector.broadcast %cst_92 : f32 to vector<64x16xf32>
    %127 = arith.cmpf ogt, %125, %126 : vector<64x16xf32>
    %cst_93 = arith.constant 2.000000e-01 : f32
    %128 = vector.broadcast %cst_93 : f32 to vector<64x16xf32>
    %129 = arith.mulf %128, %125 : vector<64x16xf32>
    %130 = arith.select %127, %125, %129 : vector<64x16xi1>, vector<64x16xf32>
    %c0_94 = arith.constant 0 : index
    %c0_95 = arith.constant 0 : index
    %131 = vector.load %arg5[%c0_94, %c0_95] : memref<128x64xbf16, #tpu.memory_space<vmem>>, vector<128x64xbf16>
    %132 = arith.truncf %130 : vector<64x16xf32> to vector<64x16xbf16>
    %cst_96 = arith.constant dense<0.000000e+00> : vector<128x16xf32>
    %133 = tpu.matmul %131, %132, %cst_96 {dimension_numbers = #tpu.dot_dimension_numbers<[1], [0], [0], [1], [0, 0, 1, 1], [], []>} : vector<128x64xbf16>, vector<64x16xbf16>, vector<128x16xf32> -> vector<128x16xf32>
    %c0_97 = arith.constant 0 : index
    %c0_98 = arith.constant 0 : index
    %134 = vector.load %arg6[%c0_97, %c0_98] : memref<128x1xf32, #tpu.memory_space<vmem>>, vector<128x1xf32>
    %135 = vector.broadcast %134 : vector<128x1xf32> to vector<128x16xf32>
    %136 = arith.addf %133, %135 : vector<128x16xf32>
    %cst_99 = arith.constant 0.000000e+00 : f32
    %137 = vector.broadcast %cst_99 : f32 to vector<128x16xf32>
    %138 = arith.cmpf ogt, %136, %137 : vector<128x16xf32>
    %cst_100 = arith.constant 2.000000e-01 : f32
    %139 = vector.broadcast %cst_100 : f32 to vector<128x16xf32>
    %140 = arith.mulf %139, %136 : vector<128x16xf32>
    %141 = arith.select %138, %136, %140 : vector<128x16xi1>, vector<128x16xf32>
    %142 = arith.maximumf %118, %141 : vector<128x16xf32>
    %c0_101 = arith.constant 0 : index
    %c6 = arith.constant 6 : index
    %c0_102 = arith.constant 0 : index
    %c0_103 = arith.constant 0 : index
    %143 = vector.load %arg2[%c0_101, %c6, %c0_102, %c0_103] : memref<1x8x6x16xf32, #tpu.memory_space<vmem>>, vector<1x1x6x16xf32>
    %144 = vector.shape_cast %143 : vector<1x1x6x16xf32> to vector<6x16xf32>
    %c0_104 = arith.constant 0 : index
    %c0_105 = arith.constant 0 : index
    %145 = vector.load %arg3[%c0_104, %c0_105] : memref<64x6xf32, #tpu.memory_space<vmem>>, vector<64x6xf32>
    %cst_106 = arith.constant dense<0.000000e+00> : vector<64x16xf32>
    %146 = tpu.matmul %145, %144, %cst_106 {dimension_numbers = #tpu.dot_dimension_numbers<[1], [0], [0], [1], [0, 0, 1, 1], [], []>} : vector<64x6xf32>, vector<6x16xf32>, vector<64x16xf32> -> vector<64x16xf32>
    %c0_107 = arith.constant 0 : index
    %c0_108 = arith.constant 0 : index
    %147 = vector.load %arg4[%c0_107, %c0_108] : memref<64x1xf32, #tpu.memory_space<vmem>>, vector<64x1xf32>
    %148 = vector.broadcast %147 : vector<64x1xf32> to vector<64x16xf32>
    %149 = arith.addf %146, %148 : vector<64x16xf32>
    %cst_109 = arith.constant 0.000000e+00 : f32
    %150 = vector.broadcast %cst_109 : f32 to vector<64x16xf32>
    %151 = arith.cmpf ogt, %149, %150 : vector<64x16xf32>
    %cst_110 = arith.constant 2.000000e-01 : f32
    %152 = vector.broadcast %cst_110 : f32 to vector<64x16xf32>
    %153 = arith.mulf %152, %149 : vector<64x16xf32>
    %154 = arith.select %151, %149, %153 : vector<64x16xi1>, vector<64x16xf32>
    %c0_111 = arith.constant 0 : index
    %c0_112 = arith.constant 0 : index
    %155 = vector.load %arg5[%c0_111, %c0_112] : memref<128x64xbf16, #tpu.memory_space<vmem>>, vector<128x64xbf16>
    %156 = arith.truncf %154 : vector<64x16xf32> to vector<64x16xbf16>
    %cst_113 = arith.constant dense<0.000000e+00> : vector<128x16xf32>
    %157 = tpu.matmul %155, %156, %cst_113 {dimension_numbers = #tpu.dot_dimension_numbers<[1], [0], [0], [1], [0, 0, 1, 1], [], []>} : vector<128x64xbf16>, vector<64x16xbf16>, vector<128x16xf32> -> vector<128x16xf32>
    %c0_114 = arith.constant 0 : index
    %c0_115 = arith.constant 0 : index
    %158 = vector.load %arg6[%c0_114, %c0_115] : memref<128x1xf32, #tpu.memory_space<vmem>>, vector<128x1xf32>
    %159 = vector.broadcast %158 : vector<128x1xf32> to vector<128x16xf32>
    %160 = arith.addf %157, %159 : vector<128x16xf32>
    %cst_116 = arith.constant 0.000000e+00 : f32
    %161 = vector.broadcast %cst_116 : f32 to vector<128x16xf32>
    %162 = arith.cmpf ogt, %160, %161 : vector<128x16xf32>
    %cst_117 = arith.constant 2.000000e-01 : f32
    %163 = vector.broadcast %cst_117 : f32 to vector<128x16xf32>
    %164 = arith.mulf %163, %160 : vector<128x16xf32>
    %165 = arith.select %162, %160, %164 : vector<128x16xi1>, vector<128x16xf32>
    %166 = arith.maximumf %142, %165 : vector<128x16xf32>
    %c0_118 = arith.constant 0 : index
    %c7 = arith.constant 7 : index
    %c0_119 = arith.constant 0 : index
    %c0_120 = arith.constant 0 : index
    %167 = vector.load %arg2[%c0_118, %c7, %c0_119, %c0_120] : memref<1x8x6x16xf32, #tpu.memory_space<vmem>>, vector<1x1x6x16xf32>
    %168 = vector.shape_cast %167 : vector<1x1x6x16xf32> to vector<6x16xf32>
    %c0_121 = arith.constant 0 : index
    %c0_122 = arith.constant 0 : index
    %169 = vector.load %arg3[%c0_121, %c0_122] : memref<64x6xf32, #tpu.memory_space<vmem>>, vector<64x6xf32>
    %cst_123 = arith.constant dense<0.000000e+00> : vector<64x16xf32>
    %170 = tpu.matmul %169, %168, %cst_123 {dimension_numbers = #tpu.dot_dimension_numbers<[1], [0], [0], [1], [0, 0, 1, 1], [], []>} : vector<64x6xf32>, vector<6x16xf32>, vector<64x16xf32> -> vector<64x16xf32>
    %c0_124 = arith.constant 0 : index
    %c0_125 = arith.constant 0 : index
    %171 = vector.load %arg4[%c0_124, %c0_125] : memref<64x1xf32, #tpu.memory_space<vmem>>, vector<64x1xf32>
    %172 = vector.broadcast %171 : vector<64x1xf32> to vector<64x16xf32>
    %173 = arith.addf %170, %172 : vector<64x16xf32>
    %cst_126 = arith.constant 0.000000e+00 : f32
    %174 = vector.broadcast %cst_126 : f32 to vector<64x16xf32>
    %175 = arith.cmpf ogt, %173, %174 : vector<64x16xf32>
    %cst_127 = arith.constant 2.000000e-01 : f32
    %176 = vector.broadcast %cst_127 : f32 to vector<64x16xf32>
    %177 = arith.mulf %176, %173 : vector<64x16xf32>
    %178 = arith.select %175, %173, %177 : vector<64x16xi1>, vector<64x16xf32>
    %c0_128 = arith.constant 0 : index
    %c0_129 = arith.constant 0 : index
    %179 = vector.load %arg5[%c0_128, %c0_129] : memref<128x64xbf16, #tpu.memory_space<vmem>>, vector<128x64xbf16>
    %180 = arith.truncf %178 : vector<64x16xf32> to vector<64x16xbf16>
    %cst_130 = arith.constant dense<0.000000e+00> : vector<128x16xf32>
    %181 = tpu.matmul %179, %180, %cst_130 {dimension_numbers = #tpu.dot_dimension_numbers<[1], [0], [0], [1], [0, 0, 1, 1], [], []>} : vector<128x64xbf16>, vector<64x16xbf16>, vector<128x16xf32> -> vector<128x16xf32>
    %c0_131 = arith.constant 0 : index
    %c0_132 = arith.constant 0 : index
    %182 = vector.load %arg6[%c0_131, %c0_132] : memref<128x1xf32, #tpu.memory_space<vmem>>, vector<128x1xf32>
    %183 = vector.broadcast %182 : vector<128x1xf32> to vector<128x16xf32>
    %184 = arith.addf %181, %183 : vector<128x16xf32>
    %cst_133 = arith.constant 0.000000e+00 : f32
    %185 = vector.broadcast %cst_133 : f32 to vector<128x16xf32>
    %186 = arith.cmpf ogt, %184, %185 : vector<128x16xf32>
    %cst_134 = arith.constant 2.000000e-01 : f32
    %187 = vector.broadcast %cst_134 : f32 to vector<128x16xf32>
    %188 = arith.mulf %187, %184 : vector<128x16xf32>
    %189 = arith.select %186, %184, %188 : vector<128x16xi1>, vector<128x16xf32>
    %190 = arith.maximumf %166, %189 : vector<128x16xf32>
    %c0_135 = arith.constant 0 : index
    %c0_136 = arith.constant 0 : index
    %191 = vector.load %arg7[%c0_135, %c0_136] : memref<256x128xbf16, #tpu.memory_space<vmem>>, vector<256x128xbf16>
    %192 = arith.truncf %190 : vector<128x16xf32> to vector<128x16xbf16>
    %cst_137 = arith.constant dense<0.000000e+00> : vector<256x16xf32>
    %193 = tpu.matmul %191, %192, %cst_137 {dimension_numbers = #tpu.dot_dimension_numbers<[1], [0], [0], [1], [0, 0, 1, 1], [], []>} : vector<256x128xbf16>, vector<128x16xbf16>, vector<256x16xf32> -> vector<256x16xf32>
    %c0_138 = arith.constant 0 : index
    %c0_139 = arith.constant 0 : index
    %194 = vector.load %arg8[%c0_138, %c0_139] : memref<256x1xf32, #tpu.memory_space<vmem>>, vector<256x1xf32>
    %195 = vector.broadcast %194 : vector<256x1xf32> to vector<256x16xf32>
    %196 = arith.addf %193, %195 : vector<256x16xf32>
    %cst_140 = arith.constant 0.000000e+00 : f32
    %197 = vector.broadcast %cst_140 : f32 to vector<256x16xf32>
    %198 = arith.cmpf ogt, %196, %197 : vector<256x16xf32>
    %cst_141 = arith.constant 2.000000e-01 : f32
    %199 = vector.broadcast %cst_141 : f32 to vector<256x16xf32>
    %200 = arith.mulf %199, %196 : vector<256x16xf32>
    %201 = arith.select %198, %196, %200 : vector<256x16xi1>, vector<256x16xf32>
    %202 = arith.truncf %201 : vector<256x16xf32> to vector<256x16xbf16>
    %c0_142 = arith.constant 0 : index
    %c0_143 = arith.constant 0 : index
    %c0_144 = arith.constant 0 : index
    %203 = vector.load %arg9[%c0_142, %c0_143, %c0_144] : memref<1x256x16xbf16, #tpu.memory_space<vmem>>, vector<1x256x16xbf16>
    %204 = vector.shape_cast %203 : vector<1x256x16xbf16> to vector<256x16xbf16>
    %205 = vector.shape_cast %202 : vector<256x16xbf16> to vector<1x256x16xbf16>
    tpu.vector_store %arg9[%c0_142, %c0_143, %c0_144], %205 {strides = array<i32>} : memref<1x256x16xbf16, #tpu.memory_space<vmem>>, vector<1x256x16xbf16>,
    %cst_145 = arith.constant dense<0xFF800000> : vector<256xf32>
    %206 = vector.multi_reduction <maximumf>, %201, %cst_145 [1] : vector<256x16xf32> to vector<256xf32>
    %207 = vector.shape_cast %206 : vector<256xf32> to vector<256x1xf32>
    %c0_i32 = arith.constant 0 : i32
    %208 = arith.cmpi eq, %arg1, %c0_i32 : i32
    %209 = arith.extui %208 : i1 to i32
    %c0_i32_146 = arith.constant 0 : i32
    %210 = arith.cmpi ne, %209, %c0_i32_146 : i32
    scf.if %210 {
      %cst_153 = arith.constant 0xFF800000 : f32
      %217 = vector.broadcast %cst_153 : f32 to vector<256x1xf32>
      %c0_154 = arith.constant 0 : index
      %c0_155 = arith.constant 0 : index
      %c0_156 = arith.constant 0 : index
      %218 = vector.load %arg10[%c0_154, %c0_155, %c0_156] : memref<1x256x1xf32, #tpu.memory_space<vmem>>, vector<1x256x1xf32>
      %219 = vector.shape_cast %218 : vector<1x256x1xf32> to vector<256x1xf32>
      %220 = vector.shape_cast %217 : vector<256x1xf32> to vector<1x256x1xf32>
      tpu.vector_store %arg10[%c0_154, %c0_155, %c0_156], %220 {strides = array<i32>} : memref<1x256x1xf32, #tpu.memory_space<vmem>>, vector<1x256x1xf32>,
    } else {
    }
    %c0_147 = arith.constant 0 : index
    %c0_148 = arith.constant 0 : index
    %c0_149 = arith.constant 0 : index
    %211 = vector.load %arg10[%c0_147, %c0_148, %c0_149] : memref<1x256x1xf32, #tpu.memory_space<vmem>>, vector<1x256x1xf32>
    %212 = vector.shape_cast %211 : vector<1x256x1xf32> to vector<256x1xf32>
    %213 = arith.maximumf %212, %207 : vector<256x1xf32>
    %c0_150 = arith.constant 0 : index
    %c0_151 = arith.constant 0 : index
    %c0_152 = arith.constant 0 : index
    %214 = vector.load %arg10[%c0_150, %c0_151, %c0_152] : memref<1x256x1xf32, #tpu.memory_space<vmem>>, vector<1x256x1xf32>
    %215 = vector.shape_cast %214 : vector<1x256x1xf32> to vector<256x1xf32>
    %216 = vector.shape_cast %213 : vector<256x1xf32> to vector<1x256x1xf32>
    tpu.vector_store %arg10[%c0_150, %c0_151, %c0_152], %216 {strides = array<i32>} : memref<1x256x1xf32, #tpu.memory_space<vmem>>, vector<1x256x1xf32>,
    return
  }
  func.func @transform_0(%arg0: i32, %arg1: i32) -> (i32, i32, i32, i32) {
    %c0_i32 = arith.constant 0 : i32
    %c0_i32_0 = arith.constant 0 : i32
    %c0_i32_1 = arith.constant 0 : i32
    return %arg0, %c0_i32, %c0_i32_0, %arg1 : i32, i32, i32, i32
  }
  func.func @transform_1(%arg0: i32, %arg1: i32) -> (i32, i32) {
    %c0_i32 = arith.constant 0 : i32
    %c0_i32_0 = arith.constant 0 : i32
    %c0_i32_1 = arith.constant 0 : i32
    return %c0_i32, %c0_i32_0 : i32, i32
  }
  func.func @transform_2(%arg0: i32, %arg1: i32) -> (i32, i32) {
    %c0_i32 = arith.constant 0 : i32
    %c0_i32_0 = arith.constant 0 : i32
    %c0_i32_1 = arith.constant 0 : i32
    return %c0_i32, %c0_i32_0 : i32, i32
  }
  func.func @transform_3(%arg0: i32, %arg1: i32) -> (i32, i32) {
    %c0_i32 = arith.constant 0 : i32
    %c0_i32_0 = arith.constant 0 : i32
    %c0_i32_1 = arith.constant 0 : i32
    return %c0_i32, %c0_i32_0 : i32, i32
  }
  func.func @transform_4(%arg0: i32, %arg1: i32) -> (i32, i32) {
    %c0_i32 = arith.constant 0 : i32
    %c0_i32_0 = arith.constant 0 : i32
    %c0_i32_1 = arith.constant 0 : i32
    return %c0_i32, %c0_i32_0 : i32, i32
  }
  func.func @transform_5(%arg0: i32, %arg1: i32) -> (i32, i32) {
    %c0_i32 = arith.constant 0 : i32
    %c0_i32_0 = arith.constant 0 : i32
    %c0_i32_1 = arith.constant 0 : i32
    return %c0_i32, %c0_i32_0 : i32, i32
  }
  func.func @transform_6(%arg0: i32, %arg1: i32) -> (i32, i32) {
    %c0_i32 = arith.constant 0 : i32
    %c0_i32_0 = arith.constant 0 : i32
    %c0_i32_1 = arith.constant 0 : i32
    return %c0_i32, %c0_i32_0 : i32, i32
  }
  func.func @transform_7(%arg0: i32, %arg1: i32) -> (i32, i32, i32) {
    %c0_i32 = arith.constant 0 : i32
    %c0_i32_0 = arith.constant 0 : i32
    return %arg0, %c0_i32, %arg1 : i32, i32, i32
  }
  func.func @transform_8(%arg0: i32, %arg1: i32) -> (i32, i32, i32) {
    %c0_i32 = arith.constant 0 : i32
    %c0_i32_0 = arith.constant 0 : i32
    %c0_i32_1 = arith.constant 0 : i32
    return %arg0, %c0_i32, %c0_i32_0 : i32, i32, i32
  }
}

module attributes {stable_mosaic.version = 11 : i64} {
  func.func @pass2_kernel(%arg0: i32, %arg1: i32, %arg2: memref<1x256x16xbf16, #tpu.memory_space<vmem>>, %arg3: memref<1x128x1xf32, #tpu.memory_space<vmem>>, %arg4: memref<128x256xbf16, #tpu.memory_space<vmem>>, %arg5: memref<64x128xbf16, #tpu.memory_space<vmem>>, %arg6: memref<64x1xf32, #tpu.memory_space<vmem>>, %arg7: memref<3x64xf32, #tpu.memory_space<vmem>>, %arg8: memref<3x1xf32, #tpu.memory_space<vmem>>, %arg9: memref<1x3x16xf32, #tpu.memory_space<vmem>>) attributes {dimension_semantics = [#tpu.dimension_semantics<parallel>, #tpu.dimension_semantics<parallel>], iteration_bounds = array<i64: 2, 1>, scalar_prefetch = 0 : i64, scratch_operands = 0 : i64, tpu.core_type = #tpu.core_type<tc>, window_params = [{transform_indices = @transform_0, window_bounds = array<i64: 1, 256, 16>}, {transform_indices = @transform_1, window_bounds = array<i64: 1, 128, 1>}, {pipeline_mode = #tpu.pipeline_mode<synchronous>, transform_indices = @transform_2, window_bounds = array<i64: 128, 256>}, {pipeline_mode = #tpu.pipeline_mode<synchronous>, transform_indices = @transform_3, window_bounds = array<i64: 64, 128>}, {pipeline_mode = #tpu.pipeline_mode<synchronous>, transform_indices = @transform_4, window_bounds = array<i64: 64, 1>}, {pipeline_mode = #tpu.pipeline_mode<synchronous>, transform_indices = @transform_5, window_bounds = array<i64: 3, 64>}, {pipeline_mode = #tpu.pipeline_mode<synchronous>, transform_indices = @transform_6, window_bounds = array<i64: 3, 1>}, {transform_indices = @transform_7, window_bounds = array<i64: 1, 3, 16>}]} {
    %c0 = arith.constant 0 : index
    %c0_0 = arith.constant 0 : index
    %c0_1 = arith.constant 0 : index
    %0 = vector.load %arg2[%c0, %c0_0, %c0_1] : memref<1x256x16xbf16, #tpu.memory_space<vmem>>, vector<1x256x16xbf16>
    %1 = vector.shape_cast %0 : vector<1x256x16xbf16> to vector<256x16xbf16>
    %c0_2 = arith.constant 0 : index
    %c0_3 = arith.constant 0 : index
    %2 = vector.load %arg4[%c0_2, %c0_3] : memref<128x256xbf16, #tpu.memory_space<vmem>>, vector<128x256xbf16>
    %cst = arith.constant dense<0.000000e+00> : vector<128x16xf32>
    %3 = tpu.matmul %2, %1, %cst {dimension_numbers = #tpu.dot_dimension_numbers<[1], [0], [0], [1], [0, 0, 1, 1], [], []>} : vector<128x256xbf16>, vector<256x16xbf16>, vector<128x16xf32> -> vector<128x16xf32>
    %c0_4 = arith.constant 0 : index
    %c0_5 = arith.constant 0 : index
    %c0_6 = arith.constant 0 : index
    %4 = vector.load %arg3[%c0_4, %c0_5, %c0_6] : memref<1x128x1xf32, #tpu.memory_space<vmem>>, vector<1x128x1xf32>
    %5 = vector.shape_cast %4 : vector<1x128x1xf32> to vector<128x1xf32>
    %6 = vector.broadcast %5 : vector<128x1xf32> to vector<128x16xf32>
    %7 = arith.addf %3, %6 : vector<128x16xf32>
    %cst_7 = arith.constant 0.000000e+00 : f32
    %8 = vector.broadcast %cst_7 : f32 to vector<128x16xf32>
    %9 = arith.cmpf ogt, %7, %8 : vector<128x16xf32>
    %cst_8 = arith.constant 2.000000e-01 : f32
    %10 = vector.broadcast %cst_8 : f32 to vector<128x16xf32>
    %11 = arith.mulf %10, %7 : vector<128x16xf32>
    %12 = arith.select %9, %7, %11 : vector<128x16xi1>, vector<128x16xf32>
    %c0_9 = arith.constant 0 : index
    %c0_10 = arith.constant 0 : index
    %13 = vector.load %arg5[%c0_9, %c0_10] : memref<64x128xbf16, #tpu.memory_space<vmem>>, vector<64x128xbf16>
    %14 = arith.truncf %12 : vector<128x16xf32> to vector<128x16xbf16>
    %cst_11 = arith.constant dense<0.000000e+00> : vector<64x16xf32>
    %15 = tpu.matmul %13, %14, %cst_11 {dimension_numbers = #tpu.dot_dimension_numbers<[1], [0], [0], [1], [0, 0, 1, 1], [], []>} : vector<64x128xbf16>, vector<128x16xbf16>, vector<64x16xf32> -> vector<64x16xf32>
    %c0_12 = arith.constant 0 : index
    %c0_13 = arith.constant 0 : index
    %16 = vector.load %arg6[%c0_12, %c0_13] : memref<64x1xf32, #tpu.memory_space<vmem>>, vector<64x1xf32>
    %17 = vector.broadcast %16 : vector<64x1xf32> to vector<64x16xf32>
    %18 = arith.addf %15, %17 : vector<64x16xf32>
    %cst_14 = arith.constant 0.000000e+00 : f32
    %19 = vector.broadcast %cst_14 : f32 to vector<64x16xf32>
    %20 = arith.cmpf ogt, %18, %19 : vector<64x16xf32>
    %cst_15 = arith.constant 2.000000e-01 : f32
    %21 = vector.broadcast %cst_15 : f32 to vector<64x16xf32>
    %22 = arith.mulf %21, %18 : vector<64x16xf32>
    %23 = arith.select %20, %18, %22 : vector<64x16xi1>, vector<64x16xf32>
    %c0_16 = arith.constant 0 : index
    %c0_17 = arith.constant 0 : index
    %24 = vector.load %arg7[%c0_16, %c0_17] : memref<3x64xf32, #tpu.memory_space<vmem>>, vector<3x64xf32>
    %cst_18 = arith.constant dense<0.000000e+00> : vector<3x16xf32>
    %25 = tpu.matmul %24, %23, %cst_18 {dimension_numbers = #tpu.dot_dimension_numbers<[1], [0], [0], [1], [0, 0, 1, 1], [], []>} : vector<3x64xf32>, vector<64x16xf32>, vector<3x16xf32> -> vector<3x16xf32>
    %c0_19 = arith.constant 0 : index
    %c0_20 = arith.constant 0 : index
    %26 = vector.load %arg8[%c0_19, %c0_20] : memref<3x1xf32, #tpu.memory_space<vmem>>, vector<3x1xf32>
    %27 = vector.broadcast %26 : vector<3x1xf32> to vector<3x16xf32>
    %28 = arith.addf %25, %27 : vector<3x16xf32>
    %c0_21 = arith.constant 0 : index
    %c0_22 = arith.constant 0 : index
    %c0_23 = arith.constant 0 : index
    %29 = vector.load %arg9[%c0_21, %c0_22, %c0_23] : memref<1x3x16xf32, #tpu.memory_space<vmem>>, vector<1x3x16xf32>
    %30 = vector.shape_cast %29 : vector<1x3x16xf32> to vector<3x16xf32>
    %31 = vector.shape_cast %28 : vector<3x16xf32> to vector<1x3x16xf32>
    tpu.vector_store %arg9[%c0_21, %c0_22, %c0_23], %31 {strides = array<i32>} : memref<1x3x16xf32, #tpu.memory_space<vmem>>, vector<1x3x16xf32>,
    return
  }
  func.func @transform_0(%arg0: i32, %arg1: i32) -> (i32, i32, i32) {
    %c0_i32 = arith.constant 0 : i32
    %c0_i32_0 = arith.constant 0 : i32
    return %arg0, %c0_i32, %arg1 : i32, i32, i32
  }
  func.func @transform_1(%arg0: i32, %arg1: i32) -> (i32, i32, i32) {
    %c0_i32 = arith.constant 0 : i32
    %c0_i32_0 = arith.constant 0 : i32
    %c0_i32_1 = arith.constant 0 : i32
    return %arg0, %c0_i32, %c0_i32_0 : i32, i32, i32
  }
  func.func @transform_2(%arg0: i32, %arg1: i32) -> (i32, i32) {
    %c0_i32 = arith.constant 0 : i32
    %c0_i32_0 = arith.constant 0 : i32
    %c0_i32_1 = arith.constant 0 : i32
    return %c0_i32, %c0_i32_0 : i32, i32
  }
  func.func @transform_3(%arg0: i32, %arg1: i32) -> (i32, i32) {
    %c0_i32 = arith.constant 0 : i32
    %c0_i32_0 = arith.constant 0 : i32
    %c0_i32_1 = arith.constant 0 : i32
    return %c0_i32, %c0_i32_0 : i32, i32
  }
  func.func @transform_4(%arg0: i32, %arg1: i32) -> (i32, i32) {
    %c0_i32 = arith.constant 0 : i32
    %c0_i32_0 = arith.constant 0 : i32
    %c0_i32_1 = arith.constant 0 : i32
    return %c0_i32, %c0_i32_0 : i32, i32
  }
  func.func @transform_5(%arg0: i32, %arg1: i32) -> (i32, i32) {
    %c0_i32 = arith.constant 0 : i32
    %c0_i32_0 = arith.constant 0 : i32
    %c0_i32_1 = arith.constant 0 : i32
    return %c0_i32, %c0_i32_0 : i32, i32
  }
  func.func @transform_6(%arg0: i32, %arg1: i32) -> (i32, i32) {
    %c0_i32 = arith.constant 0 : i32
    %c0_i32_0 = arith.constant 0 : i32
    %c0_i32_1 = arith.constant 0 : i32
    return %c0_i32, %c0_i32_0 : i32, i32
  }
  func.func @transform_7(%arg0: i32, %arg1: i32) -> (i32, i32, i32) {
    %c0_i32 = arith.constant 0 : i32
    %c0_i32_0 = arith.constant 0 : i32
    return %arg0, %c0_i32, %arg1 : i32, i32, i32
  }
}

</mosaic_0001>

<llo_original>
// kernel: point_shift_net.3
$region0: #{point_shift_net.3}
  #allocation0 [shape = 'u32[]', space=smem, size = 0x4, offset = 0x4, fixed_abs, tag = 'smem constant byte address 0x4 - core index']
  #allocation1 [shape = 'u32[144,128]{1,0:T(1,128)}', space=vmem, size = 0x12000, scoped, tag = 'internal scratch']
  %s0 = inlined_call_operand.vmem [shape: bf16[2,256,16], index: 0, kind: input, shape index: {}]
  %s1 = inlined_call_operand.vmem [shape: f32[2,128,1], index: 1, kind: input, shape index: {}]
  %s2 = inlined_call_operand.vmem [shape: bf16[128,256], index: 2, kind: input, shape index: {}]
  %s3 = inlined_call_operand.vmem [shape: bf16[64,128], index: 3, kind: input, shape index: {}]
  %s4 = inlined_call_operand.vmem [shape: f32[64,1], index: 4, kind: input, shape index: {}]
  %s5 = inlined_call_operand.vmem [shape: f32[3,64], index: 5, kind: input, shape index: {}]
  %s6 = inlined_call_operand.vmem [shape: f32[3,1], index: 6, kind: input, shape index: {}]
  %s7 = inlined_call_operand.vmem [shape: f32[2,3,16], index: 7, kind: output, shape index: {}]
  %s8 = sld [smem:[#allocation0]]
  $region61: #{point_shift_net.3} parent=0
    _
  %s10 = ssub.s32 1, %s8
  %s11 = scalar_select 0, %s10, %s8
  loop: start=0, step=1, limit=4
  $region2: #{point_shift_net.3} parent=0 // loop_pre_header
    _
  $region3: #{point_shift_net.3} parent=0 // loop_header
    %s13 = sphi 0, %s17
    %p14 = scmp.ge.s32.totalorder %s13, 4
    %s20 = sphi 0, %s32
    %s21 = sphi 0, %s28
    %s22 = sphi 0, %s20
    %s23 = sphi 0, %s21
    %s24 = sphi 0, %s22
    %s25 = sphi 0, %s23
    %s37 = sphi 0, %s39
    %s40 = sphi 0, %s37
    %s41 = sphi 0, %s40
    %s57 = sphi 0, %s41
    %s63 = sphi 0, %s65
    %s66 = sphi 0, %s63
    %s67 = sphi 0, %s66
    %s83 = sphi 0, %s67
    %s87 = sphi 0, %s87
    %s89 = sphi 0, %s87
    %s90 = sphi 0, %s89
    %s104 = sphi 0, %s90
    %s108 = sphi 0, %s108
    %s110 = sphi 0, %s108
    %s111 = sphi 0, %s110
    %s125 = sphi 0, %s111
    %s129 = sphi 0, %s129
    %s131 = sphi 0, %s129
    %s132 = sphi 0, %s131
    %s146 = sphi 0, %s132
    %s150 = sphi 0, %s150
    %s152 = sphi 0, %s150
    %s153 = sphi 0, %s152
    %s167 = sphi 0, %s153
    %s171 = sphi 0, %s171
    %s173 = sphi 0, %s171
    %s174 = sphi 0, %s173
    %s188 = sphi 0, %s174
    %s196 = sphi 0, %s198
    %s199 = sphi 0, %s196
    %s200 = sphi 0, %s199
    %s216 = sphi 0, %s200
  $region4: #{point_shift_net.3} parent=0 // loop_header_branch
    %16 = sbr.rel (%p14) target = $region8
  $region5: #{point_shift_net.3} parent=0 // loop_body
    %s18 = ssub.s32 %s13, 1
    %s19 = ssub.s32 %s13, 2
    %s26 = sadd.s32 1, %s21
    %p27 = scmp.ge.s32.totalorder %s26, 1
    %s28 = scalar_select %p27, 0, %s26
    %s29 = sadd.s32 1, %s20
    %s30 = scalar_select %p27, %s29, %s20
    %p31 = scmp.ge.s32.totalorder %s30, 2
    %s32 = scalar_select %p31, 0, %s30
    %s33 = ssub.s32 %s20, %s32
    %s34 = ssub.s32 %s21, %s28
    %s35 = sor.u32 %s33, %s34
    %p36 = scmp.eq.s32.totalorder %s35, 0
    %s38 = sadd.s32 %s37, 1
    %s39 = scalar_select %p36, %s37, %s38
    %p42 = pneg %p36
    %p43 = scmp.eq.s32.totalorder %s13, 1
    %p44 = por %p42, %p43
    %p45 = scmp.ne.s32.totalorder %s37, %s40
    %p46 = scmp.eq.s32.totalorder %s13, 0
    %p47 = por %p45, %p46
    %p48 = scmp.ne.s32.totalorder %s37, %s40
    %p49 = scmp.eq.s32.totalorder %s18, 1
    %p50 = por %p48, %p49
    %p51 = scmp.ne.s32.totalorder %s40, %s41
    %p52 = scmp.eq.s32.totalorder %s18, 0
    %p53 = por %p51, %p52
    %p54 = scmp.ne.s32.totalorder %s40, %s41
    %p55 = scmp.eq.s32.totalorder %s19, 1
    %p56 = por %p54, %p55
    %p58 = scmp.ne.s32.totalorder %s41, %s57
    %p59 = scmp.eq.s32.totalorder %s19, 0
    %p60 = por %p58, %p59
    %s61 = ssub.s32 %s20, %s32
    %p62 = scmp.eq.s32.totalorder %s61, 0
    %s64 = sadd.s32 %s63, 1
    %s65 = scalar_select %p62, %s63, %s64
    %p68 = pneg %p62
    %p69 = scmp.eq.s32.totalorder %s13, 1
    %p70 = por %p68, %p69
    %p71 = scmp.ne.s32.totalorder %s63, %s66
    %p72 = scmp.eq.s32.totalorder %s13, 0
    %p73 = por %p71, %p72
    %p74 = scmp.ne.s32.totalorder %s63, %s66
    %p75 = scmp.eq.s32.totalorder %s18, 1
    %p76 = por %p74, %p75
    %p77 = scmp.ne.s32.totalorder %s66, %s67
    %p78 = scmp.eq.s32.totalorder %s18, 0
    %p79 = por %p77, %p78
    %p80 = scmp.ne.s32.totalorder %s66, %s67
    %p81 = scmp.eq.s32.totalorder %s19, 1
    %p82 = por %p80, %p81
    %p84 = scmp.ne.s32.totalorder %s67, %s83
    %p85 = scmp.eq.s32.totalorder %s19, 0
    %p86 = por %p84, %p85
    %s88 = sadd.s32 %s87, 1
    %p91 = scmp.eq.s32.totalorder %s13, 1
    %p92 = scmp.ne.s32.totalorder %s87, %s89
    %p93 = scmp.eq.s32.totalorder %s13, 0
    %p94 = por %p92, %p93
    %p95 = scmp.ne.s32.totalorder %s87, %s89
    %p96 = scmp.eq.s32.totalorder %s18, 1
    %p97 = por %p95, %p96
    %p98 = scmp.ne.s32.totalorder %s89, %s90
    %p99 = scmp.eq.s32.totalorder %s18, 0
    %p100 = por %p98, %p99
    %p101 = scmp.ne.s32.totalorder %s89, %s90
    %p102 = scmp.eq.s32.totalorder %s19, 1
    %p103 = por %p101, %p102
    %p105 = scmp.ne.s32.totalorder %s90, %s104
    %p106 = scmp.eq.s32.totalorder %s19, 0
    %p107 = por %p105, %p106
    %s109 = sadd.s32 %s108, 1
    %p112 = scmp.eq.s32.totalorder %s13, 1
    %p113 = scmp.ne.s32.totalorder %s108, %s110
    %p114 = scmp.eq.s32.totalorder %s13, 0
    %p115 = por %p113, %p114
    %p116 = scmp.ne.s32.totalorder %s108, %s110
    %p117 = scmp.eq.s32.totalorder %s18, 1
    %p118 = por %p116, %p117
    %p119 = scmp.ne.s32.totalorder %s110, %s111
    %p120 = scmp.eq.s32.totalorder %s18, 0
    %p121 = por %p119, %p120
    %p122 = scmp.ne.s32.totalorder %s110, %s111
    %p123 = scmp.eq.s32.totalorder %s19, 1
    %p124 = por %p122, %p123
    %p126 = scmp.ne.s32.totalorder %s111, %s125
    %p127 = scmp.eq.s32.totalorder %s19, 0
    %p128 = por %p126, %p127
    %s130 = sadd.s32 %s129, 1
    %p133 = scmp.eq.s32.totalorder %s13, 1
    %p134 = scmp.ne.s32.totalorder %s129, %s131
    %p135 = scmp.eq.s32.totalorder %s13, 0
    %p136 = por %p134, %p135
    %p137 = scmp.ne.s32.totalorder %s129, %s131
    %p138 = scmp.eq.s32.totalorder %s18, 1
    %p139 = por %p137, %p138
    %p140 = scmp.ne.s32.totalorder %s131, %s132
    %p141 = scmp.eq.s32.totalorder %s18, 0
    %p142 = por %p140, %p141
    %p143 = scmp.ne.s32.totalorder %s131, %s132
    %p144 = scmp.eq.s32.totalorder %s19, 1
    %p145 = por %p143, %p144
    %p147 = scmp.ne.s32.totalorder %s132, %s146
    %p148 = scmp.eq.s32.totalorder %s19, 0
    %p149 = por %p147, %p148
    %s151 = sadd.s32 %s150, 1
    %p154 = scmp.eq.s32.totalorder %s13, 1
    %p155 = scmp.ne.s32.totalorder %s150, %s152
    %p156 = scmp.eq.s32.totalorder %s13, 0
    %p157 = por %p155, %p156
    %p158 = scmp.ne.s32.totalorder %s150, %s152
    %p159 = scmp.eq.s32.totalorder %s18, 1
    %p160 = por %p158, %p159
    %p161 = scmp.ne.s32.totalorder %s152, %s153
    %p162 = scmp.eq.s32.totalorder %s18, 0
    %p163 = por %p161, %p162
    %p164 = scmp.ne.s32.totalorder %s152, %s153
    %p165 = scmp.eq.s32.totalorder %s19, 1
    %p166 = por %p164, %p165
    %p168 = scmp.ne.s32.totalorder %s153, %s167
    %p169 = scmp.eq.s32.totalorder %s19, 0
    %p170 = por %p168, %p169
    %s172 = sadd.s32 %s171, 1
    %p175 = scmp.eq.s32.totalorder %s13, 1
    %p176 = scmp.ne.s32.totalorder %s171, %s173
    %p177 = scmp.eq.s32.totalorder %s13, 0
    %p178 = por %p176, %p177
    %p179 = scmp.ne.s32.totalorder %s171, %s173
    %p180 = scmp.eq.s32.totalorder %s18, 1
    %p181 = por %p179, %p180
    %p182 = scmp.ne.s32.totalorder %s173, %s174
    %p183 = scmp.eq.s32.totalorder %s18, 0
    %p184 = por %p182, %p183
    %p185 = scmp.ne.s32.totalorder %s173, %s174
    %p186 = scmp.eq.s32.totalorder %s19, 1
    %p187 = por %p185, %p186
    %p189 = scmp.ne.s32.totalorder %s174, %s188
    %p190 = scmp.eq.s32.totalorder %s19, 0
    %p191 = por %p189, %p190
    %s192 = ssub.s32 %s20, %s32
    %s193 = ssub.s32 %s21, %s28
    %s194 = sor.u32 %s192, %s193
    %p195 = scmp.eq.s32.totalorder %s194, 0
    %s197 = sadd.s32 %s196, 1
    %s198 = scalar_select %p195, %s196, %s197
    %p201 = pneg %p195
    %p202 = scmp.eq.s32.totalorder %s13, 1
    %p203 = por %p201, %p202
    %p204 = scmp.ne.s32.totalorder %s196, %s199
    %p205 = scmp.eq.s32.totalorder %s13, 0
    %p206 = por %p204, %p205
    %p207 = scmp.ne.s32.totalorder %s196, %s199
    %p208 = scmp.eq.s32.totalorder %s18, 1
    %p209 = por %p207, %p208
    %p210 = scmp.ne.s32.totalorder %s199, %s200
    %p211 = scmp.eq.s32.totalorder %s18, 0
    %p212 = por %p210, %p211
    %p213 = scmp.ne.s32.totalorder %s199, %s200
    %p214 = scmp.eq.s32.totalorder %s19, 1
    %p215 = por %p213, %p214
    %p217 = scmp.ne.s32.totalorder %s200, %s216
    %p218 = scmp.eq.s32.totalorder %s19, 0
    %p219 = por %p217, %p218
    %p220 = scmp.le.s32.totalorder 1, %s13
    %p221 = scmp.lt.s32.totalorder %s13, 3
    %p222 = pnand %p220, %p221
    %p223 = pneg %p222
    // Predicated region
    $region9: #{point_shift_net.3} parent=5 // pred_check
      _
    $region10: #{point_shift_net.3} parent=5 // pred_check_branch
      %225 = sbr.rel (%p222) target = $region12
    $region11: #{point_shift_net.3} parent=5 // pred_region
      %s226 = ssub.s32 %s13, 1
      // Predicated region
      $region13: #{point_shift_net.3} parent=11 // pred_check
        %p227 = pneg %p100
      $region14: #{point_shift_net.3} parent=11 // pred_check_branch
        %229 = sbr.rel (%p227) target = $region16
      $region15: #{point_shift_net.3} parent=11 // pred_region
        _
      $region16: #{point_shift_net.3} parent=11 // pred_fallthru
        _
      // Predicated region
      $region17: #{point_shift_net.3} parent=11 // pred_check
        %p230 = pneg %p121
      $region18: #{point_shift_net.3} parent=11 // pred_check_branch
        %232 = sbr.rel (%p230) target = $region20
      $region19: #{point_shift_net.3} parent=11 // pred_region
        _
      $region20: #{point_shift_net.3} parent=11 // pred_fallthru
        _
      // Predicated region
      $region21: #{point_shift_net.3} parent=11 // pred_check
        %p233 = pneg %p142
      $region22: #{point_shift_net.3} parent=11 // pred_check_branch
        %235 = sbr.rel (%p233) target = $region24
      $region23: #{point_shift_net.3} parent=11 // pred_region
        _
      $region24: #{point_shift_net.3} parent=11 // pred_fallthru
        _
      // Predicated region
      $region25: #{point_shift_net.3} parent=11 // pred_check
        %p236 = pneg %p163
      $region26: #{point_shift_net.3} parent=11 // pred_check_branch
        %238 = sbr.rel (%p236) target = $region28
      $region27: #{point_shift_net.3} parent=11 // pred_region
        _
      $region28: #{point_shift_net.3} parent=11 // pred_fallthru
        _
      // Predicated region
      $region29: #{point_shift_net.3} parent=11 // pred_check
        %p239 = pneg %p184
      $region30: #{point_shift_net.3} parent=11 // pred_check_branch
        %241 = sbr.rel (%p239) target = $region32
      $region31: #{point_shift_net.3} parent=11 // pred_region
        _
      $region32: #{point_shift_net.3} parent=11 // pred_fallthru
        _
    $region12: #{point_shift_net.3} parent=5 // pred_fallthru
      _
    %p242 = scmp.lt.s32.totalorder %s13, 2
    // Predicated region
    $region33: #{point_shift_net.3} parent=5 // pred_check
      %p243 = pneg %p242
    $region34: #{point_shift_net.3} parent=5 // pred_check_branch
      %245 = sbr.rel (%p243) target = $region36
    $region35: #{point_shift_net.3} parent=5 // pred_region
      // Predicated region
      $region37: #{point_shift_net.3} parent=35 // pred_check
        %p246 = pneg %p47
      $region38: #{point_shift_net.3} parent=35 // pred_check_branch
        %248 = sbr.rel (%p246) target = $region40
      $region39: #{point_shift_net.3} parent=35 // pred_region
        %p249 = scmp.lt.s32.totalorder %s20, 1
        %s250 = scalar_select %p249, %s20, 1
        %p251 = scmp.lt.s32.totalorder %s21, 0
        %s252 = scalar_select %p251, %s21, 0
        %s253 = smul.addr %s250, 32
        %s254 = sadd.s32 %s252, %s253
        %s255 = smul.addr %s254, 4
        %s256 = scalar_lea.vmem %s0, %s255
      $region40: #{point_shift_net.3} parent=35 // pred_fallthru
        _
      // Predicated region
      $region41: #{point_shift_net.3} parent=35 // pred_check
        %p257 = pneg %p73
      $region42: #{point_shift_net.3} parent=35 // pred_check_branch
        %259 = sbr.rel (%p257) target = $region44
      $region43: #{point_shift_net.3} parent=35 // pred_region
        %p260 = scmp.lt.s32.totalorder %s20, 1
        %s261 = scalar_select %p260, %s20, 1
        %s262 = smul.addr %s261, 16
        %s263 = smul.addr %s262, 8
        %s264 = scalar_lea.vmem %s1, %s263
      $region44: #{point_shift_net.3} parent=35 // pred_fallthru
        _
    $region36: #{point_shift_net.3} parent=5 // pred_fallthru
      _
    %p265 = scmp.le.s32.totalorder 1, %s13
    %p266 = scmp.lt.s32.totalorder %s13, 3
    %p267 = pnand %p265, %p266
    %p268 = pneg %p267
    // Predicated region
    $region45: #{point_shift_net.3} parent=5 // pred_check
      _
    $region46: #{point_shift_net.3} parent=5 // pred_check_branch
      %270 = sbr.rel (%p267) target = $region48
    $region47: #{point_shift_net.3} parent=5 // pred_region
      %s271 = ssub.s32 %s13, 1
      %p272 = scmp.lt.s32.totalorder %s22, 1
      %s273 = scalar_select %p272, %s22, 1
      %p274 = scmp.lt.s32.totalorder %s23, 0
      %s275 = scalar_select %p274, %s23, 0
      %s276 = smul.addr %s273, 32
      %s277 = sadd.s32 %s275, %s276
      %s278 = smul.addr %s277, 4
      %s279 = scalar_lea.vmem %s0, %s278
      %p280 = pneg %p53
      %p281 = pneg %p50
      %p282 = scmp.lt.s32.totalorder %s22, 1
      %s283 = scalar_select %p282, %s22, 1
      %s284 = smul.addr %s283, 16
      %s285 = smul.addr %s284, 8
      %s286 = scalar_lea.vmem %s1, %s285
      %p287 = pneg %p79
      %p288 = pneg %p76
      %p289 = pneg %p100
      %p290 = pneg %p97
      %p291 = pneg %p121
      %p292 = pneg %p118
      %p293 = pneg %p142
      %p294 = pneg %p139
      %p295 = pneg %p163
      %p296 = pneg %p160
      %p297 = pneg %p184
      %p298 = pneg %p181
      %p299 = pneg %p212
      %p300 = pneg %p209
      %p301 = scmp.lt.s32.totalorder %s22, 1
      %s302 = scalar_select %p301, %s22, 1
      %p303 = scmp.lt.s32.totalorder %s23, 0
      %s304 = scalar_select %p303, %s23, 0
      %s305 = sadd.s32 %s304, %s302
      %s306 = smul.addr %s305, 4
      %s307 = scalar_lea.vmem %s7, %s306
      %p308 = scmp.lt.s32.totalorder %s22, 1
      %s309 = scalar_select %p308, %s22, 1
      %p310 = scmp.lt.s32.totalorder %s23, 0
      %s311 = scalar_select %p310, %s23, 0
      %s312 = smul.addr %s309, 32
      %s313 = sadd.s32 %s311, %s312
      %s314 = smul.addr %s313, 4
      %s315 = scalar_lea.vmem %s0, %s314
      %p316 = scmp.lt.s32.totalorder %s22, 1
      %s317 = scalar_select %p316, %s22, 1
      %s318 = smul.addr %s317, 16
      %s319 = smul.addr %s318, 8
      %s320 = scalar_lea.vmem %s1, %s319
      %p321 = scmp.lt.s32.totalorder %s22, 1
      %s322 = scalar_select %p321, %s22, 1
      %p323 = scmp.lt.s32.totalorder %s23, 0
      %s324 = scalar_select %p323, %s23, 0
      %s325 = sadd.s32 %s324, %s322
      %s326 = smul.addr %s325, 4
      %s327 = scalar_lea.vmem %s7, %s326
      %v329 = vld [vmem:[%s315] sm:$0xf]
      %v330 = vld [vmem:[%s315 + $0x4] sm:$0xf]
      %v331 = vld [vmem:[%s315 + $0x8] sm:$0xf]
      %v332 = vld [vmem:[%s315 + $0xc] sm:$0xf]
      %v333 = vld [vmem:[%s315 + $0x10] sm:$0xf]
      %v334 = vld [vmem:[%s315 + $0x14] sm:$0xf]
      %v335 = vld [vmem:[%s315 + $0x18] sm:$0xf]
      %v336 = vld [vmem:[%s315 + $0x1c] sm:$0xf]
      %v337 = vld [vmem:[%s315 + $0x20] sm:$0xf]
      %v338 = vld [vmem:[%s315 + $0x24] sm:$0xf]
      %v339 = vld [vmem:[%s315 + $0x28] sm:$0xf]
      %v340 = vld [vmem:[%s315 + $0x2c] sm:$0xf]
      %v341 = vld [vmem:[%s315 + $0x30] sm:$0xf]
      %v342 = vld [vmem:[%s315 + $0x34] sm:$0xf]
      %v343 = vld [vmem:[%s315 + $0x38] sm:$0xf]
      %v344 = vld [vmem:[%s315 + $0x3c] sm:$0xf]
      %v345 = vld [vmem:[%s315 + $0x40] sm:$0xf]
      %v346 = vld [vmem:[%s315 + $0x44] sm:$0xf]
      %v347 = vld [vmem:[%s315 + $0x48] sm:$0xf]
      %v348 = vld [vmem:[%s315 + $0x4c] sm:$0xf]
      %v349 = vld [vmem:[%s315 + $0x50] sm:$0xf]
      %v350 = vld [vmem:[%s315 + $0x54] sm:$0xf]
      %v351 = vld [vmem:[%s315 + $0x58] sm:$0xf]
      %v352 = vld [vmem:[%s315 + $0x5c] sm:$0xf]
      %v353 = vld [vmem:[%s315 + $0x60] sm:$0xf]
      %v354 = vld [vmem:[%s315 + $0x64] sm:$0xf]
      %v355 = vld [vmem:[%s315 + $0x68] sm:$0xf]
      %v356 = vld [vmem:[%s315 + $0x6c] sm:$0xf]
      %v357 = vld [vmem:[%s315 + $0x70] sm:$0xf]
      %v358 = vld [vmem:[%s315 + $0x74] sm:$0xf]
      %v359 = vld [vmem:[%s315 + $0x78] sm:$0xf]
      %v360 = vld [vmem:[%s315 + $0x7c] sm:$0xf]
      %v361 = vld [vmem:[%s2] sm:$0xff]
      %v362 = vld [vmem:[%s2 + $0x8] sm:$0xff]
      %v363 = vld [vmem:[%s2 + $0x10] sm:$0xff]
      %v364 = vld [vmem:[%s2 + $0x18] sm:$0xff]
      %v365 = vld [vmem:[%s2 + $0x20] sm:$0xff]
      %v366 = vld [vmem:[%s2 + $0x28] sm:$0xff]
      %v367 = vld [vmem:[%s2 + $0x30] sm:$0xff]
      %v368 = vld [vmem:[%s2 + $0x38] sm:$0xff]
      %v369 = vld [vmem:[%s2 + $0x40] sm:$0xff]
      %v370 = vld [vmem:[%s2 + $0x48] sm:$0xff]
      %v371 = vld [vmem:[%s2 + $0x50] sm:$0xff]
      %v372 = vld [vmem:[%s2 + $0x58] sm:$0xff]
      %v373 = vld [vmem:[%s2 + $0x60] sm:$0xff]
      %v374 = vld [vmem:[%s2 + $0x68] sm:$0xff]
      %v375 = vld [vmem:[%s2 + $0x70] sm:$0xff]
      %v376 = vld [vmem:[%s2 + $0x78] sm:$0xff]
      %v377 = vld [vmem:[%s320] sm:$0xff]
      %v378 = vld [vmem:[%s320 + $0x8] sm:$0xff]
      %v379 = vld [vmem:[%s320 + $0x10] sm:$0xff]
      %v380 = vld [vmem:[%s320 + $0x18] sm:$0xff]
      %v381 = vld [vmem:[%s320 + $0x20] sm:$0xff]
      %v382 = vld [vmem:[%s320 + $0x28] sm:$0xff]
      %v383 = vld [vmem:[%s320 + $0x30] sm:$0xff]
      %v384 = vld [vmem:[%s320 + $0x38] sm:$0xff]
      %v385 = vld [vmem:[%s320 + $0x40] sm:$0xff]
      %v386 = vld [vmem:[%s320 + $0x48] sm:$0xff]
      %v387 = vld [vmem:[%s320 + $0x50] sm:$0xff]
      %v388 = vld [vmem:[%s320 + $0x58] sm:$0xff]
      %v389 = vld [vmem:[%s320 + $0x60] sm:$0xff]
      %v390 = vld [vmem:[%s320 + $0x68] sm:$0xff]
      %v391 = vld [vmem:[%s320 + $0x70] sm:$0xff]
      %v392 = vld [vmem:[%s320 + $0x78] sm:$0xff]
      %394 = vset.pattern.permute.xlu0 0
      %395 = vperm.xlu0 %394, %v377
      %v396 = vpop.permute.xlu0 %395
      %399 = vset.pattern.permute.xlu0 0
      %400 = vperm.xlu0 %399, %v378
      %v401 = vpop.permute.xlu0 %400
      %404 = vset.pattern.permute.xlu0 0
      %405 = vperm.xlu0 %404, %v379
      %v406 = vpop.permute.xlu0 %405
      %409 = vset.pattern.permute.xlu0 0
      %410 = vperm.xlu0 %409, %v380
      %v411 = vpop.permute.xlu0 %410
      %414 = vset.pattern.permute.xlu0 0
      %415 = vperm.xlu0 %414, %v381
      %v416 = vpop.permute.xlu0 %415
      %419 = vset.pattern.permute.xlu0 0
      %420 = vperm.xlu0 %419, %v382
      %v421 = vpop.permute.xlu0 %420
      %424 = vset.pattern.permute.xlu0 0
      %425 = vperm.xlu0 %424, %v383
      %v426 = vpop.permute.xlu0 %425
      %429 = vset.pattern.permute.xlu0 0
      %430 = vperm.xlu0 %429, %v384
      %v431 = vpop.permute.xlu0 %430
      %434 = vset.pattern.permute.xlu0 0
      %435 = vperm.xlu0 %434, %v385
      %v436 = vpop.permute.xlu0 %435
      %439 = vset.pattern.permute.xlu0 0
      %440 = vperm.xlu0 %439, %v386
      %v441 = vpop.permute.xlu0 %440
      %444 = vset.pattern.permute.xlu0 0
      %445 = vperm.xlu0 %444, %v387
      %v446 = vpop.permute.xlu0 %445
      %449 = vset.pattern.permute.xlu0 0
      %450 = vperm.xlu0 %449, %v388
      %v451 = vpop.permute.xlu0 %450
      %454 = vset.pattern.permute.xlu0 0
      %455 = vperm.xlu0 %454, %v389
      %v456 = vpop.permute.xlu0 %455
      %459 = vset.pattern.permute.xlu0 0
      %460 = vperm.xlu0 %459, %v390
      %v461 = vpop.permute.xlu0 %460
      %464 = vset.pattern.permute.xlu0 0
      %465 = vperm.xlu0 %464, %v391
      %v466 = vpop.permute.xlu0 %465
      %469 = vset.pattern.permute.xlu0 0
      %470 = vperm.xlu0 %469, %v392
      %v471 = vpop.permute.xlu0 %470
      %v489 = vunpack.c.l.b16 %v361
      %v490 = vunpack.c.h.b16 %v361
      %v491 = vunpack.c.l.b16 %v362
      %v492 = vunpack.c.h.b16 %v362
      %v493 = vunpack.c.l.b16 %v363
      %v494 = vunpack.c.h.b16 %v363
      %v495 = vunpack.c.l.b16 %v364
      %v496 = vunpack.c.h.b16 %v364
      %v497 = vunpack.c.l.b16 %v365
      %v498 = vunpack.c.h.b16 %v365
      %v499 = vunpack.c.l.b16 %v366
      %v500 = vunpack.c.h.b16 %v366
      %v501 = vunpack.c.l.b16 %v367
      %v502 = vunpack.c.h.b16 %v367
      %v503 = vunpack.c.l.b16 %v368
      %v504 = vunpack.c.h.b16 %v368
      %v505 = vunpack.c.l.b16 %v369
      %v506 = vunpack.c.h.b16 %v369
      %v507 = vunpack.c.l.b16 %v370
      %v508 = vunpack.c.h.b16 %v370
      %v509 = vunpack.c.l.b16 %v371
      %v510 = vunpack.c.h.b16 %v371
      %v511 = vunpack.c.l.b16 %v372
      %v512 = vunpack.c.h.b16 %v372
      %v513 = vunpack.c.l.b16 %v373
      %v514 = vunpack.c.h.b16 %v373
      %v515 = vunpack.c.l.b16 %v374
      %v516 = vunpack.c.h.b16 %v374
      %v517 = vunpack.c.l.b16 %v375
      %v518 = vunpack.c.h.b16 %v375
      %v519 = vunpack.c.l.b16 %v376
      %v520 = vunpack.c.h.b16 %v376
      %v521 = vpack.c.b16 %v491, %v489
      %v522 = vpack.c.b16 %v492, %v490
      %v523 = vpack.c.b16 %v495, %v493
      %v524 = vpack.c.b16 %v496, %v494
      %v525 = vpack.c.b16 %v499, %v497
      %v526 = vpack.c.b16 %v500, %v498
      %v527 = vpack.c.b16 %v503, %v501
      %v528 = vpack.c.b16 %v504, %v502
      %v529 = vpack.c.b16 %v507, %v505
      %v530 = vpack.c.b16 %v508, %v506
      %v531 = vpack.c.b16 %v511, %v509
      %v532 = vpack.c.b16 %v512, %v510
      %v533 = vpack.c.b16 %v515, %v513
      %v534 = vpack.c.b16 %v516, %v514
      %v535 = vpack.c.b16 %v519, %v517
      %v536 = vpack.c.b16 %v520, %v518
      %v585 = vunpack.c.l.b16 %v329
      %v586 = vunpack.c.l.b16 %v330
      %v587 = vunpack.c.l.b16 %v331
      %v588 = vunpack.c.l.b16 %v332
      %v589 = vunpack.c.l.b16 %v333
      %v590 = vunpack.c.l.b16 %v334
      %v591 = vunpack.c.l.b16 %v335
      %v592 = vunpack.c.l.b16 %v336
      %v593 = vunpack.c.l.b16 %v337
      %v594 = vunpack.c.l.b16 %v338
      %v595 = vunpack.c.l.b16 %v339
      %v596 = vunpack.c.l.b16 %v340
      %v597 = vunpack.c.l.b16 %v341
      %v598 = vunpack.c.l.b16 %v342
      %v599 = vunpack.c.l.b16 %v343
      %v600 = vunpack.c.l.b16 %v344
      %v601 = vunpack.c.l.b16 %v345
      %v602 = vunpack.c.l.b16 %v346
      %v603 = vunpack.c.l.b16 %v347
      %v604 = vunpack.c.l.b16 %v348
      %v605 = vunpack.c.l.b16 %v349
      %v606 = vunpack.c.l.b16 %v350
      %v607 = vunpack.c.l.b16 %v351
      %v608 = vunpack.c.l.b16 %v352
      %v609 = vunpack.c.l.b16 %v353
      %v610 = vunpack.c.l.b16 %v354
      %v611 = vunpack.c.l.b16 %v355
      %v612 = vunpack.c.l.b16 %v356
      %v613 = vunpack.c.l.b16 %v357
      %v614 = vunpack.c.l.b16 %v358
      %v615 = vunpack.c.l.b16 %v359
      %v616 = vunpack.c.l.b16 %v360
      %v617 = vpack.c.b16 %v586, %v585
      %v618 = vpack.c.b16 %v588, %v587
      %v619 = vpack.c.b16 %v590, %v589
      %v620 = vpack.c.b16 %v592, %v591
      %v621 = vpack.c.b16 %v594, %v593
      %v622 = vpack.c.b16 %v596, %v595
      %v623 = vpack.c.b16 %v598, %v597
      %v624 = vpack.c.b16 %v600, %v599
      %v625 = vpack.c.b16 %v602, %v601
      %v626 = vpack.c.b16 %v604, %v603
      %v627 = vpack.c.b16 %v606, %v605
      %v628 = vpack.c.b16 %v608, %v607
      %v629 = vpack.c.b16 %v610, %v609
      %v630 = vpack.c.b16 %v612, %v611
      %v631 = vpack.c.b16 %v614, %v613
      %v632 = vpack.c.b16 %v616, %v615
      %649 = vmatprep.subr.bf16.mxu0 0
      %650 = vmatpush1.bf16.msra.mxu0 %v617
      %651 = vmatprep.subr.bf16.mxu0 0
      %652 = vmatpush1.bf16.msra.mxu0 %v618
      %653 = vmatprep.subr.bf16.mxu0 0
      %654 = vmatpush1.bf16.msra.mxu0 %v619
      %655 = vmatprep.subr.bf16.mxu0 0
      %656 = vmatpush1.bf16.msra.mxu0 %v620
      %657 = vmatprep.subr.bf16.mxu0 0
      %658 = vmatpush1.bf16.msra.mxu0 %v621
      %659 = vmatprep.subr.bf16.mxu0 0
      %660 = vmatpush1.bf16.msra.mxu0 %v622
      %661 = vmatprep.subr.bf16.mxu0 0
      %662 = vmatpush1.bf16.msra.mxu0 %v623
      %663 = vmatprep.subr.bf16.mxu0 0
      %664 = vmatpush1.bf16.msra.mxu0 %v624
      %665 = vmatprep.subr.bf16.mxu0 0
      %666 = vmatpush1.bf16.msra.mxu0 %v625
      %667 = vmatprep.subr.bf16.mxu0 0
      %668 = vmatpush1.bf16.msra.mxu0 %v626
      %669 = vmatprep.subr.bf16.mxu0 0
      %670 = vmatpush1.bf16.msra.mxu0 %v627
      %671 = vmatprep.subr.bf16.mxu0 0
      %672 = vmatpush1.bf16.msra.mxu0 %v628
      %673 = vmatprep.subr.bf16.mxu0 0
      %674 = vmatpush1.bf16.msra.mxu0 %v629
      %675 = vmatprep.subr.bf16.mxu0 0
      %676 = vmatpush1.bf16.msra.mxu0 %v630
      %677 = vmatprep.subr.bf16.mxu0 0
      %678 = vmatpush1.bf16.msra.mxu0 %v631
      %679 = vmatprep.subr.bf16.mxu0 0
      %680 = vmatpush1.bf16.msra.mxu0 %v632
      %681 = vmatprep.mubr.bf16.mxu0 %v522
      %682 = vmatmul.mubr.bf16.gmra.mrb[0].mxu0 %v521
      %v683 = vpop.f32.mrb[0].mxu0
      %v684 = vadd.f32 %v396, %v683
      %v685 = vpop.f32.mrb[0].mxu0
      %v686 = vpop.f32.mrb[0].mxu0
      %v687 = vadd.f32 %v401, %v686
      %v688 = vpop.f32.mrb[0].mxu0
      %689 = vmatprep.mubr.bf16.mxu0 %v524
      %690 = vmatmul.mubr.bf16.gmra.mrb[0].mxu0 %v523
      %v691 = vpop.f32.mrb[0].mxu0
      %v692 = vadd.f32 %v406, %v691
      %v693 = vpop.f32.mrb[0].mxu0
      %v694 = vpop.f32.mrb[0].mxu0
      %v695 = vadd.f32 %v411, %v694
      %v696 = vpop.f32.mrb[0].mxu0
      %697 = vmatprep.mubr.bf16.mxu0 %v526
      %698 = vmatmul.mubr.bf16.gmra.mrb[0].mxu0 %v525
      %v699 = vpop.f32.mrb[0].mxu0
      %v700 = vadd.f32 %v416, %v699
      %v701 = vpop.f32.mrb[0].mxu0
      %v702 = vpop.f32.mrb[0].mxu0
      %v703 = vadd.f32 %v421, %v702
      %v704 = vpop.f32.mrb[0].mxu0
      %705 = vmatprep.mubr.bf16.mxu0 %v528
      %706 = vmatmul.mubr.bf16.gmra.mrb[0].mxu0 %v527
      %v707 = vpop.f32.mrb[0].mxu0
      %v708 = vadd.f32 %v426, %v707
      %v709 = vpop.f32.mrb[0].mxu0
      %v710 = vpop.f32.mrb[0].mxu0
      %v711 = vadd.f32 %v431, %v710
      %v712 = vpop.f32.mrb[0].mxu0
      %713 = vmatprep.mubr.bf16.mxu0 %v530
      %714 = vmatmul.mubr.bf16.gmra.mrb[0].mxu0 %v529
      %v715 = vpop.f32.mrb[0].mxu0
      %v716 = vadd.f32 %v436, %v715
      %v717 = vpop.f32.mrb[0].mxu0
      %v718 = vpop.f32.mrb[0].mxu0
      %v719 = vadd.f32 %v441, %v718
      %v720 = vpop.f32.mrb[0].mxu0
      %721 = vmatprep.mubr.bf16.mxu0 %v532
      %722 = vmatmul.mubr.bf16.gmra.mrb[0].mxu0 %v531
      %v723 = vpop.f32.mrb[0].mxu0
      %v724 = vadd.f32 %v446, %v723
      %v725 = vpop.f32.mrb[0].mxu0
      %v726 = vpop.f32.mrb[0].mxu0
      %v727 = vadd.f32 %v451, %v726
      %v728 = vpop.f32.mrb[0].mxu0
      %729 = vmatprep.mubr.bf16.mxu0 %v534
      %730 = vmatmul.mubr.bf16.gmra.mrb[0].mxu0 %v533
      %v731 = vpop.f32.mrb[0].mxu0
      %v732 = vadd.f32 %v456, %v731
      %v733 = vpop.f32.mrb[0].mxu0
      %v734 = vpop.f32.mrb[0].mxu0
      %v735 = vadd.f32 %v461, %v734
      %v736 = vpop.f32.mrb[0].mxu0
      %737 = vmatprep.mubr.bf16.mxu0 %v536
      %738 = vmatmul.mubr.bf16.gmra.mrb[0].mxu0 %v535
      %v739 = vpop.f32.mrb[0].mxu0
      %v740 = vadd.f32 %v466, %v739
      %v741 = vpop.f32.mrb[0].mxu0
      %v742 = vpop.f32.mrb[0].mxu0
      %v743 = vadd.f32 %v471, %v742
      %v744 = vpop.f32.mrb[0].mxu0
      %745 = vdwg.mxu0
      %vm746 = vcmp.gt.f32.partialorder %v684, 0.0
      %vm747 = vcmp.gt.f32.partialorder %v687, 0.0
      %vm748 = vcmp.gt.f32.partialorder %v692, 0.0
      %vm749 = vcmp.gt.f32.partialorder %v695, 0.0
      %vm750 = vcmp.gt.f32.partialorder %v700, 0.0
      %vm751 = vcmp.gt.f32.partialorder %v703, 0.0
      %vm752 = vcmp.gt.f32.partialorder %v708, 0.0
      %vm753 = vcmp.gt.f32.partialorder %v711, 0.0
      %vm754 = vcmp.gt.f32.partialorder %v716, 0.0
      %vm755 = vcmp.gt.f32.partialorder %v719, 0.0
      %vm756 = vcmp.gt.f32.partialorder %v724, 0.0
      %vm757 = vcmp.gt.f32.partialorder %v727, 0.0
      %vm758 = vcmp.gt.f32.partialorder %v732, 0.0
      %vm759 = vcmp.gt.f32.partialorder %v735, 0.0
      %vm760 = vcmp.gt.f32.partialorder %v740, 0.0
      %vm761 = vcmp.gt.f32.partialorder %v743, 0.0
      %v762 = vmul.f32 %v684, 0.2
      %v763 = vmul.f32 %v687, 0.2
      %v764 = vmul.f32 %v692, 0.2
      %v765 = vmul.f32 %v695, 0.2
      %v766 = vmul.f32 %v700, 0.2
      %v767 = vmul.f32 %v703, 0.2
      %v768 = vmul.f32 %v708, 0.2
      %v769 = vmul.f32 %v711, 0.2
      %v770 = vmul.f32 %v716, 0.2
      %v771 = vmul.f32 %v719, 0.2
      %v772 = vmul.f32 %v724, 0.2
      %v773 = vmul.f32 %v727, 0.2
      %v774 = vmul.f32 %v732, 0.2
      %v775 = vmul.f32 %v735, 0.2
      %v776 = vmul.f32 %v740, 0.2
      %v777 = vmul.f32 %v743, 0.2
      %v778 = vsel %vm746, %v684, %v762
      %v779 = vsel %vm747, %v687, %v763
      %v780 = vsel %vm748, %v692, %v764
      %v781 = vsel %vm749, %v695, %v765
      %v782 = vsel %vm750, %v700, %v766
      %v783 = vsel %vm751, %v703, %v767
      %v784 = vsel %vm752, %v708, %v768
      %v785 = vsel %vm753, %v711, %v769
      %v786 = vsel %vm754, %v716, %v770
      %v787 = vsel %vm755, %v719, %v771
      %v788 = vsel %vm756, %v724, %v772
      %v789 = vsel %vm757, %v727, %v773
      %v790 = vsel %vm758, %v732, %v774
      %v791 = vsel %vm759, %v735, %v775
      %v792 = vsel %vm760, %v740, %v776
      %v793 = vsel %vm761, %v743, %v777
      %v794 = vld [vmem:[%s3] sm:$0xf]
      %v795 = vld [vmem:[%s3 + $0x4] sm:$0xf]
      %v796 = vld [vmem:[%s3 + $0x8] sm:$0xf]
      %v797 = vld [vmem:[%s3 + $0xc] sm:$0xf]
      %v798 = vld [vmem:[%s3 + $0x10] sm:$0xf]
      %v799 = vld [vmem:[%s3 + $0x14] sm:$0xf]
      %v800 = vld [vmem:[%s3 + $0x18] sm:$0xf]
      %v801 = vld [vmem:[%s3 + $0x1c] sm:$0xf]
      %v802 = vpack.c.bf16 %v779, %v778
      %v803 = vpack.c.bf16 %v781, %v780
      %v804 = vpack.c.bf16 %v783, %v782
      %v805 = vpack.c.bf16 %v785, %v784
      %v806 = vpack.c.bf16 %v787, %v786
      %v807 = vpack.c.bf16 %v789, %v788
      %v808 = vpack.c.bf16 %v791, %v790
      %v809 = vpack.c.bf16 %v793, %v792
      %v810 = vld [vmem:[%s4] sm:$0xff]
      %v811 = vld [vmem:[%s4 + $0x8] sm:$0xff]
      %v812 = vld [vmem:[%s4 + $0x10] sm:$0xff]
      %v813 = vld [vmem:[%s4 + $0x18] sm:$0xff]
      %v814 = vld [vmem:[%s4 + $0x20] sm:$0xff]
      %v815 = vld [vmem:[%s4 + $0x28] sm:$0xff]
      %v816 = vld [vmem:[%s4 + $0x30] sm:$0xff]
      %v817 = vld [vmem:[%s4 + $0x38] sm:$0xff]
      %819 = vset.pattern.permute.xlu0 0
      %820 = vperm.xlu0 %819, %v810
      %v821 = vpop.permute.xlu0 %820
      %824 = vset.pattern.permute.xlu0 0
      %825 = vperm.xlu0 %824, %v811
      %v826 = vpop.permute.xlu0 %825
      %829 = vset.pattern.permute.xlu0 0
      %830 = vperm.xlu0 %829, %v812
      %v831 = vpop.permute.xlu0 %830
      %834 = vset.pattern.permute.xlu0 0
      %835 = vperm.xlu0 %834, %v813
      %v836 = vpop.permute.xlu0 %835
      %839 = vset.pattern.permute.xlu0 0
      %840 = vperm.xlu0 %839, %v814
      %v841 = vpop.permute.xlu0 %840
      %844 = vset.pattern.permute.xlu0 0
      %845 = vperm.xlu0 %844, %v815
      %v846 = vpop.permute.xlu0 %845
      %849 = vset.pattern.permute.xlu0 0
      %850 = vperm.xlu0 %849, %v816
      %v851 = vpop.permute.xlu0 %850
      %854 = vset.pattern.permute.xlu0 0
      %855 = vperm.xlu0 %854, %v817
      %v856 = vpop.permute.xlu0 %855
      %v866 = vunpack.c.l.b16 %v794
      %v867 = vunpack.c.l.b16 %v795
      %v868 = vunpack.c.l.b16 %v796
      %v869 = vunpack.c.l.b16 %v797
      %v870 = vunpack.c.l.b16 %v798
      %v871 = vunpack.c.l.b16 %v799
      %v872 = vunpack.c.l.b16 %v800
      %v873 = vunpack.c.l.b16 %v801
      %v874 = vpack.c.b16 %v867, %v866
      %v875 = vpack.c.b16 %v869, %v868
      %v876 = vpack.c.b16 %v871, %v870
      %v877 = vpack.c.b16 %v873, %v872
      %882 = vmatprep.subr.bf16.mxu0 0
      %883 = vmatpush1.bf16.msra.mxu0 %v802
      %884 = vmatprep.subr.bf16.mxu0 0
      %885 = vmatpush1.bf16.msra.mxu0 %v803
      %886 = vmatprep.subr.bf16.mxu0 0
      %887 = vmatpush1.bf16.msra.mxu0 %v804
      %888 = vmatprep.subr.bf16.mxu0 0
      %889 = vmatpush1.bf16.msra.mxu0 %v805
      %890 = vmatprep.subr.bf16.mxu0 0
      %891 = vmatpush1.bf16.msra.mxu0 %v806
      %892 = vmatprep.subr.bf16.mxu0 0
      %893 = vmatpush1.bf16.msra.mxu0 %v807
      %894 = vmatprep.subr.bf16.mxu0 0
      %895 = vmatpush1.bf16.msra.mxu0 %v808
      %896 = vmatprep.subr.bf16.mxu0 0
      %897 = vmatpush1.bf16.msra.mxu0 %v809
      %898 = vmatprep.subr.bf16.mxu0 0
      %899 = vmatpush1.bf16.msra.mxu0 0
      %900 = vmatprep.subr.bf16.mxu0 0
      %901 = vmatpush1.bf16.msra.mxu0 0
      %902 = vmatprep.subr.bf16.mxu0 0
      %903 = vmatpush1.bf16.msra.mxu0 0
      %904 = vmatprep.subr.bf16.mxu0 0
      %905 = vmatpush1.bf16.msra.mxu0 0
      %906 = vmatprep.subr.bf16.mxu0 0
      %907 = vmatpush1.bf16.msra.mxu0 0
      %908 = vmatprep.subr.bf16.mxu0 0
      %909 = vmatpush1.bf16.msra.mxu0 0
      %910 = vmatprep.subr.bf16.mxu0 0
      %911 = vmatpush1.bf16.msra.mxu0 0
      %912 = vmatprep.subr.bf16.mxu0 0
      %913 = vmatpush1.bf16.msra.mxu0 0
      %914 = vmatprep.mubr.bf16.mxu0 0
      %915 = vmatmul.mubr.bf16.gmra.mrb[0].mxu0 %v874
      %v916 = vpop.f32.mrb[0].mxu0
      %v917 = vadd.f32 %v821, %v916
      %v918 = vpop.f32.mrb[0].mxu0
      %v919 = vpop.f32.mrb[0].mxu0
      %v920 = vadd.f32 %v826, %v919
      %v921 = vpop.f32.mrb[0].mxu0
      %922 = vmatprep.mubr.bf16.mxu0 0
      %923 = vmatmul.mubr.bf16.gmra.mrb[0].mxu0 %v875
      %v924 = vpop.f32.mrb[0].mxu0
      %v925 = vadd.f32 %v831, %v924
      %v926 = vpop.f32.mrb[0].mxu0
      %v927 = vpop.f32.mrb[0].mxu0
      %v928 = vadd.f32 %v836, %v927
      %v929 = vpop.f32.mrb[0].mxu0
      %930 = vmatprep.mubr.bf16.mxu0 0
      %931 = vmatmul.mubr.bf16.gmra.mrb[0].mxu0 %v876
      %v932 = vpop.f32.mrb[0].mxu0
      %v933 = vadd.f32 %v841, %v932
      %v934 = vpop.f32.mrb[0].mxu0
      %v935 = vpop.f32.mrb[0].mxu0
      %v936 = vadd.f32 %v846, %v935
      %v937 = vpop.f32.mrb[0].mxu0
      %938 = vmatprep.mubr.bf16.mxu0 0
      %939 = vmatmul.mubr.bf16.gmra.mrb[0].mxu0 %v877
      %v940 = vpop.f32.mrb[0].mxu0
      %v941 = vadd.f32 %v851, %v940
      %v942 = vpop.f32.mrb[0].mxu0
      %v943 = vpop.f32.mrb[0].mxu0
      %v944 = vadd.f32 %v856, %v943
      %v945 = vpop.f32.mrb[0].mxu0
      %946 = vdwg.mxu0
      %vm947 = vcmp.gt.f32.partialorder %v917, 0.0
      %vm948 = vcmp.gt.f32.partialorder %v920, 0.0
      %vm949 = vcmp.gt.f32.partialorder %v925, 0.0
      %vm950 = vcmp.gt.f32.partialorder %v928, 0.0
      %vm951 = vcmp.gt.f32.partialorder %v933, 0.0
      %vm952 = vcmp.gt.f32.partialorder %v936, 0.0
      %vm953 = vcmp.gt.f32.partialorder %v941, 0.0
      %vm954 = vcmp.gt.f32.partialorder %v944, 0.0
      %v955 = vmul.f32 %v917, 0.2
      %v956 = vmul.f32 %v920, 0.2
      %v957 = vmul.f32 %v925, 0.2
      %v958 = vmul.f32 %v928, 0.2
      %v959 = vmul.f32 %v933, 0.2
      %v960 = vmul.f32 %v936, 0.2
      %v961 = vmul.f32 %v941, 0.2
      %v962 = vmul.f32 %v944, 0.2
      %v963 = vsel %vm947, %v917, %v955
      %v964 = vsel %vm948, %v920, %v956
      %v965 = vsel %vm949, %v925, %v957
      %v966 = vsel %vm950, %v928, %v958
      %v967 = vsel %vm951, %v933, %v959
      %v968 = vsel %vm952, %v936, %v960
      %v969 = vsel %vm953, %v941, %v961
      %v970 = vsel %vm954, %v944, %v962
      %v971 = vld [vmem:[%s5] sm:$0x7]
      %v972 = vld [vmem:[%s6] sm:$0x7]
      %974 = vset.pattern.permute.xlu0 0
      %975 = vperm.xlu0 %974, %v972
      %v976 = vpop.permute.xlu0 %975
      %vm978 = vcmask 523264
      %v980 = vsel %vm978, %v971, 0
      %982 = vmatprep.subr.mxu0 0.0
      %983 = vmatpush1.msra.mxu0 %v963
      %984 = vmatprep.subr.mxu0 0.0
      %985 = vmatpush1.msra.mxu0 %v964
      %986 = vmatprep.subr.mxu0 0.0
      %987 = vmatpush1.msra.mxu0 %v965
      %988 = vmatprep.subr.mxu0 0.0
      %989 = vmatpush1.msra.mxu0 %v966
      %990 = vmatprep.subr.mxu0 0.0
      %991 = vmatpush1.msra.mxu0 %v967
      %992 = vmatprep.subr.mxu0 0.0
      %993 = vmatpush1.msra.mxu0 %v968
      %994 = vmatprep.subr.mxu0 0.0
      %995 = vmatpush1.msra.mxu0 %v969
      %996 = vmatprep.subr.mxu0 0.0
      %997 = vmatpush1.msra.mxu0 %v970
      %998 = vmatprep.subr.mxu0 0.0
      %999 = vmatpush1.msra.mxu0 0.0
      %1000 = vmatprep.subr.mxu0 0.0
      %1001 = vmatpush1.msra.mxu0 0.0
      %1002 = vmatprep.subr.mxu0 0.0
      %1003 = vmatpush1.msra.mxu0 0.0
      %1004 = vmatprep.subr.mxu0 0.0
      %1005 = vmatpush1.msra.mxu0 0.0
      %1006 = vmatprep.subr.mxu0 0.0
      %1007 = vmatpush1.msra.mxu0 0.0
      %1008 = vmatprep.subr.mxu0 0.0
      %1009 = vmatpush1.msra.mxu0 0.0
      %1010 = vmatprep.subr.mxu0 0.0
      %1011 = vmatpush1.msra.mxu0 0.0
      %1012 = vmatprep.subr.mxu0 0.0
      %1013 = vmatpush1.msra.mxu0 0.0
      %1014 = vmatprep.subr.mxu0 0.0
      %1015 = vmatpush1.msra.mxu0 0.0
      %1016 = vmatprep.subr.mxu0 0.0
      %1017 = vmatpush1.msra.mxu0 0.0
      %1018 = vmatprep.subr.mxu0 0.0
      %1019 = vmatpush1.msra.mxu0 0.0
      %1020 = vmatprep.subr.mxu0 0.0
      %1021 = vmatpush1.msra.mxu0 0.0
      %1022 = vmatprep.subr.mxu0 0.0
      %1023 = vmatpush1.msra.mxu0 0.0
      %1024 = vmatprep.subr.mxu0 0.0
      %1025 = vmatpush1.msra.mxu0 0.0
      %1026 = vmatprep.subr.mxu0 0.0
      %1027 = vmatpush1.msra.mxu0 0.0
      %1028 = vmatprep.subr.mxu0 0.0
      %1029 = vmatpush1.msra.mxu0 0.0
      %1030 = vmatprep.subr.mxu0 0.0
      %1031 = vmatpush1.msra.mxu0 0.0
      %1032 = vmatprep.subr.mxu0 0.0
      %1033 = vmatpush1.msra.mxu0 0.0
      %1034 = vmatprep.subr.mxu0 0.0
      %1035 = vmatpush1.msra.mxu0 0.0
      %1036 = vmatprep.subr.mxu0 0.0
      %1037 = vmatpush1.msra.mxu0 0.0
      %1038 = vmatprep.subr.mxu0 0.0
      %1039 = vmatpush1.msra.mxu0 0.0
      %1040 = vmatprep.subr.mxu0 0.0
      %1041 = vmatpush1.msra.mxu0 0.0
      %1042 = vmatprep.subr.mxu0 0.0
      %1043 = vmatpush1.msra.mxu0 0.0
      %1044 = vmatprep.subr.mxu0 0.0
      %1045 = vmatpush1.msra.mxu0 0.0
      %1046 = vmatprep.mubr.f32.mxu0 0.0
      %1047 = vmatmul.mubr.f32.gmra.mrb[0].mxu0 %v980
      %v1048 = vpop.f32.mrb[0].mxu0
      %v1049 = vadd.f32 %v976, %v1048
      %v1050 = vpop.f32.mrb[0].mxu0
      %1051 = vdwg.mxu0
      %vm1052 = vcmask 124928
      %1053 = vst.msk [vmem:[%s327] sm:$0x7] %vm1052, %v1049
      %p1054 = scmp.lt.s32.totalorder %s22, 1
      %s1055 = scalar_select %p1054, %s22, 1
      %p1056 = scmp.lt.s32.totalorder %s23, 0
      %s1057 = scalar_select %p1056, %s23, 0
      %s1058 = sadd.s32 %s1057, %s1055
      %s1059 = smul.addr %s1058, 4
      %s1060 = scalar_lea.vmem %s7, %s1059
      // Predicated region
      $region49: #{point_shift_net.3} parent=47 // pred_check
        %p1061 = pneg %p209
      $region50: #{point_shift_net.3} parent=47 // pred_check_branch
        %1063 = sbr.rel (%p1061) target = $region52
      $region51: #{point_shift_net.3} parent=47 // pred_region
        _
      $region52: #{point_shift_net.3} parent=47 // pred_fallthru
        _
    $region48: #{point_shift_net.3} parent=5 // pred_fallthru
      _
    %p1064 = scmp.le.s32.totalorder 2, %s13
    // Predicated region
    $region53: #{point_shift_net.3} parent=5 // pred_check
      %p1065 = pneg %p1064
    $region54: #{point_shift_net.3} parent=5 // pred_check_branch
      %1067 = sbr.rel (%p1065) target = $region56
    $region55: #{point_shift_net.3} parent=5 // pred_region
      %s1068 = ssub.s32 %s13, 2
      // Predicated region
      $region57: #{point_shift_net.3} parent=55 // pred_check
        %p1069 = pneg %p215
      $region58: #{point_shift_net.3} parent=55 // pred_check_branch
        %1071 = sbr.rel (%p1069) target = $region60
      $region59: #{point_shift_net.3} parent=55 // pred_region
        %p1072 = scmp.lt.s32.totalorder %s24, 1
        %s1073 = scalar_select %p1072, %s24, 1
        %p1074 = scmp.lt.s32.totalorder %s25, 0
        %s1075 = scalar_select %p1074, %s25, 0
        %s1076 = sadd.s32 %s1075, %s1073
        %s1077 = smul.addr %s1076, 4
        %s1078 = scalar_lea.vmem %s7, %s1077
      $region60: #{point_shift_net.3} parent=55 // pred_fallthru
        _
    $region56: #{point_shift_net.3} parent=5 // pred_fallthru
      _
  $region6: #{point_shift_net.3} parent=0 // loop_footer
    %s17 = sadd.s32 1, %s13
  $region7: #{point_shift_net.3} parent=0 // loop_footer_branch
    %12 = sbr.rel target = $region3
  $region8: #{point_shift_net.3} parent=0 // loop_exit
    _

// kernel: point_shift_net.2
$region0: #{point_shift_net.2}
  #allocation0 [shape = 'u32[]', space=smem, size = 0x4, offset = 0x4, fixed_abs, tag = 'smem constant byte address 0x4 - core index']
  #allocation1 [shape = 'u32[144,128]{1,0:T(1,128)}', space=vmem, size = 0x12000, scoped, tag = 'internal scratch']
  %s0 = inlined_call_operand.vmem [shape: f32[2,8,6,16], index: 0, kind: input, shape index: {}]
  %s1 = inlined_call_operand.vmem [shape: f32[64,6], index: 1, kind: input, shape index: {}]
  %s2 = inlined_call_operand.vmem [shape: f32[64,1], index: 2, kind: input, shape index: {}]
  %s3 = inlined_call_operand.vmem [shape: bf16[128,64], index: 3, kind: input, shape index: {}]
  %s4 = inlined_call_operand.vmem [shape: f32[128,1], index: 4, kind: input, shape index: {}]
  %s5 = inlined_call_operand.vmem [shape: bf16[256,128], index: 5, kind: input, shape index: {}]
  %s6 = inlined_call_operand.vmem [shape: f32[256,1], index: 6, kind: input, shape index: {}]
  %s7 = inlined_call_operand.vmem [shape: bf16[2,256,16], index: 7, kind: output, shape index: {0}]
  %s8 = inlined_call_operand.vmem [shape: f32[2,256,1], index: 8, kind: output, shape index: {1}]
  %9 = xla_tuple %s7, %s8
  %s10 = sld [smem:[#allocation0]]
  $region73: #{point_shift_net.2} parent=0
    _
  %s12 = ssub.s32 1, %s10
  %s13 = scalar_select 0, %s12, %s10
  loop: start=0, step=1, limit=4
  $region2: #{point_shift_net.2} parent=0 // loop_pre_header
    _
  $region3: #{point_shift_net.2} parent=0 // loop_header
    %s15 = sphi 0, %s19
    %p16 = scmp.ge.s32.totalorder %s15, 4
    %s22 = sphi 0, %s34
    %s23 = sphi 0, %s30
    %s24 = sphi 0, %s22
    %s25 = sphi 0, %s23
    %s26 = sphi 0, %s24
    %s27 = sphi 0, %s25
    %s39 = sphi 0, %s41
    %s42 = sphi 0, %s39
    %s43 = sphi 0, %s42
    %s59 = sphi 0, %s43
    %s63 = sphi 0, %s63
    %s65 = sphi 0, %s63
    %s66 = sphi 0, %s65
    %s80 = sphi 0, %s66
    %s84 = sphi 0, %s84
    %s86 = sphi 0, %s84
    %s87 = sphi 0, %s86
    %s101 = sphi 0, %s87
    %s105 = sphi 0, %s105
    %s107 = sphi 0, %s105
    %s108 = sphi 0, %s107
    %s122 = sphi 0, %s108
    %s126 = sphi 0, %s126
    %s128 = sphi 0, %s126
    %s129 = sphi 0, %s128
    %s143 = sphi 0, %s129
    %s147 = sphi 0, %s147
    %s149 = sphi 0, %s147
    %s150 = sphi 0, %s149
    %s164 = sphi 0, %s150
    %s168 = sphi 0, %s168
    %s170 = sphi 0, %s168
    %s171 = sphi 0, %s170
    %s185 = sphi 0, %s171
    %s193 = sphi 0, %s195
    %s196 = sphi 0, %s193
    %s197 = sphi 0, %s196
    %s213 = sphi 0, %s197
    %s219 = sphi 0, %s221
    %s222 = sphi 0, %s219
    %s223 = sphi 0, %s222
    %s239 = sphi 0, %s223
  $region4: #{point_shift_net.2} parent=0 // loop_header_branch
    %18 = sbr.rel (%p16) target = $region8
  $region5: #{point_shift_net.2} parent=0 // loop_body
    %s20 = ssub.s32 %s15, 1
    %s21 = ssub.s32 %s15, 2
    %s28 = sadd.s32 1, %s23
    %p29 = scmp.ge.s32.totalorder %s28, 1
    %s30 = scalar_select %p29, 0, %s28
    %s31 = sadd.s32 1, %s22
    %s32 = scalar_select %p29, %s31, %s22
    %p33 = scmp.ge.s32.totalorder %s32, 2
    %s34 = scalar_select %p33, 0, %s32
    %s35 = ssub.s32 %s22, %s34
    %s36 = ssub.s32 %s23, %s30
    %s37 = sor.u32 %s35, %s36
    %p38 = scmp.eq.s32.totalorder %s37, 0
    %s40 = sadd.s32 %s39, 1
    %s41 = scalar_select %p38, %s39, %s40
    %p44 = pneg %p38
    %p45 = scmp.eq.s32.totalorder %s15, 1
    %p46 = por %p44, %p45
    %p47 = scmp.ne.s32.totalorder %s39, %s42
    %p48 = scmp.eq.s32.totalorder %s15, 0
    %p49 = por %p47, %p48
    %p50 = scmp.ne.s32.totalorder %s39, %s42
    %p51 = scmp.eq.s32.totalorder %s20, 1
    %p52 = por %p50, %p51
    %p53 = scmp.ne.s32.totalorder %s42, %s43
    %p54 = scmp.eq.s32.totalorder %s20, 0
    %p55 = por %p53, %p54
    %p56 = scmp.ne.s32.totalorder %s42, %s43
    %p57 = scmp.eq.s32.totalorder %s21, 1
    %p58 = por %p56, %p57
    %p60 = scmp.ne.s32.totalorder %s43, %s59
    %p61 = scmp.eq.s32.totalorder %s21, 0
    %p62 = por %p60, %p61
    %s64 = sadd.s32 %s63, 1
    %p67 = scmp.eq.s32.totalorder %s15, 1
    %p68 = scmp.ne.s32.totalorder %s63, %s65
    %p69 = scmp.eq.s32.totalorder %s15, 0
    %p70 = por %p68, %p69
    %p71 = scmp.ne.s32.totalorder %s63, %s65
    %p72 = scmp.eq.s32.totalorder %s20, 1
    %p73 = por %p71, %p72
    %p74 = scmp.ne.s32.totalorder %s65, %s66
    %p75 = scmp.eq.s32.totalorder %s20, 0
    %p76 = por %p74, %p75
    %p77 = scmp.ne.s32.totalorder %s65, %s66
    %p78 = scmp.eq.s32.totalorder %s21, 1
    %p79 = por %p77, %p78
    %p81 = scmp.ne.s32.totalorder %s66, %s80
    %p82 = scmp.eq.s32.totalorder %s21, 0
    %p83 = por %p81, %p82
    %s85 = sadd.s32 %s84, 1
    %p88 = scmp.eq.s32.totalorder %s15, 1
    %p89 = scmp.ne.s32.totalorder %s84, %s86
    %p90 = scmp.eq.s32.totalorder %s15, 0
    %p91 = por %p89, %p90
    %p92 = scmp.ne.s32.totalorder %s84, %s86
    %p93 = scmp.eq.s32.totalorder %s20, 1
    %p94 = por %p92, %p93
    %p95 = scmp.ne.s32.totalorder %s86, %s87
    %p96 = scmp.eq.s32.totalorder %s20, 0
    %p97 = por %p95, %p96
    %p98 = scmp.ne.s32.totalorder %s86, %s87
    %p99 = scmp.eq.s32.totalorder %s21, 1
    %p100 = por %p98, %p99
    %p102 = scmp.ne.s32.totalorder %s87, %s101
    %p103 = scmp.eq.s32.totalorder %s21, 0
    %p104 = por %p102, %p103
    %s106 = sadd.s32 %s105, 1
    %p109 = scmp.eq.s32.totalorder %s15, 1
    %p110 = scmp.ne.s32.totalorder %s105, %s107
    %p111 = scmp.eq.s32.totalorder %s15, 0
    %p112 = por %p110, %p111
    %p113 = scmp.ne.s32.totalorder %s105, %s107
    %p114 = scmp.eq.s32.totalorder %s20, 1
    %p115 = por %p113, %p114
    %p116 = scmp.ne.s32.totalorder %s107, %s108
    %p117 = scmp.eq.s32.totalorder %s20, 0
    %p118 = por %p116, %p117
    %p119 = scmp.ne.s32.totalorder %s107, %s108
    %p120 = scmp.eq.s32.totalorder %s21, 1
    %p121 = por %p119, %p120
    %p123 = scmp.ne.s32.totalorder %s108, %s122
    %p124 = scmp.eq.s32.totalorder %s21, 0
    %p125 = por %p123, %p124
    %s127 = sadd.s32 %s126, 1
    %p130 = scmp.eq.s32.totalorder %s15, 1
    %p131 = scmp.ne.s32.totalorder %s126, %s128
    %p132 = scmp.eq.s32.totalorder %s15, 0
    %p133 = por %p131, %p132
    %p134 = scmp.ne.s32.totalorder %s126, %s128
    %p135 = scmp.eq.s32.totalorder %s20, 1
    %p136 = por %p134, %p135
    %p137 = scmp.ne.s32.totalorder %s128, %s129
    %p138 = scmp.eq.s32.totalorder %s20, 0
    %p139 = por %p137, %p138
    %p140 = scmp.ne.s32.totalorder %s128, %s129
    %p141 = scmp.eq.s32.totalorder %s21, 1
    %p142 = por %p140, %p141
    %p144 = scmp.ne.s32.totalorder %s129, %s143
    %p145 = scmp.eq.s32.totalorder %s21, 0
    %p146 = por %p144, %p145
    %s148 = sadd.s32 %s147, 1
    %p151 = scmp.eq.s32.totalorder %s15, 1
    %p152 = scmp.ne.s32.totalorder %s147, %s149
    %p153 = scmp.eq.s32.totalorder %s15, 0
    %p154 = por %p152, %p153
    %p155 = scmp.ne.s32.totalorder %s147, %s149
    %p156 = scmp.eq.s32.totalorder %s20, 1
    %p157 = por %p155, %p156
    %p158 = scmp.ne.s32.totalorder %s149, %s150
    %p159 = scmp.eq.s32.totalorder %s20, 0
    %p160 = por %p158, %p159
    %p161 = scmp.ne.s32.totalorder %s149, %s150
    %p162 = scmp.eq.s32.totalorder %s21, 1
    %p163 = por %p161, %p162
    %p165 = scmp.ne.s32.totalorder %s150, %s164
    %p166 = scmp.eq.s32.totalorder %s21, 0
    %p167 = por %p165, %p166
    %s169 = sadd.s32 %s168, 1
    %p172 = scmp.eq.s32.totalorder %s15, 1
    %p173 = scmp.ne.s32.totalorder %s168, %s170
    %p174 = scmp.eq.s32.totalorder %s15, 0
    %p175 = por %p173, %p174
    %p176 = scmp.ne.s32.totalorder %s168, %s170
    %p177 = scmp.eq.s32.totalorder %s20, 1
    %p178 = por %p176, %p177
    %p179 = scmp.ne.s32.totalorder %s170, %s171
    %p180 = scmp.eq.s32.totalorder %s20, 0
    %p181 = por %p179, %p180
    %p182 = scmp.ne.s32.totalorder %s170, %s171
    %p183 = scmp.eq.s32.totalorder %s21, 1
    %p184 = por %p182, %p183
    %p186 = scmp.ne.s32.totalorder %s171, %s185
    %p187 = scmp.eq.s32.totalorder %s21, 0
    %p188 = por %p186, %p187
    %s189 = ssub.s32 %s22, %s34
    %s190 = ssub.s32 %s23, %s30
    %s191 = sor.u32 %s189, %s190
    %p192 = scmp.eq.s32.totalorder %s191, 0
    %s194 = sadd.s32 %s193, 1
    %s195 = scalar_select %p192, %s193, %s194
    %p198 = pneg %p192
    %p199 = scmp.eq.s32.totalorder %s15, 1
    %p200 = por %p198, %p199
    %p201 = scmp.ne.s32.totalorder %s193, %s196
    %p202 = scmp.eq.s32.totalorder %s15, 0
    %p203 = por %p201, %p202
    %p204 = scmp.ne.s32.totalorder %s193, %s196
    %p205 = scmp.eq.s32.totalorder %s20, 1
    %p206 = por %p204, %p205
    %p207 = scmp.ne.s32.totalorder %s196, %s197
    %p208 = scmp.eq.s32.totalorder %s20, 0
    %p209 = por %p207, %p208
    %p210 = scmp.ne.s32.totalorder %s196, %s197
    %p211 = scmp.eq.s32.totalorder %s21, 1
    %p212 = por %p210, %p211
    %p214 = scmp.ne.s32.totalorder %s197, %s213
    %p215 = scmp.eq.s32.totalorder %s21, 0
    %p216 = por %p214, %p215
    %s217 = ssub.s32 %s22, %s34
    %p218 = scmp.eq.s32.totalorder %s217, 0
    %s220 = sadd.s32 %s219, 1
    %s221 = scalar_select %p218, %s219, %s220
    %p224 = pneg %p218
    %p225 = scmp.eq.s32.totalorder %s15, 1
    %p226 = por %p224, %p225
    %p227 = scmp.ne.s32.totalorder %s219, %s222
    %p228 = scmp.eq.s32.totalorder %s15, 0
    %p229 = por %p227, %p228
    %p230 = scmp.ne.s32.totalorder %s219, %s222
    %p231 = scmp.eq.s32.totalorder %s20, 1
    %p232 = por %p230, %p231
    %p233 = scmp.ne.s32.totalorder %s222, %s223
    %p234 = scmp.eq.s32.totalorder %s20, 0
    %p235 = por %p233, %p234
    %p236 = scmp.ne.s32.totalorder %s222, %s223
    %p237 = scmp.eq.s32.totalorder %s21, 1
    %p238 = por %p236, %p237
    %p240 = scmp.ne.s32.totalorder %s223, %s239
    %p241 = scmp.eq.s32.totalorder %s21, 0
    %p242 = por %p240, %p241
    %p243 = scmp.le.s32.totalorder 1, %s15
    %p244 = scmp.lt.s32.totalorder %s15, 3
    %p245 = pnand %p243, %p244
    %p246 = pneg %p245
    // Predicated region
    $region9: #{point_shift_net.2} parent=5 // pred_check
      _
    $region10: #{point_shift_net.2} parent=5 // pred_check_branch
      %248 = sbr.rel (%p245) target = $region12
    $region11: #{point_shift_net.2} parent=5 // pred_region
      %s249 = ssub.s32 %s15, 1
      // Predicated region
      $region13: #{point_shift_net.2} parent=11 // pred_check
        %p250 = pneg %p76
      $region14: #{point_shift_net.2} parent=11 // pred_check_branch
        %252 = sbr.rel (%p250) target = $region16
      $region15: #{point_shift_net.2} parent=11 // pred_region
        _
      $region16: #{point_shift_net.2} parent=11 // pred_fallthru
        _
      // Predicated region
      $region17: #{point_shift_net.2} parent=11 // pred_check
        %p253 = pneg %p97
      $region18: #{point_shift_net.2} parent=11 // pred_check_branch
        %255 = sbr.rel (%p253) target = $region20
      $region19: #{point_shift_net.2} parent=11 // pred_region
        _
      $region20: #{point_shift_net.2} parent=11 // pred_fallthru
        _
      // Predicated region
      $region21: #{point_shift_net.2} parent=11 // pred_check
        %p256 = pneg %p118
      $region22: #{point_shift_net.2} parent=11 // pred_check_branch
        %258 = sbr.rel (%p256) target = $region24
      $region23: #{point_shift_net.2} parent=11 // pred_region
        _
      $region24: #{point_shift_net.2} parent=11 // pred_fallthru
        _
      // Predicated region
      $region25: #{point_shift_net.2} parent=11 // pred_check
        %p259 = pneg %p139
      $region26: #{point_shift_net.2} parent=11 // pred_check_branch
        %261 = sbr.rel (%p259) target = $region28
      $region27: #{point_shift_net.2} parent=11 // pred_region
        _
      $region28: #{point_shift_net.2} parent=11 // pred_fallthru
        _
      // Predicated region
      $region29: #{point_shift_net.2} parent=11 // pred_check
        %p262 = pneg %p160
      $region30: #{point_shift_net.2} parent=11 // pred_check_branch
        %264 = sbr.rel (%p262) target = $region32
      $region31: #{point_shift_net.2} parent=11 // pred_region
        _
      $region32: #{point_shift_net.2} parent=11 // pred_fallthru
        _
      // Predicated region
      $region33: #{point_shift_net.2} parent=11 // pred_check
        %p265 = pneg %p181
      $region34: #{point_shift_net.2} parent=11 // pred_check_branch
        %267 = sbr.rel (%p265) target = $region36
      $region35: #{point_shift_net.2} parent=11 // pred_region
        _
      $region36: #{point_shift_net.2} parent=11 // pred_fallthru
        _
    $region12: #{point_shift_net.2} parent=5 // pred_fallthru
      _
    %p268 = scmp.lt.s32.totalorder %s15, 2
    // Predicated region
    $region37: #{point_shift_net.2} parent=5 // pred_check
      %p269 = pneg %p268
    $region38: #{point_shift_net.2} parent=5 // pred_check_branch
      %271 = sbr.rel (%p269) target = $region40
    $region39: #{point_shift_net.2} parent=5 // pred_region
      // Predicated region
      $region41: #{point_shift_net.2} parent=39 // pred_check
        %p272 = pneg %p49
      $region42: #{point_shift_net.2} parent=39 // pred_check_branch
        %274 = sbr.rel (%p272) target = $region44
      $region43: #{point_shift_net.2} parent=39 // pred_region
        %p275 = scmp.lt.s32.totalorder %s22, 1
        %s276 = scalar_select %p275, %s22, 1
        %p277 = scmp.lt.s32.totalorder %s23, 0
        %s278 = scalar_select %p277, %s23, 0
        %s279 = smul.addr %s276, 8
        %s280 = sadd.s32 %s278, %s279
        %s281 = smul.addr %s280, 8
        %s282 = scalar_lea.vmem %s0, %s281
      $region44: #{point_shift_net.2} parent=39 // pred_fallthru
        _
    $region40: #{point_shift_net.2} parent=5 // pred_fallthru
      _
    %p283 = scmp.le.s32.totalorder 1, %s15
    %p284 = scmp.lt.s32.totalorder %s15, 3
    %p285 = pnand %p283, %p284
    %p286 = pneg %p285
    // Predicated region
    $region45: #{point_shift_net.2} parent=5 // pred_check
      _
    $region46: #{point_shift_net.2} parent=5 // pred_check_branch
      %288 = sbr.rel (%p285) target = $region48
    $region47: #{point_shift_net.2} parent=5 // pred_region
      %s289 = ssub.s32 %s15, 1
      %p290 = scmp.lt.s32.totalorder %s24, 1
      %s291 = scalar_select %p290, %s24, 1
      %p292 = scmp.lt.s32.totalorder %s25, 0
      %s293 = scalar_select %p292, %s25, 0
      %s294 = smul.addr %s291, 8
      %s295 = sadd.s32 %s293, %s294
      %s296 = smul.addr %s295, 8
      %s297 = scalar_lea.vmem %s0, %s296
      %p298 = pneg %p55
      %p299 = pneg %p52
      %p300 = pneg %p76
      %p301 = pneg %p73
      %p302 = pneg %p97
      %p303 = pneg %p94
      %p304 = pneg %p118
      %p305 = pneg %p115
      %p306 = pneg %p139
      %p307 = pneg %p136
      %p308 = pneg %p160
      %p309 = pneg %p157
      %p310 = pneg %p181
      %p311 = pneg %p178
      %p312 = pneg %p209
      %p313 = pneg %p206
      %p314 = scmp.lt.s32.totalorder %s24, 1
      %s315 = scalar_select %p314, %s24, 1
      %p316 = scmp.lt.s32.totalorder %s25, 0
      %s317 = scalar_select %p316, %s25, 0
      %s318 = smul.addr %s315, 32
      %s319 = sadd.s32 %s317, %s318
      %s320 = smul.addr %s319, 4
      %s321 = scalar_lea.vmem %s7, %s320
      %p322 = pneg %p235
      %p323 = pneg %p232
      %p324 = scmp.lt.s32.totalorder %s24, 1
      %s325 = scalar_select %p324, %s24, 1
      %s326 = smul.addr %s325, 32
      %s327 = smul.addr %s326, 8
      %s328 = scalar_lea.vmem %s8, %s327
      %p329 = scmp.lt.s32.totalorder %s24, 1
      %s330 = scalar_select %p329, %s24, 1
      %p331 = scmp.lt.s32.totalorder %s25, 0
      %s332 = scalar_select %p331, %s25, 0
      %s333 = smul.addr %s330, 8
      %s334 = sadd.s32 %s332, %s333
      %s335 = smul.addr %s334, 8
      %s336 = scalar_lea.vmem %s0, %s335
      %p337 = scmp.lt.s32.totalorder %s24, 1
      %s338 = scalar_select %p337, %s24, 1
      %p339 = scmp.lt.s32.totalorder %s25, 0
      %s340 = scalar_select %p339, %s25, 0
      %s341 = smul.addr %s338, 32
      %s342 = sadd.s32 %s340, %s341
      %s343 = smul.addr %s342, 4
      %s344 = scalar_lea.vmem %s7, %s343
      %p345 = scmp.lt.s32.totalorder %s24, 1
      %s346 = scalar_select %p345, %s24, 1
      %s347 = smul.addr %s346, 32
      %s348 = smul.addr %s347, 8
      %s349 = scalar_lea.vmem %s8, %s348
      %v351 = vld [vmem:[%s336] sm:$0x3f]
      %v352 = vld [vmem:[%s1] sm:$0xff]
      %v353 = vld [vmem:[%s1 + $0x8] sm:$0xff]
      %v354 = vld [vmem:[%s1 + $0x10] sm:$0xff]
      %v355 = vld [vmem:[%s1 + $0x18] sm:$0xff]
      %v356 = vld [vmem:[%s1 + $0x20] sm:$0xff]
      %v357 = vld [vmem:[%s1 + $0x28] sm:$0xff]
      %v358 = vld [vmem:[%s1 + $0x30] sm:$0xff]
      %v359 = vld [vmem:[%s1 + $0x38] sm:$0xff]
      %v360 = vld [vmem:[%s2] sm:$0xff]
      %v361 = vld [vmem:[%s2 + $0x8] sm:$0xff]
      %v362 = vld [vmem:[%s2 + $0x10] sm:$0xff]
      %v363 = vld [vmem:[%s2 + $0x18] sm:$0xff]
      %v364 = vld [vmem:[%s2 + $0x20] sm:$0xff]
      %v365 = vld [vmem:[%s2 + $0x28] sm:$0xff]
      %v366 = vld [vmem:[%s2 + $0x30] sm:$0xff]
      %v367 = vld [vmem:[%s2 + $0x38] sm:$0xff]
      %369 = vset.pattern.permute.xlu0 0
      %370 = vperm.xlu0 %369, %v360
      %v371 = vpop.permute.xlu0 %370
      %374 = vset.pattern.permute.xlu0 0
      %375 = vperm.xlu0 %374, %v361
      %v376 = vpop.permute.xlu0 %375
      %379 = vset.pattern.permute.xlu0 0
      %380 = vperm.xlu0 %379, %v362
      %v381 = vpop.permute.xlu0 %380
      %384 = vset.pattern.permute.xlu0 0
      %385 = vperm.xlu0 %384, %v363
      %v386 = vpop.permute.xlu0 %385
      %389 = vset.pattern.permute.xlu0 0
      %390 = vperm.xlu0 %389, %v364
      %v391 = vpop.permute.xlu0 %390
      %394 = vset.pattern.permute.xlu0 0
      %395 = vperm.xlu0 %394, %v365
      %v396 = vpop.permute.xlu0 %395
      %399 = vset.pattern.permute.xlu0 0
      %400 = vperm.xlu0 %399, %v366
      %v401 = vpop.permute.xlu0 %400
      %404 = vset.pattern.permute.xlu0 0
      %405 = vperm.xlu0 %404, %v367
      %v406 = vpop.permute.xlu0 %405
      %vm408 = vcmask 48128
      %v410 = vsel %vm408, %v352, 0
      %v413 = vsel %vm408, %v353, 0
      %v416 = vsel %vm408, %v354, 0
      %v419 = vsel %vm408, %v355, 0
      %v422 = vsel %vm408, %v356, 0
      %v425 = vsel %vm408, %v357, 0
      %v428 = vsel %vm408, %v358, 0
      %v431 = vsel %vm408, %v359, 0
      %vm433 = vcmask 1045504
      %v435 = vsel %vm433, %v351, 0
      %437 = vmatprep.subr.mxu0 0.0
      %438 = vmatpush1.msra.mxu0 %v435
      %439 = vmatprep.subr.mxu0 0.0
      %440 = vmatpush1.msra.mxu0 0.0
      %441 = vmatprep.subr.mxu0 0.0
      %442 = vmatpush1.msra.mxu0 0.0
      %443 = vmatprep.subr.mxu0 0.0
      %444 = vmatpush1.msra.mxu0 0.0
      %445 = vmatprep.subr.mxu0 0.0
      %446 = vmatpush1.msra.mxu0 0.0
      %447 = vmatprep.subr.mxu0 0.0
      %448 = vmatpush1.msra.mxu0 0.0
      %449 = vmatprep.subr.mxu0 0.0
      %450 = vmatpush1.msra.mxu0 0.0
      %451 = vmatprep.subr.mxu0 0.0
      %452 = vmatpush1.msra.mxu0 0.0
      %453 = vmatprep.subr.mxu0 0.0
      %454 = vmatpush1.msra.mxu0 0.0
      %455 = vmatprep.subr.mxu0 0.0
      %456 = vmatpush1.msra.mxu0 0.0
      %457 = vmatprep.subr.mxu0 0.0
      %458 = vmatpush1.msra.mxu0 0.0
      %459 = vmatprep.subr.mxu0 0.0
      %460 = vmatpush1.msra.mxu0 0.0
      %461 = vmatprep.subr.mxu0 0.0
      %462 = vmatpush1.msra.mxu0 0.0
      %463 = vmatprep.subr.mxu0 0.0
      %464 = vmatpush1.msra.mxu0 0.0
      %465 = vmatprep.subr.mxu0 0.0
      %466 = vmatpush1.msra.mxu0 0.0
      %467 = vmatprep.subr.mxu0 0.0
      %468 = vmatpush1.msra.mxu0 0.0
      %469 = vmatprep.subr.mxu0 0.0
      %470 = vmatpush1.msra.mxu0 0.0
      %471 = vmatprep.subr.mxu0 0.0
      %472 = vmatpush1.msra.mxu0 0.0
      %473 = vmatprep.subr.mxu0 0.0
      %474 = vmatpush1.msra.mxu0 0.0
      %475 = vmatprep.subr.mxu0 0.0
      %476 = vmatpush1.msra.mxu0 0.0
      %477 = vmatprep.subr.mxu0 0.0
      %478 = vmatpush1.msra.mxu0 0.0
      %479 = vmatprep.subr.mxu0 0.0
      %480 = vmatpush1.msra.mxu0 0.0
      %481 = vmatprep.subr.mxu0 0.0
      %482 = vmatpush1.msra.mxu0 0.0
      %483 = vmatprep.subr.mxu0 0.0
      %484 = vmatpush1.msra.mxu0 0.0
      %485 = vmatprep.subr.mxu0 0.0
      %486 = vmatpush1.msra.mxu0 0.0
      %487 = vmatprep.subr.mxu0 0.0
      %488 = vmatpush1.msra.mxu0 0.0
      %489 = vmatprep.subr.mxu0 0.0
      %490 = vmatpush1.msra.mxu0 0.0
      %491 = vmatprep.subr.mxu0 0.0
      %492 = vmatpush1.msra.mxu0 0.0
      %493 = vmatprep.subr.mxu0 0.0
      %494 = vmatpush1.msra.mxu0 0.0
      %495 = vmatprep.subr.mxu0 0.0
      %496 = vmatpush1.msra.mxu0 0.0
      %497 = vmatprep.subr.mxu0 0.0
      %498 = vmatpush1.msra.mxu0 0.0
      %499 = vmatprep.subr.mxu0 0.0
      %500 = vmatpush1.msra.mxu0 0.0
      %501 = vmatprep.mubr.f32.mxu0 0.0
      %502 = vmatmul.mubr.f32.gmra.mrb[0].mxu0 %v410
      %v503 = vpop.f32.mrb[0].mxu0
      %v504 = vadd.f32 %v371, %v503
      %v505 = vpop.f32.mrb[0].mxu0
      %506 = vmatprep.mubr.f32.mxu0 0.0
      %507 = vmatmul.mubr.f32.gmra.mrb[0].mxu0 %v413
      %v508 = vpop.f32.mrb[0].mxu0
      %v509 = vadd.f32 %v376, %v508
      %v510 = vpop.f32.mrb[0].mxu0
      %511 = vmatprep.mubr.f32.mxu0 0.0
      %512 = vmatmul.mubr.f32.gmra.mrb[0].mxu0 %v416
      %v513 = vpop.f32.mrb[0].mxu0
      %v514 = vadd.f32 %v381, %v513
      %v515 = vpop.f32.mrb[0].mxu0
      %516 = vmatprep.mubr.f32.mxu0 0.0
      %517 = vmatmul.mubr.f32.gmra.mrb[0].mxu0 %v419
      %v518 = vpop.f32.mrb[0].mxu0
      %v519 = vadd.f32 %v386, %v518
      %v520 = vpop.f32.mrb[0].mxu0
      %521 = vmatprep.mubr.f32.mxu0 0.0
      %522 = vmatmul.mubr.f32.gmra.mrb[0].mxu0 %v422
      %v523 = vpop.f32.mrb[0].mxu0
      %v524 = vadd.f32 %v391, %v523
      %v525 = vpop.f32.mrb[0].mxu0
      %526 = vmatprep.mubr.f32.mxu0 0.0
      %527 = vmatmul.mubr.f32.gmra.mrb[0].mxu0 %v425
      %v528 = vpop.f32.mrb[0].mxu0
      %v529 = vadd.f32 %v396, %v528
      %v530 = vpop.f32.mrb[0].mxu0
      %531 = vmatprep.mubr.f32.mxu0 0.0
      %532 = vmatmul.mubr.f32.gmra.mrb[0].mxu0 %v428
      %v533 = vpop.f32.mrb[0].mxu0
      %v534 = vadd.f32 %v401, %v533
      %v535 = vpop.f32.mrb[0].mxu0
      %536 = vmatprep.mubr.f32.mxu0 0.0
      %537 = vmatmul.mubr.f32.gmra.mrb[0].mxu0 %v431
      %v538 = vpop.f32.mrb[0].mxu0
      %v539 = vadd.f32 %v406, %v538
      %v540 = vpop.f32.mrb[0].mxu0
      %541 = vdwg.mxu0
      %vm542 = vcmp.gt.f32.partialorder %v504, 0.0
      %vm543 = vcmp.gt.f32.partialorder %v509, 0.0
      %vm544 = vcmp.gt.f32.partialorder %v514, 0.0
      %vm545 = vcmp.gt.f32.partialorder %v519, 0.0
      %vm546 = vcmp.gt.f32.partialorder %v524, 0.0
      %vm547 = vcmp.gt.f32.partialorder %v529, 0.0
      %vm548 = vcmp.gt.f32.partialorder %v534, 0.0
      %vm549 = vcmp.gt.f32.partialorder %v539, 0.0
      %v550 = vmul.f32 %v504, 0.2
      %v551 = vmul.f32 %v509, 0.2
      %v552 = vmul.f32 %v514, 0.2
      %v553 = vmul.f32 %v519, 0.2
      %v554 = vmul.f32 %v524, 0.2
      %v555 = vmul.f32 %v529, 0.2
      %v556 = vmul.f32 %v534, 0.2
      %v557 = vmul.f32 %v539, 0.2
      %v558 = vsel %vm542, %v504, %v550
      %v559 = vsel %vm543, %v509, %v551
      %v560 = vsel %vm544, %v514, %v552
      %v561 = vsel %vm545, %v519, %v553
      %v562 = vsel %vm546, %v524, %v554
      %v563 = vsel %vm547, %v529, %v555
      %v564 = vsel %vm548, %v534, %v556
      %v565 = vsel %vm549, %v539, %v557
      %v566 = vld [vmem:[%s3] sm:$0xf]
      %v567 = vld [vmem:[%s3 + $0x4] sm:$0xf]
      %v568 = vld [vmem:[%s3 + $0x8] sm:$0xf]
      %v569 = vld [vmem:[%s3 + $0xc] sm:$0xf]
      %v570 = vld [vmem:[%s3 + $0x10] sm:$0xf]
      %v571 = vld [vmem:[%s3 + $0x14] sm:$0xf]
      %v572 = vld [vmem:[%s3 + $0x18] sm:$0xf]
      %v573 = vld [vmem:[%s3 + $0x1c] sm:$0xf]
      %v574 = vld [vmem:[%s3 + $0x20] sm:$0xf]
      %v575 = vld [vmem:[%s3 + $0x24] sm:$0xf]
      %v576 = vld [vmem:[%s3 + $0x28] sm:$0xf]
      %v577 = vld [vmem:[%s3 + $0x2c] sm:$0xf]
      %v578 = vld [vmem:[%s3 + $0x30] sm:$0xf]
      %v579 = vld [vmem:[%s3 + $0x34] sm:$0xf]
      %v580 = vld [vmem:[%s3 + $0x38] sm:$0xf]
      %v581 = vld [vmem:[%s3 + $0x3c] sm:$0xf]
      %v582 = vpack.c.bf16 %v559, %v558
      %v583 = vpack.c.bf16 %v561, %v560
      %v584 = vpack.c.bf16 %v563, %v562
      %v585 = vpack.c.bf16 %v565, %v564
      %v586 = vld [vmem:[%s4] sm:$0xff]
      %v587 = vld [vmem:[%s4 + $0x8] sm:$0xff]
      %v588 = vld [vmem:[%s4 + $0x10] sm:$0xff]
      %v589 = vld [vmem:[%s4 + $0x18] sm:$0xff]
      %v590 = vld [vmem:[%s4 + $0x20] sm:$0xff]
      %v591 = vld [vmem:[%s4 + $0x28] sm:$0xff]
      %v592 = vld [vmem:[%s4 + $0x30] sm:$0xff]
      %v593 = vld [vmem:[%s4 + $0x38] sm:$0xff]
      %v594 = vld [vmem:[%s4 + $0x40] sm:$0xff]
      %v595 = vld [vmem:[%s4 + $0x48] sm:$0xff]
      %v596 = vld [vmem:[%s4 + $0x50] sm:$0xff]
      %v597 = vld [vmem:[%s4 + $0x58] sm:$0xff]
      %v598 = vld [vmem:[%s4 + $0x60] sm:$0xff]
      %v599 = vld [vmem:[%s4 + $0x68] sm:$0xff]
      %v600 = vld [vmem:[%s4 + $0x70] sm:$0xff]
      %v601 = vld [vmem:[%s4 + $0x78] sm:$0xff]
      %603 = vset.pattern.permute.xlu0 0
      %604 = vperm.xlu0 %603, %v586
      %v605 = vpop.permute.xlu0 %604
      %608 = vset.pattern.permute.xlu0 0
      %609 = vperm.xlu0 %608, %v587
      %v610 = vpop.permute.xlu0 %609
      %613 = vset.pattern.permute.xlu0 0
      %614 = vperm.xlu0 %613, %v588
      %v615 = vpop.permute.xlu0 %614
      %618 = vset.pattern.permute.xlu0 0
      %619 = vperm.xlu0 %618, %v589
      %v620 = vpop.permute.xlu0 %619
      %623 = vset.pattern.permute.xlu0 0
      %624 = vperm.xlu0 %623, %v590
      %v625 = vpop.permute.xlu0 %624
      %628 = vset.pattern.permute.xlu0 0
      %629 = vperm.xlu0 %628, %v591
      %v630 = vpop.permute.xlu0 %629
      %633 = vset.pattern.permute.xlu0 0
      %634 = vperm.xlu0 %633, %v592
      %v635 = vpop.permute.xlu0 %634
      %638 = vset.pattern.permute.xlu0 0
      %639 = vperm.xlu0 %638, %v593
      %v640 = vpop.permute.xlu0 %639
      %643 = vset.pattern.permute.xlu0 0
      %644 = vperm.xlu0 %643, %v594
      %v645 = vpop.permute.xlu0 %644
      %648 = vset.pattern.permute.xlu0 0
      %649 = vperm.xlu0 %648, %v595
      %v650 = vpop.permute.xlu0 %649
      %653 = vset.pattern.permute.xlu0 0
      %654 = vperm.xlu0 %653, %v596
      %v655 = vpop.permute.xlu0 %654
      %658 = vset.pattern.permute.xlu0 0
      %659 = vperm.xlu0 %658, %v597
      %v660 = vpop.permute.xlu0 %659
      %663 = vset.pattern.permute.xlu0 0
      %664 = vperm.xlu0 %663, %v598
      %v665 = vpop.permute.xlu0 %664
      %668 = vset.pattern.permute.xlu0 0
      %669 = vperm.xlu0 %668, %v599
      %v670 = vpop.permute.xlu0 %669
      %673 = vset.pattern.permute.xlu0 0
      %674 = vperm.xlu0 %673, %v600
      %v675 = vpop.permute.xlu0 %674
      %678 = vset.pattern.permute.xlu0 0
      %679 = vperm.xlu0 %678, %v601
      %v680 = vpop.permute.xlu0 %679
      %v698 = vunpack.c.l.b16 %v566
      %v699 = vunpack.c.l.b16 %v567
      %v700 = vunpack.c.l.b16 %v568
      %v701 = vunpack.c.l.b16 %v569
      %v702 = vunpack.c.l.b16 %v570
      %v703 = vunpack.c.l.b16 %v571
      %v704 = vunpack.c.l.b16 %v572
      %v705 = vunpack.c.l.b16 %v573
      %v706 = vunpack.c.l.b16 %v574
      %v707 = vunpack.c.l.b16 %v575
      %v708 = vunpack.c.l.b16 %v576
      %v709 = vunpack.c.l.b16 %v577
      %v710 = vunpack.c.l.b16 %v578
      %v711 = vunpack.c.l.b16 %v579
      %v712 = vunpack.c.l.b16 %v580
      %v713 = vunpack.c.l.b16 %v581
      %v714 = vpack.c.b16 %v699, %v698
      %v715 = vpack.c.b16 %v701, %v700
      %v716 = vpack.c.b16 %v703, %v702
      %v717 = vpack.c.b16 %v705, %v704
      %v718 = vpack.c.b16 %v707, %v706
      %v719 = vpack.c.b16 %v709, %v708
      %v720 = vpack.c.b16 %v711, %v710
      %v721 = vpack.c.b16 %v713, %v712
      %vm722 = vcmask 523264
      %v724 = vsel %vm722, %v714, 0
      %v727 = vsel %vm722, %v715, 0
      %v730 = vsel %vm722, %v716, 0
      %v733 = vsel %vm722, %v717, 0
      %v736 = vsel %vm722, %v718, 0
      %v739 = vsel %vm722, %v719, 0
      %v742 = vsel %vm722, %v720, 0
      %v745 = vsel %vm722, %v721, 0
      %747 = vmatprep.subr.bf16.mxu0 0
      %748 = vmatpush1.bf16.msra.mxu0 %v582
      %749 = vmatprep.subr.bf16.mxu0 0
      %750 = vmatpush1.bf16.msra.mxu0 %v583
      %751 = vmatprep.subr.bf16.mxu0 0
      %752 = vmatpush1.bf16.msra.mxu0 %v584
      %753 = vmatprep.subr.bf16.mxu0 0
      %754 = vmatpush1.bf16.msra.mxu0 %v585
      %755 = vmatprep.subr.bf16.mxu0 0
      %756 = vmatpush1.bf16.msra.mxu0 0
      %757 = vmatprep.subr.bf16.mxu0 0
      %758 = vmatpush1.bf16.msra.mxu0 0
      %759 = vmatprep.subr.bf16.mxu0 0
      %760 = vmatpush1.bf16.msra.mxu0 0
      %761 = vmatprep.subr.bf16.mxu0 0
      %762 = vmatpush1.bf16.msra.mxu0 0
      %763 = vmatprep.subr.bf16.mxu0 0
      %764 = vmatpush1.bf16.msra.mxu0 0
      %765 = vmatprep.subr.bf16.mxu0 0
      %766 = vmatpush1.bf16.msra.mxu0 0
      %767 = vmatprep.subr.bf16.mxu0 0
      %768 = vmatpush1.bf16.msra.mxu0 0
      %769 = vmatprep.subr.bf16.mxu0 0
      %770 = vmatpush1.bf16.msra.mxu0 0
      %771 = vmatprep.subr.bf16.mxu0 0
      %772 = vmatpush1.bf16.msra.mxu0 0
      %773 = vmatprep.subr.bf16.mxu0 0
      %774 = vmatpush1.bf16.msra.mxu0 0
      %775 = vmatprep.subr.bf16.mxu0 0
      %776 = vmatpush1.bf16.msra.mxu0 0
      %777 = vmatprep.subr.bf16.mxu0 0
      %778 = vmatpush1.bf16.msra.mxu0 0
      %779 = vmatprep.mubr.bf16.mxu0 0
      %780 = vmatmul.mubr.bf16.gmra.mrb[0].mxu0 %v724
      %v781 = vpop.f32.mrb[0].mxu0
      %v782 = vadd.f32 %v605, %v781
      %v783 = vpop.f32.mrb[0].mxu0
      %v784 = vpop.f32.mrb[0].mxu0
      %v785 = vadd.f32 %v610, %v784
      %v786 = vpop.f32.mrb[0].mxu0
      %787 = vmatprep.mubr.bf16.mxu0 0
      %788 = vmatmul.mubr.bf16.gmra.mrb[0].mxu0 %v727
      %v789 = vpop.f32.mrb[0].mxu0
      %v790 = vadd.f32 %v615, %v789
      %v791 = vpop.f32.mrb[0].mxu0
      %v792 = vpop.f32.mrb[0].mxu0
      %v793 = vadd.f32 %v620, %v792
      %v794 = vpop.f32.mrb[0].mxu0
      %795 = vmatprep.mubr.bf16.mxu0 0
      %796 = vmatmul.mubr.bf16.gmra.mrb[0].mxu0 %v730
      %v797 = vpop.f32.mrb[0].mxu0
      %v798 = vadd.f32 %v625, %v797
      %v799 = vpop.f32.mrb[0].mxu0
      %v800 = vpop.f32.mrb[0].mxu0
      %v801 = vadd.f32 %v630, %v800
      %v802 = vpop.f32.mrb[0].mxu0
      %803 = vmatprep.mubr.bf16.mxu0 0
      %804 = vmatmul.mubr.bf16.gmra.mrb[0].mxu0 %v733
      %v805 = vpop.f32.mrb[0].mxu0
      %v806 = vadd.f32 %v635, %v805
      %v807 = vpop.f32.mrb[0].mxu0
      %v808 = vpop.f32.mrb[0].mxu0
      %v809 = vadd.f32 %v640, %v808
      %v810 = vpop.f32.mrb[0].mxu0
      %811 = vmatprep.mubr.bf16.mxu0 0
      %812 = vmatmul.mubr.bf16.gmra.mrb[0].mxu0 %v736
      %v813 = vpop.f32.mrb[0].mxu0
      %v814 = vadd.f32 %v645, %v813
      %v815 = vpop.f32.mrb[0].mxu0
      %v816 = vpop.f32.mrb[0].mxu0
      %v817 = vadd.f32 %v650, %v816
      %v818 = vpop.f32.mrb[0].mxu0
      %819 = vmatprep.mubr.bf16.mxu0 0
      %820 = vmatmul.mubr.bf16.gmra.mrb[0].mxu0 %v739
      %v821 = vpop.f32.mrb[0].mxu0
      %v822 = vadd.f32 %v655, %v821
      %v823 = vpop.f32.mrb[0].mxu0
      %v824 = vpop.f32.mrb[0].mxu0
      %v825 = vadd.f32 %v660, %v824
      %v826 = vpop.f32.mrb[0].mxu0
      %827 = vmatprep.mubr.bf16.mxu0 0
      %828 = vmatmul.mubr.bf16.gmra.mrb[0].mxu0 %v742
      %v829 = vpop.f32.mrb[0].mxu0
      %v830 = vadd.f32 %v665, %v829
      %v831 = vpop.f32.mrb[0].mxu0
      %v832 = vpop.f32.mrb[0].mxu0
      %v833 = vadd.f32 %v670, %v832
      %v834 = vpop.f32.mrb[0].mxu0
      %835 = vmatprep.mubr.bf16.mxu0 0
      %836 = vmatmul.mubr.bf16.gmra.mrb[0].mxu0 %v745
      %v837 = vpop.f32.mrb[0].mxu0
      %v838 = vadd.f32 %v675, %v837
      %v839 = vpop.f32.mrb[0].mxu0
      %v840 = vpop.f32.mrb[0].mxu0
      %v841 = vadd.f32 %v680, %v840
      %v842 = vpop.f32.mrb[0].mxu0
      %843 = vdwg.mxu0
      %vm844 = vcmp.gt.f32.partialorder %v782, 0.0
      %vm845 = vcmp.gt.f32.partialorder %v785, 0.0
      %vm846 = vcmp.gt.f32.partialorder %v790, 0.0
      %vm847 = vcmp.gt.f32.partialorder %v793, 0.0
      %vm848 = vcmp.gt.f32.partialorder %v798, 0.0
      %vm849 = vcmp.gt.f32.partialorder %v801, 0.0
      %vm850 = vcmp.gt.f32.partialorder %v806, 0.0
      %vm851 = vcmp.gt.f32.partialorder %v809, 0.0
      %vm852 = vcmp.gt.f32.partialorder %v814, 0.0
      %vm853 = vcmp.gt.f32.partialorder %v817, 0.0
      %vm854 = vcmp.gt.f32.partialorder %v822, 0.0
      %vm855 = vcmp.gt.f32.partialorder %v825, 0.0
      %vm856 = vcmp.gt.f32.partialorder %v830, 0.0
      %vm857 = vcmp.gt.f32.partialorder %v833, 0.0
      %vm858 = vcmp.gt.f32.partialorder %v838, 0.0
      %vm859 = vcmp.gt.f32.partialorder %v841, 0.0
      %v860 = vmul.f32 %v782, 0.2
      %v861 = vmul.f32 %v785, 0.2
      %v862 = vmul.f32 %v790, 0.2
      %v863 = vmul.f32 %v793, 0.2
      %v864 = vmul.f32 %v798, 0.2
      %v865 = vmul.f32 %v801, 0.2
      %v866 = vmul.f32 %v806, 0.2
      %v867 = vmul.f32 %v809, 0.2
      %v868 = vmul.f32 %v814, 0.2
      %v869 = vmul.f32 %v817, 0.2
      %v870 = vmul.f32 %v822, 0.2
      %v871 = vmul.f32 %v825, 0.2
      %v872 = vmul.f32 %v830, 0.2
      %v873 = vmul.f32 %v833, 0.2
      %v874 = vmul.f32 %v838, 0.2
      %v875 = vmul.f32 %v841, 0.2
      %v876 = vsel %vm844, %v782, %v860
      %v877 = vsel %vm845, %v785, %v861
      %v878 = vsel %vm846, %v790, %v862
      %v879 = vsel %vm847, %v793, %v863
      %v880 = vsel %vm848, %v798, %v864
      %v881 = vsel %vm849, %v801, %v865
      %v882 = vsel %vm850, %v806, %v866
      %v883 = vsel %vm851, %v809, %v867
      %v884 = vsel %vm852, %v814, %v868
      %v885 = vsel %vm853, %v817, %v869
      %v886 = vsel %vm854, %v822, %v870
      %v887 = vsel %vm855, %v825, %v871
      %v888 = vsel %vm856, %v830, %v872
      %v889 = vsel %vm857, %v833, %v873
      %v890 = vsel %vm858, %v838, %v874
      %v891 = vsel %vm859, %v841, %v875
      %s892 = scalar_lea.vmem %s336, 8
      %v893 = vld [vmem:[%s892] sm:$0x3f]
      %v895 = vsel %vm433, %v893, 0
      %897 = vmatprep.subr.mxu0 0.0
      %898 = vmatpush1.msra.mxu0 %v895
      %899 = vmatprep.subr.mxu0 0.0
      %900 = vmatpush1.msra.mxu0 0.0
      %901 = vmatprep.subr.mxu0 0.0
      %902 = vmatpush1.msra.mxu0 0.0
      %903 = vmatprep.subr.mxu0 0.0
      %904 = vmatpush1.msra.mxu0 0.0
      %905 = vmatprep.subr.mxu0 0.0
      %906 = vmatpush1.msra.mxu0 0.0
      %907 = vmatprep.subr.mxu0 0.0
      %908 = vmatpush1.msra.mxu0 0.0
      %909 = vmatprep.subr.mxu0 0.0
      %910 = vmatpush1.msra.mxu0 0.0
      %911 = vmatprep.subr.mxu0 0.0
      %912 = vmatpush1.msra.mxu0 0.0
      %913 = vmatprep.subr.mxu0 0.0
      %914 = vmatpush1.msra.mxu0 0.0
      %915 = vmatprep.subr.mxu0 0.0
      %916 = vmatpush1.msra.mxu0 0.0
      %917 = vmatprep.subr.mxu0 0.0
      %918 = vmatpush1.msra.mxu0 0.0
      %919 = vmatprep.subr.mxu0 0.0
      %920 = vmatpush1.msra.mxu0 0.0
      %921 = vmatprep.subr.mxu0 0.0
      %922 = vmatpush1.msra.mxu0 0.0
      %923 = vmatprep.subr.mxu0 0.0
      %924 = vmatpush1.msra.mxu0 0.0
      %925 = vmatprep.subr.mxu0 0.0
      %926 = vmatpush1.msra.mxu0 0.0
      %927 = vmatprep.subr.mxu0 0.0
      %928 = vmatpush1.msra.mxu0 0.0
      %929 = vmatprep.subr.mxu0 0.0
      %930 = vmatpush1.msra.mxu0 0.0
      %931 = vmatprep.subr.mxu0 0.0
      %932 = vmatpush1.msra.mxu0 0.0
      %933 = vmatprep.subr.mxu0 0.0
      %934 = vmatpush1.msra.mxu0 0.0
      %935 = vmatprep.subr.mxu0 0.0
      %936 = vmatpush1.msra.mxu0 0.0
      %937 = vmatprep.subr.mxu0 0.0
      %938 = vmatpush1.msra.mxu0 0.0
      %939 = vmatprep.subr.mxu0 0.0
      %940 = vmatpush1.msra.mxu0 0.0
      %941 = vmatprep.subr.mxu0 0.0
      %942 = vmatpush1.msra.mxu0 0.0
      %943 = vmatprep.subr.mxu0 0.0
      %944 = vmatpush1.msra.mxu0 0.0
      %945 = vmatprep.subr.mxu0 0.0
      %946 = vmatpush1.msra.mxu0 0.0
      %947 = vmatprep.subr.mxu0 0.0
      %948 = vmatpush1.msra.mxu0 0.0
      %949 = vmatprep.subr.mxu0 0.0
      %950 = vmatpush1.msra.mxu0 0.0
      %951 = vmatprep.subr.mxu0 0.0
      %952 = vmatpush1.msra.mxu0 0.0
      %953 = vmatprep.subr.mxu0 0.0
      %954 = vmatpush1.msra.mxu0 0.0
      %955 = vmatprep.subr.mxu0 0.0
      %956 = vmatpush1.msra.mxu0 0.0
      %957 = vmatprep.subr.mxu0 0.0
      %958 = vmatpush1.msra.mxu0 0.0
      %959 = vmatprep.subr.mxu0 0.0
      %960 = vmatpush1.msra.mxu0 0.0
      %961 = vmatprep.mubr.f32.mxu0 0.0
      %962 = vmatmul.mubr.f32.gmra.mrb[0].mxu0 %v410
      %v963 = vpop.f32.mrb[0].mxu0
      %v964 = vadd.f32 %v371, %v963
      %v965 = vpop.f32.mrb[0].mxu0
      %966 = vmatprep.mubr.f32.mxu0 0.0
      %967 = vmatmul.mubr.f32.gmra.mrb[0].mxu0 %v413
      %v968 = vpop.f32.mrb[0].mxu0
      %v969 = vadd.f32 %v376, %v968
      %v970 = vpop.f32.mrb[0].mxu0
      %971 = vmatprep.mubr.f32.mxu0 0.0
      %972 = vmatmul.mubr.f32.gmra.mrb[0].mxu0 %v416
      %v973 = vpop.f32.mrb[0].mxu0
      %v974 = vadd.f32 %v381, %v973
      %v975 = vpop.f32.mrb[0].mxu0
      %976 = vmatprep.mubr.f32.mxu0 0.0
      %977 = vmatmul.mubr.f32.gmra.mrb[0].mxu0 %v419
      %v978 = vpop.f32.mrb[0].mxu0
      %v979 = vadd.f32 %v386, %v978
      %v980 = vpop.f32.mrb[0].mxu0
      %981 = vmatprep.mubr.f32.mxu0 0.0
      %982 = vmatmul.mubr.f32.gmra.mrb[0].mxu0 %v422
      %v983 = vpop.f32.mrb[0].mxu0
      %v984 = vadd.f32 %v391, %v983
      %v985 = vpop.f32.mrb[0].mxu0
      %986 = vmatprep.mubr.f32.mxu0 0.0
      %987 = vmatmul.mubr.f32.gmra.mrb[0].mxu0 %v425
      %v988 = vpop.f32.mrb[0].mxu0
      %v989 = vadd.f32 %v396, %v988
      %v990 = vpop.f32.mrb[0].mxu0
      %991 = vmatprep.mubr.f32.mxu0 0.0
      %992 = vmatmul.mubr.f32.gmra.mrb[0].mxu0 %v428
      %v993 = vpop.f32.mrb[0].mxu0
      %v994 = vadd.f32 %v401, %v993
      %v995 = vpop.f32.mrb[0].mxu0
      %996 = vmatprep.mubr.f32.mxu0 0.0
      %997 = vmatmul.mubr.f32.gmra.mrb[0].mxu0 %v431
      %v998 = vpop.f32.mrb[0].mxu0
      %v999 = vadd.f32 %v406, %v998
      %v1000 = vpop.f32.mrb[0].mxu0
      %1001 = vdwg.mxu0
      %vm1002 = vcmp.gt.f32.partialorder %v964, 0.0
      %vm1003 = vcmp.gt.f32.partialorder %v969, 0.0
      %vm1004 = vcmp.gt.f32.partialorder %v974, 0.0
      %vm1005 = vcmp.gt.f32.partialorder %v979, 0.0
      %vm1006 = vcmp.gt.f32.partialorder %v984, 0.0
      %vm1007 = vcmp.gt.f32.partialorder %v989, 0.0
      %vm1008 = vcmp.gt.f32.partialorder %v994, 0.0
      %vm1009 = vcmp.gt.f32.partialorder %v999, 0.0
      %v1010 = vmul.f32 %v964, 0.2
      %v1011 = vmul.f32 %v969, 0.2
      %v1012 = vmul.f32 %v974, 0.2
      %v1013 = vmul.f32 %v979, 0.2
      %v1014 = vmul.f32 %v984, 0.2
      %v1015 = vmul.f32 %v989, 0.2
      %v1016 = vmul.f32 %v994, 0.2
      %v1017 = vmul.f32 %v999, 0.2
      %v1018 = vsel %vm1002, %v964, %v1010
      %v1019 = vsel %vm1003, %v969, %v1011
      %v1020 = vsel %vm1004, %v974, %v1012
      %v1021 = vsel %vm1005, %v979, %v1013
      %v1022 = vsel %vm1006, %v984, %v1014
      %v1023 = vsel %vm1007, %v989, %v1015
      %v1024 = vsel %vm1008, %v994, %v1016
      %v1025 = vsel %vm1009, %v999, %v1017
      %v1026 = vpack.c.bf16 %v1019, %v1018
      %v1027 = vpack.c.bf16 %v1021, %v1020
      %v1028 = vpack.c.bf16 %v1023, %v1022
      %v1029 = vpack.c.bf16 %v1025, %v1024
      %1030 = vmatprep.subr.bf16.mxu0 0
      %1031 = vmatpush1.bf16.msra.mxu0 %v1026
      %1032 = vmatprep.subr.bf16.mxu0 0
      %1033 = vmatpush1.bf16.msra.mxu0 %v1027
      %1034 = vmatprep.subr.bf16.mxu0 0
      %1035 = vmatpush1.bf16.msra.mxu0 %v1028
      %1036 = vmatprep.subr.bf16.mxu0 0
      %1037 = vmatpush1.bf16.msra.mxu0 %v1029
      %1038 = vmatprep.subr.bf16.mxu0 0
      %1039 = vmatpush1.bf16.msra.mxu0 0
      %1040 = vmatprep.subr.bf16.mxu0 0
      %1041 = vmatpush1.bf16.msra.mxu0 0
      %1042 = vmatprep.subr.bf16.mxu0 0
      %1043 = vmatpush1.bf16.msra.mxu0 0
      %1044 = vmatprep.subr.bf16.mxu0 0
      %1045 = vmatpush1.bf16.msra.mxu0 0
      %1046 = vmatprep.subr.bf16.mxu0 0
      %1047 = vmatpush1.bf16.msra.mxu0 0
      %1048 = vmatprep.subr.bf16.mxu0 0
      %1049 = vmatpush1.bf16.msra.mxu0 0
      %1050 = vmatprep.subr.bf16.mxu0 0
      %1051 = vmatpush1.bf16.msra.mxu0 0
      %1052 = vmatprep.subr.bf16.mxu0 0
      %1053 = vmatpush1.bf16.msra.mxu0 0
      %1054 = vmatprep.subr.bf16.mxu0 0
      %1055 = vmatpush1.bf16.msra.mxu0 0
      %1056 = vmatprep.subr.bf16.mxu0 0
      %1057 = vmatpush1.bf16.msra.mxu0 0
      %1058 = vmatprep.subr.bf16.mxu0 0
      %1059 = vmatpush1.bf16.msra.mxu0 0
      %1060 = vmatprep.subr.bf16.mxu0 0
      %1061 = vmatpush1.bf16.msra.mxu0 0
      %1062 = vmatprep.mubr.bf16.mxu0 0
      %1063 = vmatmul.mubr.bf16.gmra.mrb[0].mxu0 %v724
      %v1064 = vpop.f32.mrb[0].mxu0
      %v1065 = vadd.f32 %v605, %v1064
      %v1066 = vpop.f32.mrb[0].mxu0
      %v1067 = vpop.f32.mrb[0].mxu0
      %v1068 = vadd.f32 %v610, %v1067
      %v1069 = vpop.f32.mrb[0].mxu0
      %1070 = vmatprep.mubr.bf16.mxu0 0
      %1071 = vmatmul.mubr.bf16.gmra.mrb[0].mxu0 %v727
      %v1072 = vpop.f32.mrb[0].mxu0
      %v1073 = vadd.f32 %v615, %v1072
      %v1074 = vpop.f32.mrb[0].mxu0
      %v1075 = vpop.f32.mrb[0].mxu0
      %v1076 = vadd.f32 %v620, %v1075
      %v1077 = vpop.f32.mrb[0].mxu0
      %1078 = vmatprep.mubr.bf16.mxu0 0
      %1079 = vmatmul.mubr.bf16.gmra.mrb[0].mxu0 %v730
      %v1080 = vpop.f32.mrb[0].mxu0
      %v1081 = vadd.f32 %v625, %v1080
      %v1082 = vpop.f32.mrb[0].mxu0
      %v1083 = vpop.f32.mrb[0].mxu0
      %v1084 = vadd.f32 %v630, %v1083
      %v1085 = vpop.f32.mrb[0].mxu0
      %1086 = vmatprep.mubr.bf16.mxu0 0
      %1087 = vmatmul.mubr.bf16.gmra.mrb[0].mxu0 %v733
      %v1088 = vpop.f32.mrb[0].mxu0
      %v1089 = vadd.f32 %v635, %v1088
      %v1090 = vpop.f32.mrb[0].mxu0
      %v1091 = vpop.f32.mrb[0].mxu0
      %v1092 = vadd.f32 %v640, %v1091
      %v1093 = vpop.f32.mrb[0].mxu0
      %1094 = vmatprep.mubr.bf16.mxu0 0
      %1095 = vmatmul.mubr.bf16.gmra.mrb[0].mxu0 %v736
      %v1096 = vpop.f32.mrb[0].mxu0
      %v1097 = vadd.f32 %v645, %v1096
      %v1098 = vpop.f32.mrb[0].mxu0
      %v1099 = vpop.f32.mrb[0].mxu0
      %v1100 = vadd.f32 %v650, %v1099
      %v1101 = vpop.f32.mrb[0].mxu0
      %1102 = vmatprep.mubr.bf16.mxu0 0
      %1103 = vmatmul.mubr.bf16.gmra.mrb[0].mxu0 %v739
      %v1104 = vpop.f32.mrb[0].mxu0
      %v1105 = vadd.f32 %v655, %v1104
      %v1106 = vpop.f32.mrb[0].mxu0
      %v1107 = vpop.f32.mrb[0].mxu0
      %v1108 = vadd.f32 %v660, %v1107
      %v1109 = vpop.f32.mrb[0].mxu0
      %1110 = vmatprep.mubr.bf16.mxu0 0
      %1111 = vmatmul.mubr.bf16.gmra.mrb[0].mxu0 %v742
      %v1112 = vpop.f32.mrb[0].mxu0
      %v1113 = vadd.f32 %v665, %v1112
      %v1114 = vpop.f32.mrb[0].mxu0
      %v1115 = vpop.f32.mrb[0].mxu0
      %v1116 = vadd.f32 %v670, %v1115
      %v1117 = vpop.f32.mrb[0].mxu0
      %1118 = vmatprep.mubr.bf16.mxu0 0
      %1119 = vmatmul.mubr.bf16.gmra.mrb[0].mxu0 %v745
      %v1120 = vpop.f32.mrb[0].mxu0
      %v1121 = vadd.f32 %v675, %v1120
      %v1122 = vpop.f32.mrb[0].mxu0
      %v1123 = vpop.f32.mrb[0].mxu0
      %v1124 = vadd.f32 %v680, %v1123
      %v1125 = vpop.f32.mrb[0].mxu0
      %1126 = vdwg.mxu0
      %vm1127 = vcmp.gt.f32.partialorder %v1065, 0.0
      %vm1128 = vcmp.gt.f32.partialorder %v1068, 0.0
      %vm1129 = vcmp.gt.f32.partialorder %v1073, 0.0
      %vm1130 = vcmp.gt.f32.partialorder %v1076, 0.0
      %vm1131 = vcmp.gt.f32.partialorder %v1081, 0.0
      %vm1132 = vcmp.gt.f32.partialorder %v1084, 0.0
      %vm1133 = vcmp.gt.f32.partialorder %v1089, 0.0
      %vm1134 = vcmp.gt.f32.partialorder %v1092, 0.0
      %vm1135 = vcmp.gt.f32.partialorder %v1097, 0.0
      %vm1136 = vcmp.gt.f32.partialorder %v1100, 0.0
      %vm1137 = vcmp.gt.f32.partialorder %v1105, 0.0
      %vm1138 = vcmp.gt.f32.partialorder %v1108, 0.0
      %vm1139 = vcmp.gt.f32.partialorder %v1113, 0.0
      %vm1140 = vcmp.gt.f32.partialorder %v1116, 0.0
      %vm1141 = vcmp.gt.f32.partialorder %v1121, 0.0
      %vm1142 = vcmp.gt.f32.partialorder %v1124, 0.0
      %v1143 = vmul.f32 %v1065, 0.2
      %v1144 = vmul.f32 %v1068, 0.2
      %v1145 = vmul.f32 %v1073, 0.2
      %v1146 = vmul.f32 %v1076, 0.2
      %v1147 = vmul.f32 %v1081, 0.2
      %v1148 = vmul.f32 %v1084, 0.2
      %v1149 = vmul.f32 %v1089, 0.2
      %v1150 = vmul.f32 %v1092, 0.2
      %v1151 = vmul.f32 %v1097, 0.2
      %v1152 = vmul.f32 %v1100, 0.2
      %v1153 = vmul.f32 %v1105, 0.2
      %v1154 = vmul.f32 %v1108, 0.2
      %v1155 = vmul.f32 %v1113, 0.2
      %v1156 = vmul.f32 %v1116, 0.2
      %v1157 = vmul.f32 %v1121, 0.2
      %v1158 = vmul.f32 %v1124, 0.2
      %v1159 = vsel %vm1127, %v1065, %v1143
      %v1160 = vsel %vm1128, %v1068, %v1144
      %v1161 = vsel %vm1129, %v1073, %v1145
      %v1162 = vsel %vm1130, %v1076, %v1146
      %v1163 = vsel %vm1131, %v1081, %v1147
      %v1164 = vsel %vm1132, %v1084, %v1148
      %v1165 = vsel %vm1133, %v1089, %v1149
      %v1166 = vsel %vm1134, %v1092, %v1150
      %v1167 = vsel %vm1135, %v1097, %v1151
      %v1168 = vsel %vm1136, %v1100, %v1152
      %v1169 = vsel %vm1137, %v1105, %v1153
      %v1170 = vsel %vm1138, %v1108, %v1154
      %v1171 = vsel %vm1139, %v1113, %v1155
      %v1172 = vsel %vm1140, %v1116, %v1156
      %v1173 = vsel %vm1141, %v1121, %v1157
      %v1174 = vsel %vm1142, %v1124, %v1158
      %v1175 = vmax.f32 %v876, %v1159
      %v1176 = vmax.f32 %v877, %v1160
      %v1177 = vmax.f32 %v878, %v1161
      %v1178 = vmax.f32 %v879, %v1162
      %v1179 = vmax.f32 %v880, %v1163
      %v1180 = vmax.f32 %v881, %v1164
      %v1181 = vmax.f32 %v882, %v1165
      %v1182 = vmax.f32 %v883, %v1166
      %v1183 = vmax.f32 %v884, %v1167
      %v1184 = vmax.f32 %v885, %v1168
      %v1185 = vmax.f32 %v886, %v1169
      %v1186 = vmax.f32 %v887, %v1170
      %v1187 = vmax.f32 %v888, %v1171
      %v1188 = vmax.f32 %v889, %v1172
      %v1189 = vmax.f32 %v890, %v1173
      %v1190 = vmax.f32 %v891, %v1174
      %s1191 = scalar_lea.vmem %s336, 16
      %v1192 = vld [vmem:[%s1191] sm:$0x3f]
      %v1194 = vsel %vm433, %v1192, 0
      %1196 = vmatprep.subr.mxu0 0.0
      %1197 = vmatpush1.msra.mxu0 %v1194
      %1198 = vmatprep.subr.mxu0 0.0
      %1199 = vmatpush1.msra.mxu0 0.0
      %1200 = vmatprep.subr.mxu0 0.0
      %1201 = vmatpush1.msra.mxu0 0.0
      %1202 = vmatprep.subr.mxu0 0.0
      %1203 = vmatpush1.msra.mxu0 0.0
      %1204 = vmatprep.subr.mxu0 0.0
      %1205 = vmatpush1.msra.mxu0 0.0
      %1206 = vmatprep.subr.mxu0 0.0
      %1207 = vmatpush1.msra.mxu0 0.0
      %1208 = vmatprep.subr.mxu0 0.0
      %1209 = vmatpush1.msra.mxu0 0.0
      %1210 = vmatprep.subr.mxu0 0.0
      %1211 = vmatpush1.msra.mxu0 0.0
      %1212 = vmatprep.subr.mxu0 0.0
      %1213 = vmatpush1.msra.mxu0 0.0
      %1214 = vmatprep.subr.mxu0 0.0
      %1215 = vmatpush1.msra.mxu0 0.0
      %1216 = vmatprep.subr.mxu0 0.0
      %1217 = vmatpush1.msra.mxu0 0.0
      %1218 = vmatprep.subr.mxu0 0.0
      %1219 = vmatpush1.msra.mxu0 0.0
      %1220 = vmatprep.subr.mxu0 0.0
      %1221 = vmatpush1.msra.mxu0 0.0
      %1222 = vmatprep.subr.mxu0 0.0
      %1223 = vmatpush1.msra.mxu0 0.0
      %1224 = vmatprep.subr.mxu0 0.0
      %1225 = vmatpush1.msra.mxu0 0.0
      %1226 = vmatprep.subr.mxu0 0.0
      %1227 = vmatpush1.msra.mxu0 0.0
      %1228 = vmatprep.subr.mxu0 0.0
      %1229 = vmatpush1.msra.mxu0 0.0
      %1230 = vmatprep.subr.mxu0 0.0
      %1231 = vmatpush1.msra.mxu0 0.0
      %1232 = vmatprep.subr.mxu0 0.0
      %1233 = vmatpush1.msra.mxu0 0.0
      %1234 = vmatprep.subr.mxu0 0.0
      %1235 = vmatpush1.msra.mxu0 0.0
      %1236 = vmatprep.subr.mxu0 0.0
      %1237 = vmatpush1.msra.mxu0 0.0
      %1238 = vmatprep.subr.mxu0 0.0
      %1239 = vmatpush1.msra.mxu0 0.0
      %1240 = vmatprep.subr.mxu0 0.0
      %1241 = vmatpush1.msra.mxu0 0.0
      %1242 = vmatprep.subr.mxu0 0.0
      %1243 = vmatpush1.msra.mxu0 0.0
      %1244 = vmatprep.subr.mxu0 0.0
      %1245 = vmatpush1.msra.mxu0 0.0
      %1246 = vmatprep.subr.mxu0 0.0
      %1247 = vmatpush1.msra.mxu0 0.0
      %1248 = vmatprep.subr.mxu0 0.0
      %1249 = vmatpush1.msra.mxu0 0.0
      %1250 = vmatprep.subr.mxu0 0.0
      %1251 = vmatpush1.msra.mxu0 0.0
      %1252 = vmatprep.subr.mxu0 0.0
      %1253 = vmatpush1.msra.mxu0 0.0
      %1254 = vmatprep.subr.mxu0 0.0
      %1255 = vmatpush1.msra.mxu0 0.0
      %1256 = vmatprep.subr.mxu0 0.0
      %1257 = vmatpush1.msra.mxu0 0.0
      %1258 = vmatprep.subr.mxu0 0.0
      %1259 = vmatpush1.msra.mxu0 0.0
      %1260 = vmatprep.mubr.f32.mxu0 0.0
      %1261 = vmatmul.mubr.f32.gmra.mrb[0].mxu0 %v410
      %v1262 = vpop.f32.mrb[0].mxu0
      %v1263 = vadd.f32 %v371, %v1262
      %v1264 = vpop.f32.mrb[0].mxu0
      %1265 = vmatprep.mubr.f32.mxu0 0.0
      %1266 = vmatmul.mubr.f32.gmra.mrb[0].mxu0 %v413
      %v1267 = vpop.f32.mrb[0].mxu0
      %v1268 = vadd.f32 %v376, %v1267
      %v1269 = vpop.f32.mrb[0].mxu0
      %1270 = vmatprep.mubr.f32.mxu0 0.0
      %1271 = vmatmul.mubr.f32.gmra.mrb[0].mxu0 %v416
      %v1272 = vpop.f32.mrb[0].mxu0
      %v1273 = vadd.f32 %v381, %v1272
      %v1274 = vpop.f32.mrb[0].mxu0
      %1275 = vmatprep.mubr.f32.mxu0 0.0
      %1276 = vmatmul.mubr.f32.gmra.mrb[0].mxu0 %v419
      %v1277 = vpop.f32.mrb[0].mxu0
      %v1278 = vadd.f32 %v386, %v1277
      %v1279 = vpop.f32.mrb[0].mxu0
      %1280 = vmatprep.mubr.f32.mxu0 0.0
      %1281 = vmatmul.mubr.f32.gmra.mrb[0].mxu0 %v422
      %v1282 = vpop.f32.mrb[0].mxu0
      %v1283 = vadd.f32 %v391, %v1282
      %v1284 = vpop.f32.mrb[0].mxu0
      %1285 = vmatprep.mubr.f32.mxu0 0.0
      %1286 = vmatmul.mubr.f32.gmra.mrb[0].mxu0 %v425
      %v1287 = vpop.f32.mrb[0].mxu0
      %v1288 = vadd.f32 %v396, %v1287
      %v1289 = vpop.f32.mrb[0].mxu0
      %1290 = vmatprep.mubr.f32.mxu0 0.0
      %1291 = vmatmul.mubr.f32.gmra.mrb[0].mxu0 %v428
      %v1292 = vpop.f32.mrb[0].mxu0
      %v1293 = vadd.f32 %v401, %v1292
      %v1294 = vpop.f32.mrb[0].mxu0
      %1295 = vmatprep.mubr.f32.mxu0 0.0
      %1296 = vmatmul.mubr.f32.gmra.mrb[0].mxu0 %v431
      %v1297 = vpop.f32.mrb[0].mxu0
      %v1298 = vadd.f32 %v406, %v1297
      %v1299 = vpop.f32.mrb[0].mxu0
      %1300 = vdwg.mxu0
      %vm1301 = vcmp.gt.f32.partialorder %v1263, 0.0
      %vm1302 = vcmp.gt.f32.partialorder %v1268, 0.0
      %vm1303 = vcmp.gt.f32.partialorder %v1273, 0.0
      %vm1304 = vcmp.gt.f32.partialorder %v1278, 0.0
      %vm1305 = vcmp.gt.f32.partialorder %v1283, 0.0
      %vm1306 = vcmp.gt.f32.partialorder %v1288, 0.0
      %vm1307 = vcmp.gt.f32.partialorder %v1293, 0.0
      %vm1308 = vcmp.gt.f32.partialorder %v1298, 0.0
      %v1309 = vmul.f32 %v1263, 0.2
      %v1310 = vmul.f32 %v1268, 0.2
      %v1311 = vmul.f32 %v1273, 0.2
      %v1312 = vmul.f32 %v1278, 0.2
      %v1313 = vmul.f32 %v1283, 0.2
      %v1314 = vmul.f32 %v1288, 0.2
      %v1315 = vmul.f32 %v1293, 0.2
      %v1316 = vmul.f32 %v1298, 0.2
      %v1317 = vsel %vm1301, %v1263, %v1309
      %v1318 = vsel %vm1302, %v1268, %v1310
      %v1319 = vsel %vm1303, %v1273, %v1311
      %v1320 = vsel %vm1304, %v1278, %v1312
      %v1321 = vsel %vm1305, %v1283, %v1313
      %v1322 = vsel %vm1306, %v1288, %v1314
      %v1323 = vsel %vm1307, %v1293, %v1315
      %v1324 = vsel %vm1308, %v1298, %v1316
      %v1325 = vpack.c.bf16 %v1318, %v1317
      %v1326 = vpack.c.bf16 %v1320, %v1319
      %v1327 = vpack.c.bf16 %v1322, %v1321
      %v1328 = vpack.c.bf16 %v1324, %v1323
      %1329 = vmatprep.subr.bf16.mxu0 0
      %1330 = vmatpush1.bf16.msra.mxu0 %v1325
      %1331 = vmatprep.subr.bf16.mxu0 0
      %1332 = vmatpush1.bf16.msra.mxu0 %v1326
      %1333 = vmatprep.subr.bf16.mxu0 0
      %1334 = vmatpush1.bf16.msra.mxu0 %v1327
      %1335 = vmatprep.subr.bf16.mxu0 0
      %1336 = vmatpush1.bf16.msra.mxu0 %v1328
      %1337 = vmatprep.subr.bf16.mxu0 0
      %1338 = vmatpush1.bf16.msra.mxu0 0
      %1339 = vmatprep.subr.bf16.mxu0 0
      %1340 = vmatpush1.bf16.msra.mxu0 0
      %1341 = vmatprep.subr.bf16.mxu0 0
      %1342 = vmatpush1.bf16.msra.mxu0 0
      %1343 = vmatprep.subr.bf16.mxu0 0
      %1344 = vmatpush1.bf16.msra.mxu0 0
      %1345 = vmatprep.subr.bf16.mxu0 0
      %1346 = vmatpush1.bf16.msra.mxu0 0
      %1347 = vmatprep.subr.bf16.mxu0 0
      %1348 = vmatpush1.bf16.msra.mxu0 0
      %1349 = vmatprep.subr.bf16.mxu0 0
      %1350 = vmatpush1.bf16.msra.mxu0 0
      %1351 = vmatprep.subr.bf16.mxu0 0
      %1352 = vmatpush1.bf16.msra.mxu0 0
      %1353 = vmatprep.subr.bf16.mxu0 0
      %1354 = vmatpush1.bf16.msra.mxu0 0
      %1355 = vmatprep.subr.bf16.mxu0 0
      %1356 = vmatpush1.bf16.msra.mxu0 0
      %1357 = vmatprep.subr.bf16.mxu0 0
      %1358 = vmatpush1.bf16.msra.mxu0 0
      %1359 = vmatprep.subr.bf16.mxu0 0
      %1360 = vmatpush1.bf16.msra.mxu0 0
      %1361 = vmatprep.mubr.bf16.mxu0 0
      %1362 = vmatmul.mubr.bf16.gmra.mrb[0].mxu0 %v724
      %v1363 = vpop.f32.mrb[0].mxu0
      %v1364 = vadd.f32 %v605, %v1363
      %v1365 = vpop.f32.mrb[0].mxu0
      %v1366 = vpop.f32.mrb[0].mxu0
      %v1367 = vadd.f32 %v610, %v1366
      %v1368 = vpop.f32.mrb[0].mxu0
      %1369 = vmatprep.mubr.bf16.mxu0 0
      %1370 = vmatmul.mubr.bf16.gmra.mrb[0].mxu0 %v727
      %v1371 = vpop.f32.mrb[0].mxu0
      %v1372 = vadd.f32 %v615, %v1371
      %v1373 = vpop.f32.mrb[0].mxu0
      %v1374 = vpop.f32.mrb[0].mxu0
      %v1375 = vadd.f32 %v620, %v1374
      %v1376 = vpop.f32.mrb[0].mxu0
      %1377 = vmatprep.mubr.bf16.mxu0 0
      %1378 = vmatmul.mubr.bf16.gmra.mrb[0].mxu0 %v730
      %v1379 = vpop.f32.mrb[0].mxu0
      %v1380 = vadd.f32 %v625, %v1379
      %v1381 = vpop.f32.mrb[0].mxu0
      %v1382 = vpop.f32.mrb[0].mxu0
      %v1383 = vadd.f32 %v630, %v1382
      %v1384 = vpop.f32.mrb[0].mxu0
      %1385 = vmatprep.mubr.bf16.mxu0 0
      %1386 = vmatmul.mubr.bf16.gmra.mrb[0].mxu0 %v733
      %v1387 = vpop.f32.mrb[0].mxu0
      %v1388 = vadd.f32 %v635, %v1387
      %v1389 = vpop.f32.mrb[0].mxu0
      %v1390 = vpop.f32.mrb[0].mxu0
      %v1391 = vadd.f32 %v640, %v1390
      %v1392 = vpop.f32.mrb[0].mxu0
      %1393 = vmatprep.mubr.bf16.mxu0 0
      %1394 = vmatmul.mubr.bf16.gmra.mrb[0].mxu0 %v736
      %v1395 = vpop.f32.mrb[0].mxu0
      %v1396 = vadd.f32 %v645, %v1395
      %v1397 = vpop.f32.mrb[0].mxu0
      %v1398 = vpop.f32.mrb[0].mxu0
      %v1399 = vadd.f32 %v650, %v1398
      %v1400 = vpop.f32.mrb[0].mxu0
      %1401 = vmatprep.mubr.bf16.mxu0 0
      %1402 = vmatmul.mubr.bf16.gmra.mrb[0].mxu0 %v739
      %v1403 = vpop.f32.mrb[0].mxu0
      %v1404 = vadd.f32 %v655, %v1403
      %v1405 = vpop.f32.mrb[0].mxu0
      %v1406 = vpop.f32.mrb[0].mxu0
      %v1407 = vadd.f32 %v660, %v1406
      %v1408 = vpop.f32.mrb[0].mxu0
      %1409 = vmatprep.mubr.bf16.mxu0 0
      %1410 = vmatmul.mubr.bf16.gmra.mrb[0].mxu0 %v742
      %v1411 = vpop.f32.mrb[0].mxu0
      %v1412 = vadd.f32 %v665, %v1411
      %v1413 = vpop.f32.mrb[0].mxu0
      %v1414 = vpop.f32.mrb[0].mxu0
      %v1415 = vadd.f32 %v670, %v1414
      %v1416 = vpop.f32.mrb[0].mxu0
      %1417 = vmatprep.mubr.bf16.mxu0 0
      %1418 = vmatmul.mubr.bf16.gmra.mrb[0].mxu0 %v745
      %v1419 = vpop.f32.mrb[0].mxu0
      %v1420 = vadd.f32 %v675, %v1419
      %v1421 = vpop.f32.mrb[0].mxu0
      %v1422 = vpop.f32.mrb[0].mxu0
      %v1423 = vadd.f32 %v680, %v1422
      %v1424 = vpop.f32.mrb[0].mxu0
      %1425 = vdwg.mxu0
      %vm1426 = vcmp.gt.f32.partialorder %v1364, 0.0
      %vm1427 = vcmp.gt.f32.partialorder %v1367, 0.0
      %vm1428 = vcmp.gt.f32.partialorder %v1372, 0.0
      %vm1429 = vcmp.gt.f32.partialorder %v1375, 0.0
      %vm1430 = vcmp.gt.f32.partialorder %v1380, 0.0
      %vm1431 = vcmp.gt.f32.partialorder %v1383, 0.0
      %vm1432 = vcmp.gt.f32.partialorder %v1388, 0.0
      %vm1433 = vcmp.gt.f32.partialorder %v1391, 0.0
      %vm1434 = vcmp.gt.f32.partialorder %v1396, 0.0
      %vm1435 = vcmp.gt.f32.partialorder %v1399, 0.0
      %vm1436 = vcmp.gt.f32.partialorder %v1404, 0.0
      %vm1437 = vcmp.gt.f32.partialorder %v1407, 0.0
      %vm1438 = vcmp.gt.f32.partialorder %v1412, 0.0
      %vm1439 = vcmp.gt.f32.partialorder %v1415, 0.0
      %vm1440 = vcmp.gt.f32.partialorder %v1420, 0.0
      %vm1441 = vcmp.gt.f32.partialorder %v1423, 0.0
      %v1442 = vmul.f32 %v1364, 0.2
      %v1443 = vmul.f32 %v1367, 0.2
      %v1444 = vmul.f32 %v1372, 0.2
      %v1445 = vmul.f32 %v1375, 0.2
      %v1446 = vmul.f32 %v1380, 0.2
      %v1447 = vmul.f32 %v1383, 0.2
      %v1448 = vmul.f32 %v1388, 0.2
      %v1449 = vmul.f32 %v1391, 0.2
      %v1450 = vmul.f32 %v1396, 0.2
      %v1451 = vmul.f32 %v1399, 0.2
      %v1452 = vmul.f32 %v1404, 0.2
      %v1453 = vmul.f32 %v1407, 0.2
      %v1454 = vmul.f32 %v1412, 0.2
      %v1455 = vmul.f32 %v1415, 0.2
      %v1456 = vmul.f32 %v1420, 0.2
      %v1457 = vmul.f32 %v1423, 0.2
      %v1458 = vsel %vm1426, %v1364, %v1442
      %v1459 = vsel %vm1427, %v1367, %v1443
      %v1460 = vsel %vm1428, %v1372, %v1444
      %v1461 = vsel %vm1429, %v1375, %v1445
      %v1462 = vsel %vm1430, %v1380, %v1446
      %v1463 = vsel %vm1431, %v1383, %v1447
      %v1464 = vsel %vm1432, %v1388, %v1448
      %v1465 = vsel %vm1433, %v1391, %v1449
      %v1466 = vsel %vm1434, %v1396, %v1450
      %v1467 = vsel %vm1435, %v1399, %v1451
      %v1468 = vsel %vm1436, %v1404, %v1452
      %v1469 = vsel %vm1437, %v1407, %v1453
      %v1470 = vsel %vm1438, %v1412, %v1454
      %v1471 = vsel %vm1439, %v1415, %v1455
      %v1472 = vsel %vm1440, %v1420, %v1456
      %v1473 = vsel %vm1441, %v1423, %v1457
      %v1474 = vmax.f32 %v1175, %v1458
      %v1475 = vmax.f32 %v1176, %v1459
      %v1476 = vmax.f32 %v1177, %v1460
      %v1477 = vmax.f32 %v1178, %v1461
      %v1478 = vmax.f32 %v1179, %v1462
      %v1479 = vmax.f32 %v1180, %v1463
      %v1480 = vmax.f32 %v1181, %v1464
      %v1481 = vmax.f32 %v1182, %v1465
      %v1482 = vmax.f32 %v1183, %v1466
      %v1483 = vmax.f32 %v1184, %v1467
      %v1484 = vmax.f32 %v1185, %v1468
      %v1485 = vmax.f32 %v1186, %v1469
      %v1486 = vmax.f32 %v1187, %v1470
      %v1487 = vmax.f32 %v1188, %v1471
      %v1488 = vmax.f32 %v1189, %v1472
      %v1489 = vmax.f32 %v1190, %v1473
      %s1490 = scalar_lea.vmem %s336, 24
      %v1491 = vld [vmem:[%s1490] sm:$0x3f]
      %v1493 = vsel %vm433, %v1491, 0
      %1495 = vmatprep.subr.mxu0 0.0
      %1496 = vmatpush1.msra.mxu0 %v1493
      %1497 = vmatprep.subr.mxu0 0.0
      %1498 = vmatpush1.msra.mxu0 0.0
      %1499 = vmatprep.subr.mxu0 0.0
      %1500 = vmatpush1.msra.mxu0 0.0
      %1501 = vmatprep.subr.mxu0 0.0
      %1502 = vmatpush1.msra.mxu0 0.0
      %1503 = vmatprep.subr.mxu0 0.0
      %1504 = vmatpush1.msra.mxu0 0.0
      %1505 = vmatprep.subr.mxu0 0.0
      %1506 = vmatpush1.msra.mxu0 0.0
      %1507 = vmatprep.subr.mxu0 0.0
      %1508 = vmatpush1.msra.mxu0 0.0
      %1509 = vmatprep.subr.mxu0 0.0
      %1510 = vmatpush1.msra.mxu0 0.0
      %1511 = vmatprep.subr.mxu0 0.0
      %1512 = vmatpush1.msra.mxu0 0.0
      %1513 = vmatprep.subr.mxu0 0.0
      %1514 = vmatpush1.msra.mxu0 0.0
      %1515 = vmatprep.subr.mxu0 0.0
      %1516 = vmatpush1.msra.mxu0 0.0
      %1517 = vmatprep.subr.mxu0 0.0
      %1518 = vmatpush1.msra.mxu0 0.0
      %1519 = vmatprep.subr.mxu0 0.0
      %1520 = vmatpush1.msra.mxu0 0.0
      %1521 = vmatprep.subr.mxu0 0.0
      %1522 = vmatpush1.msra.mxu0 0.0
      %1523 = vmatprep.subr.mxu0 0.0
      %1524 = vmatpush1.msra.mxu0 0.0
      %1525 = vmatprep.subr.mxu0 0.0
      %1526 = vmatpush1.msra.mxu0 0.0
      %1527 = vmatprep.subr.mxu0 0.0
      %1528 = vmatpush1.msra.mxu0 0.0
      %1529 = vmatprep.subr.mxu0 0.0
      %1530 = vmatpush1.msra.mxu0 0.0
      %1531 = vmatprep.subr.mxu0 0.0
      %1532 = vmatpush1.msra.mxu0 0.0
      %1533 = vmatprep.subr.mxu0 0.0
      %1534 = vmatpush1.msra.mxu0 0.0
      %1535 = vmatprep.subr.mxu0 0.0
      %1536 = vmatpush1.msra.mxu0 0.0
      %1537 = vmatprep.subr.mxu0 0.0
      %1538 = vmatpush1.msra.mxu0 0.0
      %1539 = vmatprep.subr.mxu0 0.0
      %1540 = vmatpush1.msra.mxu0 0.0
      %1541 = vmatprep.subr.mxu0 0.0
      %1542 = vmatpush1.msra.mxu0 0.0
      %1543 = vmatprep.subr.mxu0 0.0
      %1544 = vmatpush1.msra.mxu0 0.0
      %1545 = vmatprep.subr.mxu0 0.0
      %1546 = vmatpush1.msra.mxu0 0.0
      %1547 = vmatprep.subr.mxu0 0.0
      %1548 = vmatpush1.msra.mxu0 0.0
      %1549 = vmatprep.subr.mxu0 0.0
      %1550 = vmatpush1.msra.mxu0 0.0
      %1551 = vmatprep.subr.mxu0 0.0
      %1552 = vmatpush1.msra.mxu0 0.0
      %1553 = vmatprep.subr.mxu0 0.0
      %1554 = vmatpush1.msra.mxu0 0.0
      %1555 = vmatprep.subr.mxu0 0.0
      %1556 = vmatpush1.msra.mxu0 0.0
      %1557 = vmatprep.subr.mxu0 0.0
      %1558 = vmatpush1.msra.mxu0 0.0
      %1559 = vmatprep.mubr.f32.mxu0 0.0
      %1560 = vmatmul.mubr.f32.gmra.mrb[0].mxu0 %v410
      %v1561 = vpop.f32.mrb[0].mxu0
      %v1562 = vadd.f32 %v371, %v1561
      %v1563 = vpop.f32.mrb[0].mxu0
      %1564 = vmatprep.mubr.f32.mxu0 0.0
      %1565 = vmatmul.mubr.f32.gmra.mrb[0].mxu0 %v413
      %v1566 = vpop.f32.mrb[0].mxu0
      %v1567 = vadd.f32 %v376, %v1566
      %v1568 = vpop.f32.mrb[0].mxu0
      %1569 = vmatprep.mubr.f32.mxu0 0.0
      %1570 = vmatmul.mubr.f32.gmra.mrb[0].mxu0 %v416
      %v1571 = vpop.f32.mrb[0].mxu0
      %v1572 = vadd.f32 %v381, %v1571
      %v1573 = vpop.f32.mrb[0].mxu0
      %1574 = vmatprep.mubr.f32.mxu0 0.0
      %1575 = vmatmul.mubr.f32.gmra.mrb[0].mxu0 %v419
      %v1576 = vpop.f32.mrb[0].mxu0
      %v1577 = vadd.f32 %v386, %v1576
      %v1578 = vpop.f32.mrb[0].mxu0
      %1579 = vmatprep.mubr.f32.mxu0 0.0
      %1580 = vmatmul.mubr.f32.gmra.mrb[0].mxu0 %v422
      %v1581 = vpop.f32.mrb[0].mxu0
      %v1582 = vadd.f32 %v391, %v1581
      %v1583 = vpop.f32.mrb[0].mxu0
      %1584 = vmatprep.mubr.f32.mxu0 0.0
      %1585 = vmatmul.mubr.f32.gmra.mrb[0].mxu0 %v425
      %v1586 = vpop.f32.mrb[0].mxu0
      %v1587 = vadd.f32 %v396, %v1586
      %v1588 = vpop.f32.mrb[0].mxu0
      %1589 = vmatprep.mubr.f32.mxu0 0.0
      %1590 = vmatmul.mubr.f32.gmra.mrb[0].mxu0 %v428
      %v1591 = vpop.f32.mrb[0].mxu0
      %v1592 = vadd.f32 %v401, %v1591
      %v1593 = vpop.f32.mrb[0].mxu0
      %1594 = vmatprep.mubr.f32.mxu0 0.0
      %1595 = vmatmul.mubr.f32.gmra.mrb[0].mxu0 %v431
      %v1596 = vpop.f32.mrb[0].mxu0
      %v1597 = vadd.f32 %v406, %v1596
      %v1598 = vpop.f32.mrb[0].mxu0
      %1599 = vdwg.mxu0
      %vm1600 = vcmp.gt.f32.partialorder %v1562, 0.0
      %vm1601 = vcmp.gt.f32.partialorder %v1567, 0.0
      %vm1602 = vcmp.gt.f32.partialorder %v1572, 0.0
      %vm1603 = vcmp.gt.f32.partialorder %v1577, 0.0
      %vm1604 = vcmp.gt.f32.partialorder %v1582, 0.0
      %vm1605 = vcmp.gt.f32.partialorder %v1587, 0.0
      %vm1606 = vcmp.gt.f32.partialorder %v1592, 0.0
      %vm1607 = vcmp.gt.f32.partialorder %v1597, 0.0
      %v1608 = vmul.f32 %v1562, 0.2
      %v1609 = vmul.f32 %v1567, 0.2
      %v1610 = vmul.f32 %v1572, 0.2
      %v1611 = vmul.f32 %v1577, 0.2
      %v1612 = vmul.f32 %v1582, 0.2
      %v1613 = vmul.f32 %v1587, 0.2
      %v1614 = vmul.f32 %v1592, 0.2
      %v1615 = vmul.f32 %v1597, 0.2
      %v1616 = vsel %vm1600, %v1562, %v1608
      %v1617 = vsel %vm1601, %v1567, %v1609
      %v1618 = vsel %vm1602, %v1572, %v1610
      %v1619 = vsel %vm1603, %v1577, %v1611
      %v1620 = vsel %vm1604, %v1582, %v1612
      %v1621 = vsel %vm1605, %v1587, %v1613
      %v1622 = vsel %vm1606, %v1592, %v1614
      %v1623 = vsel %vm1607, %v1597, %v1615
      %v1624 = vpack.c.bf16 %v1617, %v1616
      %v1625 = vpack.c.bf16 %v1619, %v1618
      %v1626 = vpack.c.bf16 %v1621, %v1620
      %v1627 = vpack.c.bf16 %v1623, %v1622
      %1628 = vmatprep.subr.bf16.mxu0 0
      %1629 = vmatpush1.bf16.msra.mxu0 %v1624
      %1630 = vmatprep.subr.bf16.mxu0 0
      %1631 = vmatpush1.bf16.msra.mxu0 %v1625
      %1632 = vmatprep.subr.bf16.mxu0 0
      %1633 = vmatpush1.bf16.msra.mxu0 %v1626
      %1634 = vmatprep.subr.bf16.mxu0 0
      %1635 = vmatpush1.bf16.msra.mxu0 %v1627
      %1636 = vmatprep.subr.bf16.mxu0 0
      %1637 = vmatpush1.bf16.msra.mxu0 0
      %1638 = vmatprep.subr.bf16.mxu0 0
      %1639 = vmatpush1.bf16.msra.mxu0 0
      %1640 = vmatprep.subr.bf16.mxu0 0
      %1641 = vmatpush1.bf16.msra.mxu0 0
      %1642 = vmatprep.subr.bf16.mxu0 0
      %1643 = vmatpush1.bf16.msra.mxu0 0
      %1644 = vmatprep.subr.bf16.mxu0 0
      %1645 = vmatpush1.bf16.msra.mxu0 0
      %1646 = vmatprep.subr.bf16.mxu0 0
      %1647 = vmatpush1.bf16.msra.mxu0 0
      %1648 = vmatprep.subr.bf16.mxu0 0
      %1649 = vmatpush1.bf16.msra.mxu0 0
      %1650 = vmatprep.subr.bf16.mxu0 0
      %1651 = vmatpush1.bf16.msra.mxu0 0
      %1652 = vmatprep.subr.bf16.mxu0 0
      %1653 = vmatpush1.bf16.msra.mxu0 0
      %1654 = vmatprep.subr.bf16.mxu0 0
      %1655 = vmatpush1.bf16.msra.mxu0 0
      %1656 = vmatprep.subr.bf16.mxu0 0
      %1657 = vmatpush1.bf16.msra.mxu0 0
      %1658 = vmatprep.subr.bf16.mxu0 0
      %1659 = vmatpush1.bf16.msra.mxu0 0
      %1660 = vmatprep.mubr.bf16.mxu0 0
      %1661 = vmatmul.mubr.bf16.gmra.mrb[0].mxu0 %v724
      %v1662 = vpop.f32.mrb[0].mxu0
      %v1663 = vadd.f32 %v605, %v1662
      %v1664 = vpop.f32.mrb[0].mxu0
      %v1665 = vpop.f32.mrb[0].mxu0
      %v1666 = vadd.f32 %v610, %v1665
      %v1667 = vpop.f32.mrb[0].mxu0
      %1668 = vmatprep.mubr.bf16.mxu0 0
      %1669 = vmatmul.mubr.bf16.gmra.mrb[0].mxu0 %v727
      %v1670 = vpop.f32.mrb[0].mxu0
      %v1671 = vadd.f32 %v615, %v1670
      %v1672 = vpop.f32.mrb[0].mxu0
      %v1673 = vpop.f32.mrb[0].mxu0
      %v1674 = vadd.f32 %v620, %v1673
      %v1675 = vpop.f32.mrb[0].mxu0
      %1676 = vmatprep.mubr.bf16.mxu0 0
      %1677 = vmatmul.mubr.bf16.gmra.mrb[0].mxu0 %v730
      %v1678 = vpop.f32.mrb[0].mxu0
      %v1679 = vadd.f32 %v625, %v1678
      %v1680 = vpop.f32.mrb[0].mxu0
      %v1681 = vpop.f32.mrb[0].mxu0
      %v1682 = vadd.f32 %v630, %v1681
      %v1683 = vpop.f32.mrb[0].mxu0
      %1684 = vmatprep.mubr.bf16.mxu0 0
      %1685 = vmatmul.mubr.bf16.gmra.mrb[0].mxu0 %v733
      %v1686 = vpop.f32.mrb[0].mxu0
      %v1687 = vadd.f32 %v635, %v1686
      %v1688 = vpop.f32.mrb[0].mxu0
      %v1689 = vpop.f32.mrb[0].mxu0
      %v1690 = vadd.f32 %v640, %v1689
      %v1691 = vpop.f32.mrb[0].mxu0
      %1692 = vmatprep.mubr.bf16.mxu0 0
      %1693 = vmatmul.mubr.bf16.gmra.mrb[0].mxu0 %v736
      %v1694 = vpop.f32.mrb[0].mxu0
      %v1695 = vadd.f32 %v645, %v1694
      %v1696 = vpop.f32.mrb[0].mxu0
      %v1697 = vpop.f32.mrb[0].mxu0
      %v1698 = vadd.f32 %v650, %v1697
      %v1699 = vpop.f32.mrb[0].mxu0
      %1700 = vmatprep.mubr.bf16.mxu0 0
      %1701 = vmatmul.mubr.bf16.gmra.mrb[0].mxu0 %v739
      %v1702 = vpop.f32.mrb[0].mxu0
      %v1703 = vadd.f32 %v655, %v1702
      %v1704 = vpop.f32.mrb[0].mxu0
      %v1705 = vpop.f32.mrb[0].mxu0
      %v1706 = vadd.f32 %v660, %v1705
      %v1707 = vpop.f32.mrb[0].mxu0
      %1708 = vmatprep.mubr.bf16.mxu0 0
      %1709 = vmatmul.mubr.bf16.gmra.mrb[0].mxu0 %v742
      %v1710 = vpop.f32.mrb[0].mxu0
      %v1711 = vadd.f32 %v665, %v1710
      %v1712 = vpop.f32.mrb[0].mxu0
      %v1713 = vpop.f32.mrb[0].mxu0
      %v1714 = vadd.f32 %v670, %v1713
      %v1715 = vpop.f32.mrb[0].mxu0
      %1716 = vmatprep.mubr.bf16.mxu0 0
      %1717 = vmatmul.mubr.bf16.gmra.mrb[0].mxu0 %v745
      %v1718 = vpop.f32.mrb[0].mxu0
      %v1719 = vadd.f32 %v675, %v1718
      %v1720 = vpop.f32.mrb[0].mxu0
      %v1721 = vpop.f32.mrb[0].mxu0
      %v1722 = vadd.f32 %v680, %v1721
      %v1723 = vpop.f32.mrb[0].mxu0
      %1724 = vdwg.mxu0
      %vm1725 = vcmp.gt.f32.partialorder %v1663, 0.0
      %vm1726 = vcmp.gt.f32.partialorder %v1666, 0.0
      %vm1727 = vcmp.gt.f32.partialorder %v1671, 0.0
      %vm1728 = vcmp.gt.f32.partialorder %v1674, 0.0
      %vm1729 = vcmp.gt.f32.partialorder %v1679, 0.0
      %vm1730 = vcmp.gt.f32.partialorder %v1682, 0.0
      %vm1731 = vcmp.gt.f32.partialorder %v1687, 0.0
      %vm1732 = vcmp.gt.f32.partialorder %v1690, 0.0
      %vm1733 = vcmp.gt.f32.partialorder %v1695, 0.0
      %vm1734 = vcmp.gt.f32.partialorder %v1698, 0.0
      %vm1735 = vcmp.gt.f32.partialorder %v1703, 0.0
      %vm1736 = vcmp.gt.f32.partialorder %v1706, 0.0
      %vm1737 = vcmp.gt.f32.partialorder %v1711, 0.0
      %vm1738 = vcmp.gt.f32.partialorder %v1714, 0.0
      %vm1739 = vcmp.gt.f32.partialorder %v1719, 0.0
      %vm1740 = vcmp.gt.f32.partialorder %v1722, 0.0
      %v1741 = vmul.f32 %v1663, 0.2
      %v1742 = vmul.f32 %v1666, 0.2
      %v1743 = vmul.f32 %v1671, 0.2
      %v1744 = vmul.f32 %v1674, 0.2
      %v1745 = vmul.f32 %v1679, 0.2
      %v1746 = vmul.f32 %v1682, 0.2
      %v1747 = vmul.f32 %v1687, 0.2
      %v1748 = vmul.f32 %v1690, 0.2
      %v1749 = vmul.f32 %v1695, 0.2
      %v1750 = vmul.f32 %v1698, 0.2
      %v1751 = vmul.f32 %v1703, 0.2
      %v1752 = vmul.f32 %v1706, 0.2
      %v1753 = vmul.f32 %v1711, 0.2
      %v1754 = vmul.f32 %v1714, 0.2
      %v1755 = vmul.f32 %v1719, 0.2
      %v1756 = vmul.f32 %v1722, 0.2
      %v1757 = vsel %vm1725, %v1663, %v1741
      %v1758 = vsel %vm1726, %v1666, %v1742
      %v1759 = vsel %vm1727, %v1671, %v1743
      %v1760 = vsel %vm1728, %v1674, %v1744
      %v1761 = vsel %vm1729, %v1679, %v1745
      %v1762 = vsel %vm1730, %v1682, %v1746
      %v1763 = vsel %vm1731, %v1687, %v1747
      %v1764 = vsel %vm1732, %v1690, %v1748
      %v1765 = vsel %vm1733, %v1695, %v1749
      %v1766 = vsel %vm1734, %v1698, %v1750
      %v1767 = vsel %vm1735, %v1703, %v1751
      %v1768 = vsel %vm1736, %v1706, %v1752
      %v1769 = vsel %vm1737, %v1711, %v1753
      %v1770 = vsel %vm1738, %v1714, %v1754
      %v1771 = vsel %vm1739, %v1719, %v1755
      %v1772 = vsel %vm1740, %v1722, %v1756
      %v1773 = vmax.f32 %v1474, %v1757
      %v1774 = vmax.f32 %v1475, %v1758
      %v1775 = vmax.f32 %v1476, %v1759
      %v1776 = vmax.f32 %v1477, %v1760
      %v1777 = vmax.f32 %v1478, %v1761
      %v1778 = vmax.f32 %v1479, %v1762
      %v1779 = vmax.f32 %v1480, %v1763
      %v1780 = vmax.f32 %v1481, %v1764
      %v1781 = vmax.f32 %v1482, %v1765
      %v1782 = vmax.f32 %v1483, %v1766
      %v1783 = vmax.f32 %v1484, %v1767
      %v1784 = vmax.f32 %v1485, %v1768
      %v1785 = vmax.f32 %v1486, %v1769
      %v1786 = vmax.f32 %v1487, %v1770
      %v1787 = vmax.f32 %v1488, %v1771
      %v1788 = vmax.f32 %v1489, %v1772
      %s1789 = scalar_lea.vmem %s336, 32
      %v1790 = vld [vmem:[%s1789] sm:$0x3f]
      %v1792 = vsel %vm433, %v1790, 0
      %1794 = vmatprep.subr.mxu0 0.0
      %1795 = vmatpush1.msra.mxu0 %v1792
      %1796 = vmatprep.subr.mxu0 0.0
      %1797 = vmatpush1.msra.mxu0 0.0
      %1798 = vmatprep.subr.mxu0 0.0
      %1799 = vmatpush1.msra.mxu0 0.0
      %1800 = vmatprep.subr.mxu0 0.0
      %1801 = vmatpush1.msra.mxu0 0.0
      %1802 = vmatprep.subr.mxu0 0.0
      %1803 = vmatpush1.msra.mxu0 0.0
      %1804 = vmatprep.subr.mxu0 0.0
      %1805 = vmatpush1.msra.mxu0 0.0
      %1806 = vmatprep.subr.mxu0 0.0
      %1807 = vmatpush1.msra.mxu0 0.0
      %1808 = vmatprep.subr.mxu0 0.0
      %1809 = vmatpush1.msra.mxu0 0.0
      %1810 = vmatprep.subr.mxu0 0.0
      %1811 = vmatpush1.msra.mxu0 0.0
      %1812 = vmatprep.subr.mxu0 0.0
      %1813 = vmatpush1.msra.mxu0 0.0
      %1814 = vmatprep.subr.mxu0 0.0
      %1815 = vmatpush1.msra.mxu0 0.0
      %1816 = vmatprep.subr.mxu0 0.0
      %1817 = vmatpush1.msra.mxu0 0.0
      %1818 = vmatprep.subr.mxu0 0.0
      %1819 = vmatpush1.msra.mxu0 0.0
      %1820 = vmatprep.subr.mxu0 0.0
      %1821 = vmatpush1.msra.mxu0 0.0
      %1822 = vmatprep.subr.mxu0 0.0
      %1823 = vmatpush1.msra.mxu0 0.0
      %1824 = vmatprep.subr.mxu0 0.0
      %1825 = vmatpush1.msra.mxu0 0.0
      %1826 = vmatprep.subr.mxu0 0.0
      %1827 = vmatpush1.msra.mxu0 0.0
      %1828 = vmatprep.subr.mxu0 0.0
      %1829 = vmatpush1.msra.mxu0 0.0
      %1830 = vmatprep.subr.mxu0 0.0
      %1831 = vmatpush1.msra.mxu0 0.0
      %1832 = vmatprep.subr.mxu0 0.0
      %1833 = vmatpush1.msra.mxu0 0.0
      %1834 = vmatprep.subr.mxu0 0.0
      %1835 = vmatpush1.msra.mxu0 0.0
      %1836 = vmatprep.subr.mxu0 0.0
      %1837 = vmatpush1.msra.mxu0 0.0
      %1838 = vmatprep.subr.mxu0 0.0
      %1839 = vmatpush1.msra.mxu0 0.0
      %1840 = vmatprep.subr.mxu0 0.0
      %1841 = vmatpush1.msra.mxu0 0.0
      %1842 = vmatprep.subr.mxu0 0.0
      %1843 = vmatpush1.msra.mxu0 0.0
      %1844 = vmatprep.subr.mxu0 0.0
      %1845 = vmatpush1.msra.mxu0 0.0
      %1846 = vmatprep.subr.mxu0 0.0
      %1847 = vmatpush1.msra.mxu0 0.0
      %1848 = vmatprep.subr.mxu0 0.0
      %1849 = vmatpush1.msra.mxu0 0.0
      %1850 = vmatprep.subr.mxu0 0.0
      %1851 = vmatpush1.msra.mxu0 0.0
      %1852 = vmatprep.subr.mxu0 0.0
      %1853 = vmatpush1.msra.mxu0 0.0
      %1854 = vmatprep.subr.mxu0 0.0
      %1855 = vmatpush1.msra.mxu0 0.0
      %1856 = vmatprep.subr.mxu0 0.0
      %1857 = vmatpush1.msra.mxu0 0.0
      %1858 = vmatprep.mubr.f32.mxu0 0.0
      %1859 = vmatmul.mubr.f32.gmra.mrb[0].mxu0 %v410
      %v1860 = vpop.f32.mrb[0].mxu0
      %v1861 = vadd.f32 %v371, %v1860
      %v1862 = vpop.f32.mrb[0].mxu0
      %1863 = vmatprep.mubr.f32.mxu0 0.0
      %1864 = vmatmul.mubr.f32.gmra.mrb[0].mxu0 %v413
      %v1865 = vpop.f32.mrb[0].mxu0
      %v1866 = vadd.f32 %v376, %v1865
      %v1867 = vpop.f32.mrb[0].mxu0
      %1868 = vmatprep.mubr.f32.mxu0 0.0
      %1869 = vmatmul.mubr.f32.gmra.mrb[0].mxu0 %v416
      %v1870 = vpop.f32.mrb[0].mxu0
      %v1871 = vadd.f32 %v381, %v1870
      %v1872 = vpop.f32.mrb[0].mxu0
      %1873 = vmatprep.mubr.f32.mxu0 0.0
      %1874 = vmatmul.mubr.f32.gmra.mrb[0].mxu0 %v419
      %v1875 = vpop.f32.mrb[0].mxu0
      %v1876 = vadd.f32 %v386, %v1875
      %v1877 = vpop.f32.mrb[0].mxu0
      %1878 = vmatprep.mubr.f32.mxu0 0.0
      %1879 = vmatmul.mubr.f32.gmra.mrb[0].mxu0 %v422
      %v1880 = vpop.f32.mrb[0].mxu0
      %v1881 = vadd.f32 %v391, %v1880
      %v1882 = vpop.f32.mrb[0].mxu0
      %1883 = vmatprep.mubr.f32.mxu0 0.0
      %1884 = vmatmul.mubr.f32.gmra.mrb[0].mxu0 %v425
      %v1885 = vpop.f32.mrb[0].mxu0
      %v1886 = vadd.f32 %v396, %v1885
      %v1887 = vpop.f32.mrb[0].mxu0
      %1888 = vmatprep.mubr.f32.mxu0 0.0
      %1889 = vmatmul.mubr.f32.gmra.mrb[0].mxu0 %v428
      %v1890 = vpop.f32.mrb[0].mxu0
      %v1891 = vadd.f32 %v401, %v1890
      %v1892 = vpop.f32.mrb[0].mxu0
      %1893 = vmatprep.mubr.f32.mxu0 0.0
      %1894 = vmatmul.mubr.f32.gmra.mrb[0].mxu0 %v431
      %v1895 = vpop.f32.mrb[0].mxu0
      %v1896 = vadd.f32 %v406, %v1895
      %v1897 = vpop.f32.mrb[0].mxu0
      %1898 = vdwg.mxu0
      %vm1899 = vcmp.gt.f32.partialorder %v1861, 0.0
      %vm1900 = vcmp.gt.f32.partialorder %v1866, 0.0
      %vm1901 = vcmp.gt.f32.partialorder %v1871, 0.0
      %vm1902 = vcmp.gt.f32.partialorder %v1876, 0.0
      %vm1903 = vcmp.gt.f32.partialorder %v1881, 0.0
      %vm1904 = vcmp.gt.f32.partialorder %v1886, 0.0
      %vm1905 = vcmp.gt.f32.partialorder %v1891, 0.0
      %vm1906 = vcmp.gt.f32.partialorder %v1896, 0.0
      %v1907 = vmul.f32 %v1861, 0.2
      %v1908 = vmul.f32 %v1866, 0.2
      %v1909 = vmul.f32 %v1871, 0.2
      %v1910 = vmul.f32 %v1876, 0.2
      %v1911 = vmul.f32 %v1881, 0.2
      %v1912 = vmul.f32 %v1886, 0.2
      %v1913 = vmul.f32 %v1891, 0.2
      %v1914 = vmul.f32 %v1896, 0.2
      %v1915 = vsel %vm1899, %v1861, %v1907
      %v1916 = vsel %vm1900, %v1866, %v1908
      %v1917 = vsel %vm1901, %v1871, %v1909
      %v1918 = vsel %vm1902, %v1876, %v1910
      %v1919 = vsel %vm1903, %v1881, %v1911
      %v1920 = vsel %vm1904, %v1886, %v1912
      %v1921 = vsel %vm1905, %v1891, %v1913
      %v1922 = vsel %vm1906, %v1896, %v1914
      %v1923 = vpack.c.bf16 %v1916, %v1915
      %v1924 = vpack.c.bf16 %v1918, %v1917
      %v1925 = vpack.c.bf16 %v1920, %v1919
      %v1926 = vpack.c.bf16 %v1922, %v1921
      %1927 = vmatprep.subr.bf16.mxu0 0
      %1928 = vmatpush1.bf16.msra.mxu0 %v1923
      %1929 = vmatprep.subr.bf16.mxu0 0
      %1930 = vmatpush1.bf16.msra.mxu0 %v1924
      %1931 = vmatprep.subr.bf16.mxu0 0
      %1932 = vmatpush1.bf16.msra.mxu0 %v1925
      %1933 = vmatprep.subr.bf16.mxu0 0
      %1934 = vmatpush1.bf16.msra.mxu0 %v1926
      %1935 = vmatprep.subr.bf16.mxu0 0
      %1936 = vmatpush1.bf16.msra.mxu0 0
      %1937 = vmatprep.subr.bf16.mxu0 0
      %1938 = vmatpush1.bf16.msra.mxu0 0
      %1939 = vmatprep.subr.bf16.mxu0 0
      %1940 = vmatpush1.bf16.msra.mxu0 0
      %1941 = vmatprep.subr.bf16.mxu0 0
      %1942 = vmatpush1.bf16.msra.mxu0 0
      %1943 = vmatprep.subr.bf16.mxu0 0
      %1944 = vmatpush1.bf16.msra.mxu0 0
      %1945 = vmatprep.subr.bf16.mxu0 0
      %1946 = vmatpush1.bf16.msra.mxu0 0
      %1947 = vmatprep.subr.bf16.mxu0 0
      %1948 = vmatpush1.bf16.msra.mxu0 0
      %1949 = vmatprep.subr.bf16.mxu0 0
      %1950 = vmatpush1.bf16.msra.mxu0 0
      %1951 = vmatprep.subr.bf16.mxu0 0
      %1952 = vmatpush1.bf16.msra.mxu0 0
      %1953 = vmatprep.subr.bf16.mxu0 0
      %1954 = vmatpush1.bf16.msra.mxu0 0
      %1955 = vmatprep.subr.bf16.mxu0 0
      %1956 = vmatpush1.bf16.msra.mxu0 0
      %1957 = vmatprep.subr.bf16.mxu0 0
      %1958 = vmatpush1.bf16.msra.mxu0 0
      %1959 = vmatprep.mubr.bf16.mxu0 0
      %1960 = vmatmul.mubr.bf16.gmra.mrb[0].mxu0 %v724
      %v1961 = vpop.f32.mrb[0].mxu0
      %v1962 = vadd.f32 %v605, %v1961
      %v1963 = vpop.f32.mrb[0].mxu0
      %v1964 = vpop.f32.mrb[0].mxu0
      %v1965 = vadd.f32 %v610, %v1964
      %v1966 = vpop.f32.mrb[0].mxu0
      %1967 = vmatprep.mubr.bf16.mxu0 0
      %1968 = vmatmul.mubr.bf16.gmra.mrb[0].mxu0 %v727
      %v1969 = vpop.f32.mrb[0].mxu0
      %v1970 = vadd.f32 %v615, %v1969
      %v1971 = vpop.f32.mrb[0].mxu0
      %v1972 = vpop.f32.mrb[0].mxu0
      %v1973 = vadd.f32 %v620, %v1972
      %v1974 = vpop.f32.mrb[0].mxu0
      %1975 = vmatprep.mubr.bf16.mxu0 0
      %1976 = vmatmul.mubr.bf16.gmra.mrb[0].mxu0 %v730
      %v1977 = vpop.f32.mrb[0].mxu0
      %v1978 = vadd.f32 %v625, %v1977
      %v1979 = vpop.f32.mrb[0].mxu0
      %v1980 = vpop.f32.mrb[0].mxu0
      %v1981 = vadd.f32 %v630, %v1980
      %v1982 = vpop.f32.mrb[0].mxu0
      %1983 = vmatprep.mubr.bf16.mxu0 0
      %1984 = vmatmul.mubr.bf16.gmra.mrb[0].mxu0 %v733
      %v1985 = vpop.f32.mrb[0].mxu0
      %v1986 = vadd.f32 %v635, %v1985
      %v1987 = vpop.f32.mrb[0].mxu0
      %v1988 = vpop.f32.mrb[0].mxu0
      %v1989 = vadd.f32 %v640, %v1988
      %v1990 = vpop.f32.mrb[0].mxu0
      %1991 = vmatprep.mubr.bf16.mxu0 0
      %1992 = vmatmul.mubr.bf16.gmra.mrb[0].mxu0 %v736
      %v1993 = vpop.f32.mrb[0].mxu0
      %v1994 = vadd.f32 %v645, %v1993
      %v1995 = vpop.f32.mrb[0].mxu0
      %v1996 = vpop.f32.mrb[0].mxu0
      %v1997 = vadd.f32 %v650, %v1996
      %v1998 = vpop.f32.mrb[0].mxu0
      %1999 = vmatprep.mubr.bf16.mxu0 0
      %2000 = vmatmul.mubr.bf16.gmra.mrb[0].mxu0 %v739
      %v2001 = vpop.f32.mrb[0].mxu0
      %v2002 = vadd.f32 %v655, %v2001
      %v2003 = vpop.f32.mrb[0].mxu0
      %v2004 = vpop.f32.mrb[0].mxu0
      %v2005 = vadd.f32 %v660, %v2004
      %v2006 = vpop.f32.mrb[0].mxu0
      %2007 = vmatprep.mubr.bf16.mxu0 0
      %2008 = vmatmul.mubr.bf16.gmra.mrb[0].mxu0 %v742
      %v2009 = vpop.f32.mrb[0].mxu0
      %v2010 = vadd.f32 %v665, %v2009
      %v2011 = vpop.f32.mrb[0].mxu0
      %v2012 = vpop.f32.mrb[0].mxu0
      %v2013 = vadd.f32 %v670, %v2012
      %v2014 = vpop.f32.mrb[0].mxu0
      %2015 = vmatprep.mubr.bf16.mxu0 0
      %2016 = vmatmul.mubr.bf16.gmra.mrb[0].mxu0 %v745
      %v2017 = vpop.f32.mrb[0].mxu0
      %v2018 = vadd.f32 %v675, %v2017
      %v2019 = vpop.f32.mrb[0].mxu0
      %v2020 = vpop.f32.mrb[0].mxu0
      %v2021 = vadd.f32 %v680, %v2020
      %v2022 = vpop.f32.mrb[0].mxu0
      %2023 = vdwg.mxu0
      %vm2024 = vcmp.gt.f32.partialorder %v1962, 0.0
      %vm2025 = vcmp.gt.f32.partialorder %v1965, 0.0
      %vm2026 = vcmp.gt.f32.partialorder %v1970, 0.0
      %vm2027 = vcmp.gt.f32.partialorder %v1973, 0.0
      %vm2028 = vcmp.gt.f32.partialorder %v1978, 0.0
      %vm2029 = vcmp.gt.f32.partialorder %v1981, 0.0
      %vm2030 = vcmp.gt.f32.partialorder %v1986, 0.0
      %vm2031 = vcmp.gt.f32.partialorder %v1989, 0.0
      %vm2032 = vcmp.gt.f32.partialorder %v1994, 0.0
      %vm2033 = vcmp.gt.f32.partialorder %v1997, 0.0
      %vm2034 = vcmp.gt.f32.partialorder %v2002, 0.0
      %vm2035 = vcmp.gt.f32.partialorder %v2005, 0.0
      %vm2036 = vcmp.gt.f32.partialorder %v2010, 0.0
      %vm2037 = vcmp.gt.f32.partialorder %v2013, 0.0
      %vm2038 = vcmp.gt.f32.partialorder %v2018, 0.0
      %vm2039 = vcmp.gt.f32.partialorder %v2021, 0.0
      %v2040 = vmul.f32 %v1962, 0.2
      %v2041 = vmul.f32 %v1965, 0.2
      %v2042 = vmul.f32 %v1970, 0.2
      %v2043 = vmul.f32 %v1973, 0.2
      %v2044 = vmul.f32 %v1978, 0.2
      %v2045 = vmul.f32 %v1981, 0.2
      %v2046 = vmul.f32 %v1986, 0.2
      %v2047 = vmul.f32 %v1989, 0.2
      %v2048 = vmul.f32 %v1994, 0.2
      %v2049 = vmul.f32 %v1997, 0.2
      %v2050 = vmul.f32 %v2002, 0.2
      %v2051 = vmul.f32 %v2005, 0.2
      %v2052 = vmul.f32 %v2010, 0.2
      %v2053 = vmul.f32 %v2013, 0.2
      %v2054 = vmul.f32 %v2018, 0.2
      %v2055 = vmul.f32 %v2021, 0.2
      %v2056 = vsel %vm2024, %v1962, %v2040
      %v2057 = vsel %vm2025, %v1965, %v2041
      %v2058 = vsel %vm2026, %v1970, %v2042
      %v2059 = vsel %vm2027, %v1973, %v2043
      %v2060 = vsel %vm2028, %v1978, %v2044
      %v2061 = vsel %vm2029, %v1981, %v2045
      %v2062 = vsel %vm2030, %v1986, %v2046
      %v2063 = vsel %vm2031, %v1989, %v2047
      %v2064 = vsel %vm2032, %v1994, %v2048
      %v2065 = vsel %vm2033, %v1997, %v2049
      %v2066 = vsel %vm2034, %v2002, %v2050
      %v2067 = vsel %vm2035, %v2005, %v2051
      %v2068 = vsel %vm2036, %v2010, %v2052
      %v2069 = vsel %vm2037, %v2013, %v2053
      %v2070 = vsel %vm2038, %v2018, %v2054
      %v2071 = vsel %vm2039, %v2021, %v2055
      %v2072 = vmax.f32 %v1773, %v2056
      %v2073 = vmax.f32 %v1774, %v2057
      %v2074 = vmax.f32 %v1775, %v2058
      %v2075 = vmax.f32 %v1776, %v2059
      %v2076 = vmax.f32 %v1777, %v2060
      %v2077 = vmax.f32 %v1778, %v2061
      %v2078 = vmax.f32 %v1779, %v2062
      %v2079 = vmax.f32 %v1780, %v2063
      %v2080 = vmax.f32 %v1781, %v2064
      %v2081 = vmax.f32 %v1782, %v2065
      %v2082 = vmax.f32 %v1783, %v2066
      %v2083 = vmax.f32 %v1784, %v2067
      %v2084 = vmax.f32 %v1785, %v2068
      %v2085 = vmax.f32 %v1786, %v2069
      %v2086 = vmax.f32 %v1787, %v2070
      %v2087 = vmax.f32 %v1788, %v2071
      %s2088 = scalar_lea.vmem %s336, 40
      %v2089 = vld [vmem:[%s2088] sm:$0x3f]
      %v2091 = vsel %vm433, %v2089, 0
      %2093 = vmatprep.subr.mxu0 0.0
      %2094 = vmatpush1.msra.mxu0 %v2091
      %2095 = vmatprep.subr.mxu0 0.0
      %2096 = vmatpush1.msra.mxu0 0.0
      %2097 = vmatprep.subr.mxu0 0.0
      %2098 = vmatpush1.msra.mxu0 0.0
      %2099 = vmatprep.subr.mxu0 0.0
      %2100 = vmatpush1.msra.mxu0 0.0
      %2101 = vmatprep.subr.mxu0 0.0
      %2102 = vmatpush1.msra.mxu0 0.0
      %2103 = vmatprep.subr.mxu0 0.0
      %2104 = vmatpush1.msra.mxu0 0.0
      %2105 = vmatprep.subr.mxu0 0.0
      %2106 = vmatpush1.msra.mxu0 0.0
      %2107 = vmatprep.subr.mxu0 0.0
      %2108 = vmatpush1.msra.mxu0 0.0
      %2109 = vmatprep.subr.mxu0 0.0
      %2110 = vmatpush1.msra.mxu0 0.0
      %2111 = vmatprep.subr.mxu0 0.0
      %2112 = vmatpush1.msra.mxu0 0.0
      %2113 = vmatprep.subr.mxu0 0.0
      %2114 = vmatpush1.msra.mxu0 0.0
      %2115 = vmatprep.subr.mxu0 0.0
      %2116 = vmatpush1.msra.mxu0 0.0
      %2117 = vmatprep.subr.mxu0 0.0
      %2118 = vmatpush1.msra.mxu0 0.0
      %2119 = vmatprep.subr.mxu0 0.0
      %2120 = vmatpush1.msra.mxu0 0.0
      %2121 = vmatprep.subr.mxu0 0.0
      %2122 = vmatpush1.msra.mxu0 0.0
      %2123 = vmatprep.subr.mxu0 0.0
      %2124 = vmatpush1.msra.mxu0 0.0
      %2125 = vmatprep.subr.mxu0 0.0
      %2126 = vmatpush1.msra.mxu0 0.0
      %2127 = vmatprep.subr.mxu0 0.0
      %2128 = vmatpush1.msra.mxu0 0.0
      %2129 = vmatprep.subr.mxu0 0.0
      %2130 = vmatpush1.msra.mxu0 0.0
      %2131 = vmatprep.subr.mxu0 0.0
      %2132 = vmatpush1.msra.mxu0 0.0
      %2133 = vmatprep.subr.mxu0 0.0
      %2134 = vmatpush1.msra.mxu0 0.0
      %2135 = vmatprep.subr.mxu0 0.0
      %2136 = vmatpush1.msra.mxu0 0.0
      %2137 = vmatprep.subr.mxu0 0.0
      %2138 = vmatpush1.msra.mxu0 0.0
      %2139 = vmatprep.subr.mxu0 0.0
      %2140 = vmatpush1.msra.mxu0 0.0
      %2141 = vmatprep.subr.mxu0 0.0
      %2142 = vmatpush1.msra.mxu0 0.0
      %2143 = vmatprep.subr.mxu0 0.0
      %2144 = vmatpush1.msra.mxu0 0.0
      %2145 = vmatprep.subr.mxu0 0.0
      %2146 = vmatpush1.msra.mxu0 0.0
      %2147 = vmatprep.subr.mxu0 0.0
      %2148 = vmatpush1.msra.mxu0 0.0
      %2149 = vmatprep.subr.mxu0 0.0
      %2150 = vmatpush1.msra.mxu0 0.0
      %2151 = vmatprep.subr.mxu0 0.0
      %2152 = vmatpush1.msra.mxu0 0.0
      %2153 = vmatprep.subr.mxu0 0.0
      %2154 = vmatpush1.msra.mxu0 0.0
      %2155 = vmatprep.subr.mxu0 0.0
      %2156 = vmatpush1.msra.mxu0 0.0
      %2157 = vmatprep.mubr.f32.mxu0 0.0
      %2158 = vmatmul.mubr.f32.gmra.mrb[0].mxu0 %v410
      %v2159 = vpop.f32.mrb[0].mxu0
      %v2160 = vadd.f32 %v371, %v2159
      %v2161 = vpop.f32.mrb[0].mxu0
      %2162 = vmatprep.mubr.f32.mxu0 0.0
      %2163 = vmatmul.mubr.f32.gmra.mrb[0].mxu0 %v413
      %v2164 = vpop.f32.mrb[0].mxu0
      %v2165 = vadd.f32 %v376, %v2164
      %v2166 = vpop.f32.mrb[0].mxu0
      %2167 = vmatprep.mubr.f32.mxu0 0.0
      %2168 = vmatmul.mubr.f32.gmra.mrb[0].mxu0 %v416
      %v2169 = vpop.f32.mrb[0].mxu0
      %v2170 = vadd.f32 %v381, %v2169
      %v2171 = vpop.f32.mrb[0].mxu0
      %2172 = vmatprep.mubr.f32.mxu0 0.0
      %2173 = vmatmul.mubr.f32.gmra.mrb[0].mxu0 %v419
      %v2174 = vpop.f32.mrb[0].mxu0
      %v2175 = vadd.f32 %v386, %v2174
      %v2176 = vpop.f32.mrb[0].mxu0
      %2177 = vmatprep.mubr.f32.mxu0 0.0
      %2178 = vmatmul.mubr.f32.gmra.mrb[0].mxu0 %v422
      %v2179 = vpop.f32.mrb[0].mxu0
      %v2180 = vadd.f32 %v391, %v2179
      %v2181 = vpop.f32.mrb[0].mxu0
      %2182 = vmatprep.mubr.f32.mxu0 0.0
      %2183 = vmatmul.mubr.f32.gmra.mrb[0].mxu0 %v425
      %v2184 = vpop.f32.mrb[0].mxu0
      %v2185 = vadd.f32 %v396, %v2184
      %v2186 = vpop.f32.mrb[0].mxu0
      %2187 = vmatprep.mubr.f32.mxu0 0.0
      %2188 = vmatmul.mubr.f32.gmra.mrb[0].mxu0 %v428
      %v2189 = vpop.f32.mrb[0].mxu0
      %v2190 = vadd.f32 %v401, %v2189
      %v2191 = vpop.f32.mrb[0].mxu0
      %2192 = vmatprep.mubr.f32.mxu0 0.0
      %2193 = vmatmul.mubr.f32.gmra.mrb[0].mxu0 %v431
      %v2194 = vpop.f32.mrb[0].mxu0
      %v2195 = vadd.f32 %v406, %v2194
      %v2196 = vpop.f32.mrb[0].mxu0
      %2197 = vdwg.mxu0
      %vm2198 = vcmp.gt.f32.partialorder %v2160, 0.0
      %vm2199 = vcmp.gt.f32.partialorder %v2165, 0.0
      %vm2200 = vcmp.gt.f32.partialorder %v2170, 0.0
      %vm2201 = vcmp.gt.f32.partialorder %v2175, 0.0
      %vm2202 = vcmp.gt.f32.partialorder %v2180, 0.0
      %vm2203 = vcmp.gt.f32.partialorder %v2185, 0.0
      %vm2204 = vcmp.gt.f32.partialorder %v2190, 0.0
      %vm2205 = vcmp.gt.f32.partialorder %v2195, 0.0
      %v2206 = vmul.f32 %v2160, 0.2
      %v2207 = vmul.f32 %v2165, 0.2
      %v2208 = vmul.f32 %v2170, 0.2
      %v2209 = vmul.f32 %v2175, 0.2
      %v2210 = vmul.f32 %v2180, 0.2
      %v2211 = vmul.f32 %v2185, 0.2
      %v2212 = vmul.f32 %v2190, 0.2
      %v2213 = vmul.f32 %v2195, 0.2
      %v2214 = vsel %vm2198, %v2160, %v2206
      %v2215 = vsel %vm2199, %v2165, %v2207
      %v2216 = vsel %vm2200, %v2170, %v2208
      %v2217 = vsel %vm2201, %v2175, %v2209
      %v2218 = vsel %vm2202, %v2180, %v2210
      %v2219 = vsel %vm2203, %v2185, %v2211
      %v2220 = vsel %vm2204, %v2190, %v2212
      %v2221 = vsel %vm2205, %v2195, %v2213
      %v2222 = vpack.c.bf16 %v2215, %v2214
      %v2223 = vpack.c.bf16 %v2217, %v2216
      %v2224 = vpack.c.bf16 %v2219, %v2218
      %v2225 = vpack.c.bf16 %v2221, %v2220
      %2226 = vmatprep.subr.bf16.mxu0 0
      %2227 = vmatpush1.bf16.msra.mxu0 %v2222
      %2228 = vmatprep.subr.bf16.mxu0 0
      %2229 = vmatpush1.bf16.msra.mxu0 %v2223
      %2230 = vmatprep.subr.bf16.mxu0 0
      %2231 = vmatpush1.bf16.msra.mxu0 %v2224
      %2232 = vmatprep.subr.bf16.mxu0 0
      %2233 = vmatpush1.bf16.msra.mxu0 %v2225
      %2234 = vmatprep.subr.bf16.mxu0 0
      %2235 = vmatpush1.bf16.msra.mxu0 0
      %2236 = vmatprep.subr.bf16.mxu0 0
      %2237 = vmatpush1.bf16.msra.mxu0 0
      %2238 = vmatprep.subr.bf16.mxu0 0
      %2239 = vmatpush1.bf16.msra.mxu0 0
      %2240 = vmatprep.subr.bf16.mxu0 0
      %2241 = vmatpush1.bf16.msra.mxu0 0
      %2242 = vmatprep.subr.bf16.mxu0 0
      %2243 = vmatpush1.bf16.msra.mxu0 0
      %2244 = vmatprep.subr.bf16.mxu0 0
      %2245 = vmatpush1.bf16.msra.mxu0 0
      %2246 = vmatprep.subr.bf16.mxu0 0
      %2247 = vmatpush1.bf16.msra.mxu0 0
      %2248 = vmatprep.subr.bf16.mxu0 0
      %2249 = vmatpush1.bf16.msra.mxu0 0
      %2250 = vmatprep.subr.bf16.mxu0 0
      %2251 = vmatpush1.bf16.msra.mxu0 0
      %2252 = vmatprep.subr.bf16.mxu0 0
      %2253 = vmatpush1.bf16.msra.mxu0 0
      %2254 = vmatprep.subr.bf16.mxu0 0
      %2255 = vmatpush1.bf16.msra.mxu0 0
      %2256 = vmatprep.subr.bf16.mxu0 0
      %2257 = vmatpush1.bf16.msra.mxu0 0
      %2258 = vmatprep.mubr.bf16.mxu0 0
      %2259 = vmatmul.mubr.bf16.gmra.mrb[0].mxu0 %v724
      %v2260 = vpop.f32.mrb[0].mxu0
      %v2261 = vadd.f32 %v605, %v2260
      %v2262 = vpop.f32.mrb[0].mxu0
      %v2263 = vpop.f32.mrb[0].mxu0
      %v2264 = vadd.f32 %v610, %v2263
      %v2265 = vpop.f32.mrb[0].mxu0
      %2266 = vmatprep.mubr.bf16.mxu0 0
      %2267 = vmatmul.mubr.bf16.gmra.mrb[0].mxu0 %v727
      %v2268 = vpop.f32.mrb[0].mxu0
      %v2269 = vadd.f32 %v615, %v2268
      %v2270 = vpop.f32.mrb[0].mxu0
      %v2271 = vpop.f32.mrb[0].mxu0
      %v2272 = vadd.f32 %v620, %v2271
      %v2273 = vpop.f32.mrb[0].mxu0
      %2274 = vmatprep.mubr.bf16.mxu0 0
      %2275 = vmatmul.mubr.bf16.gmra.mrb[0].mxu0 %v730
      %v2276 = vpop.f32.mrb[0].mxu0
      %v2277 = vadd.f32 %v625, %v2276
      %v2278 = vpop.f32.mrb[0].mxu0
      %v2279 = vpop.f32.mrb[0].mxu0
      %v2280 = vadd.f32 %v630, %v2279
      %v2281 = vpop.f32.mrb[0].mxu0
      %2282 = vmatprep.mubr.bf16.mxu0 0
      %2283 = vmatmul.mubr.bf16.gmra.mrb[0].mxu0 %v733
      %v2284 = vpop.f32.mrb[0].mxu0
      %v2285 = vadd.f32 %v635, %v2284
      %v2286 = vpop.f32.mrb[0].mxu0
      %v2287 = vpop.f32.mrb[0].mxu0
      %v2288 = vadd.f32 %v640, %v2287
      %v2289 = vpop.f32.mrb[0].mxu0
      %2290 = vmatprep.mubr.bf16.mxu0 0
      %2291 = vmatmul.mubr.bf16.gmra.mrb[0].mxu0 %v736
      %v2292 = vpop.f32.mrb[0].mxu0
      %v2293 = vadd.f32 %v645, %v2292
      %v2294 = vpop.f32.mrb[0].mxu0
      %v2295 = vpop.f32.mrb[0].mxu0
      %v2296 = vadd.f32 %v650, %v2295
      %v2297 = vpop.f32.mrb[0].mxu0
      %2298 = vmatprep.mubr.bf16.mxu0 0
      %2299 = vmatmul.mubr.bf16.gmra.mrb[0].mxu0 %v739
      %v2300 = vpop.f32.mrb[0].mxu0
      %v2301 = vadd.f32 %v655, %v2300
      %v2302 = vpop.f32.mrb[0].mxu0
      %v2303 = vpop.f32.mrb[0].mxu0
      %v2304 = vadd.f32 %v660, %v2303
      %v2305 = vpop.f32.mrb[0].mxu0
      %2306 = vmatprep.mubr.bf16.mxu0 0
      %2307 = vmatmul.mubr.bf16.gmra.mrb[0].mxu0 %v742
      %v2308 = vpop.f32.mrb[0].mxu0
      %v2309 = vadd.f32 %v665, %v2308
      %v2310 = vpop.f32.mrb[0].mxu0
      %v2311 = vpop.f32.mrb[0].mxu0
      %v2312 = vadd.f32 %v670, %v2311
      %v2313 = vpop.f32.mrb[0].mxu0
      %2314 = vmatprep.mubr.bf16.mxu0 0
      %2315 = vmatmul.mubr.bf16.gmra.mrb[0].mxu0 %v745
      %v2316 = vpop.f32.mrb[0].mxu0
      %v2317 = vadd.f32 %v675, %v2316
      %v2318 = vpop.f32.mrb[0].mxu0
      %v2319 = vpop.f32.mrb[0].mxu0
      %v2320 = vadd.f32 %v680, %v2319
      %v2321 = vpop.f32.mrb[0].mxu0
      %2322 = vdwg.mxu0
      %vm2323 = vcmp.gt.f32.partialorder %v2261, 0.0
      %vm2324 = vcmp.gt.f32.partialorder %v2264, 0.0
      %vm2325 = vcmp.gt.f32.partialorder %v2269, 0.0
      %vm2326 = vcmp.gt.f32.partialorder %v2272, 0.0
      %vm2327 = vcmp.gt.f32.partialorder %v2277, 0.0
      %vm2328 = vcmp.gt.f32.partialorder %v2280, 0.0
      %vm2329 = vcmp.gt.f32.partialorder %v2285, 0.0
      %vm2330 = vcmp.gt.f32.partialorder %v2288, 0.0
      %vm2331 = vcmp.gt.f32.partialorder %v2293, 0.0
      %vm2332 = vcmp.gt.f32.partialorder %v2296, 0.0
      %vm2333 = vcmp.gt.f32.partialorder %v2301, 0.0
      %vm2334 = vcmp.gt.f32.partialorder %v2304, 0.0
      %vm2335 = vcmp.gt.f32.partialorder %v2309, 0.0
      %vm2336 = vcmp.gt.f32.partialorder %v2312, 0.0
      %vm2337 = vcmp.gt.f32.partialorder %v2317, 0.0
      %vm2338 = vcmp.gt.f32.partialorder %v2320, 0.0
      %v2339 = vmul.f32 %v2261, 0.2
      %v2340 = vmul.f32 %v2264, 0.2
      %v2341 = vmul.f32 %v2269, 0.2
      %v2342 = vmul.f32 %v2272, 0.2
      %v2343 = vmul.f32 %v2277, 0.2
      %v2344 = vmul.f32 %v2280, 0.2
      %v2345 = vmul.f32 %v2285, 0.2
      %v2346 = vmul.f32 %v2288, 0.2
      %v2347 = vmul.f32 %v2293, 0.2
      %v2348 = vmul.f32 %v2296, 0.2
      %v2349 = vmul.f32 %v2301, 0.2
      %v2350 = vmul.f32 %v2304, 0.2
      %v2351 = vmul.f32 %v2309, 0.2
      %v2352 = vmul.f32 %v2312, 0.2
      %v2353 = vmul.f32 %v2317, 0.2
      %v2354 = vmul.f32 %v2320, 0.2
      %v2355 = vsel %vm2323, %v2261, %v2339
      %v2356 = vsel %vm2324, %v2264, %v2340
      %v2357 = vsel %vm2325, %v2269, %v2341
      %v2358 = vsel %vm2326, %v2272, %v2342
      %v2359 = vsel %vm2327, %v2277, %v2343
      %v2360 = vsel %vm2328, %v2280, %v2344
      %v2361 = vsel %vm2329, %v2285, %v2345
      %v2362 = vsel %vm2330, %v2288, %v2346
      %v2363 = vsel %vm2331, %v2293, %v2347
      %v2364 = vsel %vm2332, %v2296, %v2348
      %v2365 = vsel %vm2333, %v2301, %v2349
      %v2366 = vsel %vm2334, %v2304, %v2350
      %v2367 = vsel %vm2335, %v2309, %v2351
      %v2368 = vsel %vm2336, %v2312, %v2352
      %v2369 = vsel %vm2337, %v2317, %v2353
      %v2370 = vsel %vm2338, %v2320, %v2354
      %v2371 = vmax.f32 %v2072, %v2355
      %v2372 = vmax.f32 %v2073, %v2356
      %v2373 = vmax.f32 %v2074, %v2357
      %v2374 = vmax.f32 %v2075, %v2358
      %v2375 = vmax.f32 %v2076, %v2359
      %v2376 = vmax.f32 %v2077, %v2360
      %v2377 = vmax.f32 %v2078, %v2361
      %v2378 = vmax.f32 %v2079, %v2362
      %v2379 = vmax.f32 %v2080, %v2363
      %v2380 = vmax.f32 %v2081, %v2364
      %v2381 = vmax.f32 %v2082, %v2365
      %v2382 = vmax.f32 %v2083, %v2366
      %v2383 = vmax.f32 %v2084, %v2367
      %v2384 = vmax.f32 %v2085, %v2368
      %v2385 = vmax.f32 %v2086, %v2369
      %v2386 = vmax.f32 %v2087, %v2370
      %s2387 = scalar_lea.vmem %s336, 48
      %v2388 = vld [vmem:[%s2387] sm:$0x3f]
      %v2390 = vsel %vm433, %v2388, 0
      %2392 = vmatprep.subr.mxu0 0.0
      %2393 = vmatpush1.msra.mxu0 %v2390
      %2394 = vmatprep.subr.mxu0 0.0
      %2395 = vmatpush1.msra.mxu0 0.0
      %2396 = vmatprep.subr.mxu0 0.0
      %2397 = vmatpush1.msra.mxu0 0.0
      %2398 = vmatprep.subr.mxu0 0.0
      %2399 = vmatpush1.msra.mxu0 0.0
      %2400 = vmatprep.subr.mxu0 0.0
      %2401 = vmatpush1.msra.mxu0 0.0
      %2402 = vmatprep.subr.mxu0 0.0
      %2403 = vmatpush1.msra.mxu0 0.0
      %2404 = vmatprep.subr.mxu0 0.0
      %2405 = vmatpush1.msra.mxu0 0.0
      %2406 = vmatprep.subr.mxu0 0.0
      %2407 = vmatpush1.msra.mxu0 0.0
      %2408 = vmatprep.subr.mxu0 0.0
      %2409 = vmatpush1.msra.mxu0 0.0
      %2410 = vmatprep.subr.mxu0 0.0
      %2411 = vmatpush1.msra.mxu0 0.0
      %2412 = vmatprep.subr.mxu0 0.0
      %2413 = vmatpush1.msra.mxu0 0.0
      %2414 = vmatprep.subr.mxu0 0.0
      %2415 = vmatpush1.msra.mxu0 0.0
      %2416 = vmatprep.subr.mxu0 0.0
      %2417 = vmatpush1.msra.mxu0 0.0
      %2418 = vmatprep.subr.mxu0 0.0
      %2419 = vmatpush1.msra.mxu0 0.0
      %2420 = vmatprep.subr.mxu0 0.0
      %2421 = vmatpush1.msra.mxu0 0.0
      %2422 = vmatprep.subr.mxu0 0.0
      %2423 = vmatpush1.msra.mxu0 0.0
      %2424 = vmatprep.subr.mxu0 0.0
      %2425 = vmatpush1.msra.mxu0 0.0
      %2426 = vmatprep.subr.mxu0 0.0
      %2427 = vmatpush1.msra.mxu0 0.0
      %2428 = vmatprep.subr.mxu0 0.0
      %2429 = vmatpush1.msra.mxu0 0.0
      %2430 = vmatprep.subr.mxu0 0.0
      %2431 = vmatpush1.msra.mxu0 0.0
      %2432 = vmatprep.subr.mxu0 0.0
      %2433 = vmatpush1.msra.mxu0 0.0
      %2434 = vmatprep.subr.mxu0 0.0
      %2435 = vmatpush1.msra.mxu0 0.0
      %2436 = vmatprep.subr.mxu0 0.0
      %2437 = vmatpush1.msra.mxu0 0.0
      %2438 = vmatprep.subr.mxu0 0.0
      %2439 = vmatpush1.msra.mxu0 0.0
      %2440 = vmatprep.subr.mxu0 0.0
      %2441 = vmatpush1.msra.mxu0 0.0
      %2442 = vmatprep.subr.mxu0 0.0
      %2443 = vmatpush1.msra.mxu0 0.0
      %2444 = vmatprep.subr.mxu0 0.0
      %2445 = vmatpush1.msra.mxu0 0.0
      %2446 = vmatprep.subr.mxu0 0.0
      %2447 = vmatpush1.msra.mxu0 0.0
      %2448 = vmatprep.subr.mxu0 0.0
      %2449 = vmatpush1.msra.mxu0 0.0
      %2450 = vmatprep.subr.mxu0 0.0
      %2451 = vmatpush1.msra.mxu0 0.0
      %2452 = vmatprep.subr.mxu0 0.0
      %2453 = vmatpush1.msra.mxu0 0.0
      %2454 = vmatprep.subr.mxu0 0.0
      %2455 = vmatpush1.msra.mxu0 0.0
      %2456 = vmatprep.mubr.f32.mxu0 0.0
      %2457 = vmatmul.mubr.f32.gmra.mrb[0].mxu0 %v410
      %v2458 = vpop.f32.mrb[0].mxu0
      %v2459 = vadd.f32 %v371, %v2458
      %v2460 = vpop.f32.mrb[0].mxu0
      %2461 = vmatprep.mubr.f32.mxu0 0.0
      %2462 = vmatmul.mubr.f32.gmra.mrb[0].mxu0 %v413
      %v2463 = vpop.f32.mrb[0].mxu0
      %v2464 = vadd.f32 %v376, %v2463
      %v2465 = vpop.f32.mrb[0].mxu0
      %2466 = vmatprep.mubr.f32.mxu0 0.0
      %2467 = vmatmul.mubr.f32.gmra.mrb[0].mxu0 %v416
      %v2468 = vpop.f32.mrb[0].mxu0
      %v2469 = vadd.f32 %v381, %v2468
      %v2470 = vpop.f32.mrb[0].mxu0
      %2471 = vmatprep.mubr.f32.mxu0 0.0
      %2472 = vmatmul.mubr.f32.gmra.mrb[0].mxu0 %v419
      %v2473 = vpop.f32.mrb[0].mxu0
      %v2474 = vadd.f32 %v386, %v2473
      %v2475 = vpop.f32.mrb[0].mxu0
      %2476 = vmatprep.mubr.f32.mxu0 0.0
      %2477 = vmatmul.mubr.f32.gmra.mrb[0].mxu0 %v422
      %v2478 = vpop.f32.mrb[0].mxu0
      %v2479 = vadd.f32 %v391, %v2478
      %v2480 = vpop.f32.mrb[0].mxu0
      %2481 = vmatprep.mubr.f32.mxu0 0.0
      %2482 = vmatmul.mubr.f32.gmra.mrb[0].mxu0 %v425
      %v2483 = vpop.f32.mrb[0].mxu0
      %v2484 = vadd.f32 %v396, %v2483
      %v2485 = vpop.f32.mrb[0].mxu0
      %2486 = vmatprep.mubr.f32.mxu0 0.0
      %2487 = vmatmul.mubr.f32.gmra.mrb[0].mxu0 %v428
      %v2488 = vpop.f32.mrb[0].mxu0
      %v2489 = vadd.f32 %v401, %v2488
      %v2490 = vpop.f32.mrb[0].mxu0
      %2491 = vmatprep.mubr.f32.mxu0 0.0
      %2492 = vmatmul.mubr.f32.gmra.mrb[0].mxu0 %v431
      %v2493 = vpop.f32.mrb[0].mxu0
      %v2494 = vadd.f32 %v406, %v2493
      %v2495 = vpop.f32.mrb[0].mxu0
      %2496 = vdwg.mxu0
      %vm2497 = vcmp.gt.f32.partialorder %v2459, 0.0
      %vm2498 = vcmp.gt.f32.partialorder %v2464, 0.0
      %vm2499 = vcmp.gt.f32.partialorder %v2469, 0.0
      %vm2500 = vcmp.gt.f32.partialorder %v2474, 0.0
      %vm2501 = vcmp.gt.f32.partialorder %v2479, 0.0
      %vm2502 = vcmp.gt.f32.partialorder %v2484, 0.0
      %vm2503 = vcmp.gt.f32.partialorder %v2489, 0.0
      %vm2504 = vcmp.gt.f32.partialorder %v2494, 0.0
      %v2505 = vmul.f32 %v2459, 0.2
      %v2506 = vmul.f32 %v2464, 0.2
      %v2507 = vmul.f32 %v2469, 0.2
      %v2508 = vmul.f32 %v2474, 0.2
      %v2509 = vmul.f32 %v2479, 0.2
      %v2510 = vmul.f32 %v2484, 0.2
      %v2511 = vmul.f32 %v2489, 0.2
      %v2512 = vmul.f32 %v2494, 0.2
      %v2513 = vsel %vm2497, %v2459, %v2505
      %v2514 = vsel %vm2498, %v2464, %v2506
      %v2515 = vsel %vm2499, %v2469, %v2507
      %v2516 = vsel %vm2500, %v2474, %v2508
      %v2517 = vsel %vm2501, %v2479, %v2509
      %v2518 = vsel %vm2502, %v2484, %v2510
      %v2519 = vsel %vm2503, %v2489, %v2511
      %v2520 = vsel %vm2504, %v2494, %v2512
      %v2521 = vpack.c.bf16 %v2514, %v2513
      %v2522 = vpack.c.bf16 %v2516, %v2515
      %v2523 = vpack.c.bf16 %v2518, %v2517
      %v2524 = vpack.c.bf16 %v2520, %v2519
      %2525 = vmatprep.subr.bf16.mxu0 0
      %2526 = vmatpush1.bf16.msra.mxu0 %v2521
      %2527 = vmatprep.subr.bf16.mxu0 0
      %2528 = vmatpush1.bf16.msra.mxu0 %v2522
      %2529 = vmatprep.subr.bf16.mxu0 0
      %2530 = vmatpush1.bf16.msra.mxu0 %v2523
      %2531 = vmatprep.subr.bf16.mxu0 0
      %2532 = vmatpush1.bf16.msra.mxu0 %v2524
      %2533 = vmatprep.subr.bf16.mxu0 0
      %2534 = vmatpush1.bf16.msra.mxu0 0
      %2535 = vmatprep.subr.bf16.mxu0 0
      %2536 = vmatpush1.bf16.msra.mxu0 0
      %2537 = vmatprep.subr.bf16.mxu0 0
      %2538 = vmatpush1.bf16.msra.mxu0 0
      %2539 = vmatprep.subr.bf16.mxu0 0
      %2540 = vmatpush1.bf16.msra.mxu0 0
      %2541 = vmatprep.subr.bf16.mxu0 0
      %2542 = vmatpush1.bf16.msra.mxu0 0
      %2543 = vmatprep.subr.bf16.mxu0 0
      %2544 = vmatpush1.bf16.msra.mxu0 0
      %2545 = vmatprep.subr.bf16.mxu0 0
      %2546 = vmatpush1.bf16.msra.mxu0 0
      %2547 = vmatprep.subr.bf16.mxu0 0
      %2548 = vmatpush1.bf16.msra.mxu0 0
      %2549 = vmatprep.subr.bf16.mxu0 0
      %2550 = vmatpush1.bf16.msra.mxu0 0
      %2551 = vmatprep.subr.bf16.mxu0 0
      %2552 = vmatpush1.bf16.msra.mxu0 0
      %2553 = vmatprep.subr.bf16.mxu0 0
      %2554 = vmatpush1.bf16.msra.mxu0 0
      %2555 = vmatprep.subr.bf16.mxu0 0
      %2556 = vmatpush1.bf16.msra.mxu0 0
      %2557 = vmatprep.mubr.bf16.mxu0 0
      %2558 = vmatmul.mubr.bf16.gmra.mrb[0].mxu0 %v724
      %v2559 = vpop.f32.mrb[0].mxu0
      %v2560 = vadd.f32 %v605, %v2559
      %v2561 = vpop.f32.mrb[0].mxu0
      %v2562 = vpop.f32.mrb[0].mxu0
      %v2563 = vadd.f32 %v610, %v2562
      %v2564 = vpop.f32.mrb[0].mxu0
      %2565 = vmatprep.mubr.bf16.mxu0 0
      %2566 = vmatmul.mubr.bf16.gmra.mrb[0].mxu0 %v727
      %v2567 = vpop.f32.mrb[0].mxu0
      %v2568 = vadd.f32 %v615, %v2567
      %v2569 = vpop.f32.mrb[0].mxu0
      %v2570 = vpop.f32.mrb[0].mxu0
      %v2571 = vadd.f32 %v620, %v2570
      %v2572 = vpop.f32.mrb[0].mxu0
      %2573 = vmatprep.mubr.bf16.mxu0 0
      %2574 = vmatmul.mubr.bf16.gmra.mrb[0].mxu0 %v730
      %v2575 = vpop.f32.mrb[0].mxu0
      %v2576 = vadd.f32 %v625, %v2575
      %v2577 = vpop.f32.mrb[0].mxu0
      %v2578 = vpop.f32.mrb[0].mxu0
      %v2579 = vadd.f32 %v630, %v2578
      %v2580 = vpop.f32.mrb[0].mxu0
      %2581 = vmatprep.mubr.bf16.mxu0 0
      %2582 = vmatmul.mubr.bf16.gmra.mrb[0].mxu0 %v733
      %v2583 = vpop.f32.mrb[0].mxu0
      %v2584 = vadd.f32 %v635, %v2583
      %v2585 = vpop.f32.mrb[0].mxu0
      %v2586 = vpop.f32.mrb[0].mxu0
      %v2587 = vadd.f32 %v640, %v2586
      %v2588 = vpop.f32.mrb[0].mxu0
      %2589 = vmatprep.mubr.bf16.mxu0 0
      %2590 = vmatmul.mubr.bf16.gmra.mrb[0].mxu0 %v736
      %v2591 = vpop.f32.mrb[0].mxu0
      %v2592 = vadd.f32 %v645, %v2591
      %v2593 = vpop.f32.mrb[0].mxu0
      %v2594 = vpop.f32.mrb[0].mxu0
      %v2595 = vadd.f32 %v650, %v2594
      %v2596 = vpop.f32.mrb[0].mxu0
      %2597 = vmatprep.mubr.bf16.mxu0 0
      %2598 = vmatmul.mubr.bf16.gmra.mrb[0].mxu0 %v739
      %v2599 = vpop.f32.mrb[0].mxu0
      %v2600 = vadd.f32 %v655, %v2599
      %v2601 = vpop.f32.mrb[0].mxu0
      %v2602 = vpop.f32.mrb[0].mxu0
      %v2603 = vadd.f32 %v660, %v2602
      %v2604 = vpop.f32.mrb[0].mxu0
      %2605 = vmatprep.mubr.bf16.mxu0 0
      %2606 = vmatmul.mubr.bf16.gmra.mrb[0].mxu0 %v742
      %v2607 = vpop.f32.mrb[0].mxu0
      %v2608 = vadd.f32 %v665, %v2607
      %v2609 = vpop.f32.mrb[0].mxu0
      %v2610 = vpop.f32.mrb[0].mxu0
      %v2611 = vadd.f32 %v670, %v2610
      %v2612 = vpop.f32.mrb[0].mxu0
      %2613 = vmatprep.mubr.bf16.mxu0 0
      %2614 = vmatmul.mubr.bf16.gmra.mrb[0].mxu0 %v745
      %v2615 = vpop.f32.mrb[0].mxu0
      %v2616 = vadd.f32 %v675, %v2615
      %v2617 = vpop.f32.mrb[0].mxu0
      %v2618 = vpop.f32.mrb[0].mxu0
      %v2619 = vadd.f32 %v680, %v2618
      %v2620 = vpop.f32.mrb[0].mxu0
      %2621 = vdwg.mxu0
      %vm2622 = vcmp.gt.f32.partialorder %v2560, 0.0
      %vm2623 = vcmp.gt.f32.partialorder %v2563, 0.0
      %vm2624 = vcmp.gt.f32.partialorder %v2568, 0.0
      %vm2625 = vcmp.gt.f32.partialorder %v2571, 0.0
      %vm2626 = vcmp.gt.f32.partialorder %v2576, 0.0
      %vm2627 = vcmp.gt.f32.partialorder %v2579, 0.0
      %vm2628 = vcmp.gt.f32.partialorder %v2584, 0.0
      %vm2629 = vcmp.gt.f32.partialorder %v2587, 0.0
      %vm2630 = vcmp.gt.f32.partialorder %v2592, 0.0
      %vm2631 = vcmp.gt.f32.partialorder %v2595, 0.0
      %vm2632 = vcmp.gt.f32.partialorder %v2600, 0.0
      %vm2633 = vcmp.gt.f32.partialorder %v2603, 0.0
      %vm2634 = vcmp.gt.f32.partialorder %v2608, 0.0
      %vm2635 = vcmp.gt.f32.partialorder %v2611, 0.0
      %vm2636 = vcmp.gt.f32.partialorder %v2616, 0.0
      %vm2637 = vcmp.gt.f32.partialorder %v2619, 0.0
      %v2638 = vmul.f32 %v2560, 0.2
      %v2639 = vmul.f32 %v2563, 0.2
      %v2640 = vmul.f32 %v2568, 0.2
      %v2641 = vmul.f32 %v2571, 0.2
      %v2642 = vmul.f32 %v2576, 0.2
      %v2643 = vmul.f32 %v2579, 0.2
      %v2644 = vmul.f32 %v2584, 0.2
      %v2645 = vmul.f32 %v2587, 0.2
      %v2646 = vmul.f32 %v2592, 0.2
      %v2647 = vmul.f32 %v2595, 0.2
      %v2648 = vmul.f32 %v2600, 0.2
      %v2649 = vmul.f32 %v2603, 0.2
      %v2650 = vmul.f32 %v2608, 0.2
      %v2651 = vmul.f32 %v2611, 0.2
      %v2652 = vmul.f32 %v2616, 0.2
      %v2653 = vmul.f32 %v2619, 0.2
      %v2654 = vsel %vm2622, %v2560, %v2638
      %v2655 = vsel %vm2623, %v2563, %v2639
      %v2656 = vsel %vm2624, %v2568, %v2640
      %v2657 = vsel %vm2625, %v2571, %v2641
      %v2658 = vsel %vm2626, %v2576, %v2642
      %v2659 = vsel %vm2627, %v2579, %v2643
      %v2660 = vsel %vm2628, %v2584, %v2644
      %v2661 = vsel %vm2629, %v2587, %v2645
      %v2662 = vsel %vm2630, %v2592, %v2646
      %v2663 = vsel %vm2631, %v2595, %v2647
      %v2664 = vsel %vm2632, %v2600, %v2648
      %v2665 = vsel %vm2633, %v2603, %v2649
      %v2666 = vsel %vm2634, %v2608, %v2650
      %v2667 = vsel %vm2635, %v2611, %v2651
      %v2668 = vsel %vm2636, %v2616, %v2652
      %v2669 = vsel %vm2637, %v2619, %v2653
      %v2670 = vmax.f32 %v2371, %v2654
      %v2671 = vmax.f32 %v2372, %v2655
      %v2672 = vmax.f32 %v2373, %v2656
      %v2673 = vmax.f32 %v2374, %v2657
      %v2674 = vmax.f32 %v2375, %v2658
      %v2675 = vmax.f32 %v2376, %v2659
      %v2676 = vmax.f32 %v2377, %v2660
      %v2677 = vmax.f32 %v2378, %v2661
      %v2678 = vmax.f32 %v2379, %v2662
      %v2679 = vmax.f32 %v2380, %v2663
      %v2680 = vmax.f32 %v2381, %v2664
      %v2681 = vmax.f32 %v2382, %v2665
      %v2682 = vmax.f32 %v2383, %v2666
      %v2683 = vmax.f32 %v2384, %v2667
      %v2684 = vmax.f32 %v2385, %v2668
      %v2685 = vmax.f32 %v2386, %v2669
      %s2686 = scalar_lea.vmem %s336, 56
      %v2687 = vld [vmem:[%s2686] sm:$0x3f]
      %v2689 = vsel %vm433, %v2687, 0
      %2691 = vmatprep.subr.mxu0 0.0
      %2692 = vmatpush1.msra.mxu0 %v2689
      %2693 = vmatprep.subr.mxu0 0.0
      %2694 = vmatpush1.msra.mxu0 0.0
      %2695 = vmatprep.subr.mxu0 0.0
      %2696 = vmatpush1.msra.mxu0 0.0
      %2697 = vmatprep.subr.mxu0 0.0
      %2698 = vmatpush1.msra.mxu0 0.0
      %2699 = vmatprep.subr.mxu0 0.0
      %2700 = vmatpush1.msra.mxu0 0.0
      %2701 = vmatprep.subr.mxu0 0.0
      %2702 = vmatpush1.msra.mxu0 0.0
      %2703 = vmatprep.subr.mxu0 0.0
      %2704 = vmatpush1.msra.mxu0 0.0
      %2705 = vmatprep.subr.mxu0 0.0
      %2706 = vmatpush1.msra.mxu0 0.0
      %2707 = vmatprep.subr.mxu0 0.0
      %2708 = vmatpush1.msra.mxu0 0.0
      %2709 = vmatprep.subr.mxu0 0.0
      %2710 = vmatpush1.msra.mxu0 0.0
      %2711 = vmatprep.subr.mxu0 0.0
      %2712 = vmatpush1.msra.mxu0 0.0
      %2713 = vmatprep.subr.mxu0 0.0
      %2714 = vmatpush1.msra.mxu0 0.0
      %2715 = vmatprep.subr.mxu0 0.0
      %2716 = vmatpush1.msra.mxu0 0.0
      %2717 = vmatprep.subr.mxu0 0.0
      %2718 = vmatpush1.msra.mxu0 0.0
      %2719 = vmatprep.subr.mxu0 0.0
      %2720 = vmatpush1.msra.mxu0 0.0
      %2721 = vmatprep.subr.mxu0 0.0
      %2722 = vmatpush1.msra.mxu0 0.0
      %2723 = vmatprep.subr.mxu0 0.0
      %2724 = vmatpush1.msra.mxu0 0.0
      %2725 = vmatprep.subr.mxu0 0.0
      %2726 = vmatpush1.msra.mxu0 0.0
      %2727 = vmatprep.subr.mxu0 0.0
      %2728 = vmatpush1.msra.mxu0 0.0
      %2729 = vmatprep.subr.mxu0 0.0
      %2730 = vmatpush1.msra.mxu0 0.0
      %2731 = vmatprep.subr.mxu0 0.0
      %2732 = vmatpush1.msra.mxu0 0.0
      %2733 = vmatprep.subr.mxu0 0.0
      %2734 = vmatpush1.msra.mxu0 0.0
      %2735 = vmatprep.subr.mxu0 0.0
      %2736 = vmatpush1.msra.mxu0 0.0
      %2737 = vmatprep.subr.mxu0 0.0
      %2738 = vmatpush1.msra.mxu0 0.0
      %2739 = vmatprep.subr.mxu0 0.0
      %2740 = vmatpush1.msra.mxu0 0.0
      %2741 = vmatprep.subr.mxu0 0.0
      %2742 = vmatpush1.msra.mxu0 0.0
      %2743 = vmatprep.subr.mxu0 0.0
      %2744 = vmatpush1.msra.mxu0 0.0
      %2745 = vmatprep.subr.mxu0 0.0
      %2746 = vmatpush1.msra.mxu0 0.0
      %2747 = vmatprep.subr.mxu0 0.0
      %2748 = vmatpush1.msra.mxu0 0.0
      %2749 = vmatprep.subr.mxu0 0.0
      %2750 = vmatpush1.msra.mxu0 0.0
      %2751 = vmatprep.subr.mxu0 0.0
      %2752 = vmatpush1.msra.mxu0 0.0
      %2753 = vmatprep.subr.mxu0 0.0
      %2754 = vmatpush1.msra.mxu0 0.0
      %2755 = vmatprep.mubr.f32.mxu0 0.0
      %2756 = vmatmul.mubr.f32.gmra.mrb[0].mxu0 %v410
      %v2757 = vpop.f32.mrb[0].mxu0
      %v2758 = vadd.f32 %v371, %v2757
      %v2759 = vpop.f32.mrb[0].mxu0
      %2760 = vmatprep.mubr.f32.mxu0 0.0
      %2761 = vmatmul.mubr.f32.gmra.mrb[0].mxu0 %v413
      %v2762 = vpop.f32.mrb[0].mxu0
      %v2763 = vadd.f32 %v376, %v2762
      %v2764 = vpop.f32.mrb[0].mxu0
      %2765 = vmatprep.mubr.f32.mxu0 0.0
      %2766 = vmatmul.mubr.f32.gmra.mrb[0].mxu0 %v416
      %v2767 = vpop.f32.mrb[0].mxu0
      %v2768 = vadd.f32 %v381, %v2767
      %v2769 = vpop.f32.mrb[0].mxu0
      %2770 = vmatprep.mubr.f32.mxu0 0.0
      %2771 = vmatmul.mubr.f32.gmra.mrb[0].mxu0 %v419
      %v2772 = vpop.f32.mrb[0].mxu0
      %v2773 = vadd.f32 %v386, %v2772
      %v2774 = vpop.f32.mrb[0].mxu0
      %2775 = vmatprep.mubr.f32.mxu0 0.0
      %2776 = vmatmul.mubr.f32.gmra.mrb[0].mxu0 %v422
      %v2777 = vpop.f32.mrb[0].mxu0
      %v2778 = vadd.f32 %v391, %v2777
      %v2779 = vpop.f32.mrb[0].mxu0
      %2780 = vmatprep.mubr.f32.mxu0 0.0
      %2781 = vmatmul.mubr.f32.gmra.mrb[0].mxu0 %v425
      %v2782 = vpop.f32.mrb[0].mxu0
      %v2783 = vadd.f32 %v396, %v2782
      %v2784 = vpop.f32.mrb[0].mxu0
      %2785 = vmatprep.mubr.f32.mxu0 0.0
      %2786 = vmatmul.mubr.f32.gmra.mrb[0].mxu0 %v428
      %v2787 = vpop.f32.mrb[0].mxu0
      %v2788 = vadd.f32 %v401, %v2787
      %v2789 = vpop.f32.mrb[0].mxu0
      %2790 = vmatprep.mubr.f32.mxu0 0.0
      %2791 = vmatmul.mubr.f32.gmra.mrb[0].mxu0 %v431
      %v2792 = vpop.f32.mrb[0].mxu0
      %v2793 = vadd.f32 %v406, %v2792
      %v2794 = vpop.f32.mrb[0].mxu0
      %2795 = vdwg.mxu0
      %vm2796 = vcmp.gt.f32.partialorder %v2758, 0.0
      %vm2797 = vcmp.gt.f32.partialorder %v2763, 0.0
      %vm2798 = vcmp.gt.f32.partialorder %v2768, 0.0
      %vm2799 = vcmp.gt.f32.partialorder %v2773, 0.0
      %vm2800 = vcmp.gt.f32.partialorder %v2778, 0.0
      %vm2801 = vcmp.gt.f32.partialorder %v2783, 0.0
      %vm2802 = vcmp.gt.f32.partialorder %v2788, 0.0
      %vm2803 = vcmp.gt.f32.partialorder %v2793, 0.0
      %v2804 = vmul.f32 %v2758, 0.2
      %v2805 = vmul.f32 %v2763, 0.2
      %v2806 = vmul.f32 %v2768, 0.2
      %v2807 = vmul.f32 %v2773, 0.2
      %v2808 = vmul.f32 %v2778, 0.2
      %v2809 = vmul.f32 %v2783, 0.2
      %v2810 = vmul.f32 %v2788, 0.2
      %v2811 = vmul.f32 %v2793, 0.2
      %v2812 = vsel %vm2796, %v2758, %v2804
      %v2813 = vsel %vm2797, %v2763, %v2805
      %v2814 = vsel %vm2798, %v2768, %v2806
      %v2815 = vsel %vm2799, %v2773, %v2807
      %v2816 = vsel %vm2800, %v2778, %v2808
      %v2817 = vsel %vm2801, %v2783, %v2809
      %v2818 = vsel %vm2802, %v2788, %v2810
      %v2819 = vsel %vm2803, %v2793, %v2811
      %v2820 = vpack.c.bf16 %v2813, %v2812
      %v2821 = vpack.c.bf16 %v2815, %v2814
      %v2822 = vpack.c.bf16 %v2817, %v2816
      %v2823 = vpack.c.bf16 %v2819, %v2818
      %2824 = vmatprep.subr.bf16.mxu0 0
      %2825 = vmatpush1.bf16.msra.mxu0 %v2820
      %2826 = vmatprep.subr.bf16.mxu0 0
      %2827 = vmatpush1.bf16.msra.mxu0 %v2821
      %2828 = vmatprep.subr.bf16.mxu0 0
      %2829 = vmatpush1.bf16.msra.mxu0 %v2822
      %2830 = vmatprep.subr.bf16.mxu0 0
      %2831 = vmatpush1.bf16.msra.mxu0 %v2823
      %2832 = vmatprep.subr.bf16.mxu0 0
      %2833 = vmatpush1.bf16.msra.mxu0 0
      %2834 = vmatprep.subr.bf16.mxu0 0
      %2835 = vmatpush1.bf16.msra.mxu0 0
      %2836 = vmatprep.subr.bf16.mxu0 0
      %2837 = vmatpush1.bf16.msra.mxu0 0
      %2838 = vmatprep.subr.bf16.mxu0 0
      %2839 = vmatpush1.bf16.msra.mxu0 0
      %2840 = vmatprep.subr.bf16.mxu0 0
      %2841 = vmatpush1.bf16.msra.mxu0 0
      %2842 = vmatprep.subr.bf16.mxu0 0
      %2843 = vmatpush1.bf16.msra.mxu0 0
      %2844 = vmatprep.subr.bf16.mxu0 0
      %2845 = vmatpush1.bf16.msra.mxu0 0
      %2846 = vmatprep.subr.bf16.mxu0 0
      %2847 = vmatpush1.bf16.msra.mxu0 0
      %2848 = vmatprep.subr.bf16.mxu0 0
      %2849 = vmatpush1.bf16.msra.mxu0 0
      %2850 = vmatprep.subr.bf16.mxu0 0
      %2851 = vmatpush1.bf16.msra.mxu0 0
      %2852 = vmatprep.subr.bf16.mxu0 0
      %2853 = vmatpush1.bf16.msra.mxu0 0
      %2854 = vmatprep.subr.bf16.mxu0 0
      %2855 = vmatpush1.bf16.msra.mxu0 0
      %2856 = vmatprep.mubr.bf16.mxu0 0
      %2857 = vmatmul.mubr.bf16.gmra.mrb[0].mxu0 %v724
      %v2858 = vpop.f32.mrb[0].mxu0
      %v2859 = vadd.f32 %v605, %v2858
      %v2860 = vpop.f32.mrb[0].mxu0
      %v2861 = vpop.f32.mrb[0].mxu0
      %v2862 = vadd.f32 %v610, %v2861
      %v2863 = vpop.f32.mrb[0].mxu0
      %2864 = vmatprep.mubr.bf16.mxu0 0
      %2865 = vmatmul.mubr.bf16.gmra.mrb[0].mxu0 %v727
      %v2866 = vpop.f32.mrb[0].mxu0
      %v2867 = vadd.f32 %v615, %v2866
      %v2868 = vpop.f32.mrb[0].mxu0
      %v2869 = vpop.f32.mrb[0].mxu0
      %v2870 = vadd.f32 %v620, %v2869
      %v2871 = vpop.f32.mrb[0].mxu0
      %2872 = vmatprep.mubr.bf16.mxu0 0
      %2873 = vmatmul.mubr.bf16.gmra.mrb[0].mxu0 %v730
      %v2874 = vpop.f32.mrb[0].mxu0
      %v2875 = vadd.f32 %v625, %v2874
      %v2876 = vpop.f32.mrb[0].mxu0
      %v2877 = vpop.f32.mrb[0].mxu0
      %v2878 = vadd.f32 %v630, %v2877
      %v2879 = vpop.f32.mrb[0].mxu0
      %2880 = vmatprep.mubr.bf16.mxu0 0
      %2881 = vmatmul.mubr.bf16.gmra.mrb[0].mxu0 %v733
      %v2882 = vpop.f32.mrb[0].mxu0
      %v2883 = vadd.f32 %v635, %v2882
      %v2884 = vpop.f32.mrb[0].mxu0
      %v2885 = vpop.f32.mrb[0].mxu0
      %v2886 = vadd.f32 %v640, %v2885
      %v2887 = vpop.f32.mrb[0].mxu0
      %2888 = vmatprep.mubr.bf16.mxu0 0
      %2889 = vmatmul.mubr.bf16.gmra.mrb[0].mxu0 %v736
      %v2890 = vpop.f32.mrb[0].mxu0
      %v2891 = vadd.f32 %v645, %v2890
      %v2892 = vpop.f32.mrb[0].mxu0
      %v2893 = vpop.f32.mrb[0].mxu0
      %v2894 = vadd.f32 %v650, %v2893
      %v2895 = vpop.f32.mrb[0].mxu0
      %2896 = vmatprep.mubr.bf16.mxu0 0
      %2897 = vmatmul.mubr.bf16.gmra.mrb[0].mxu0 %v739
      %v2898 = vpop.f32.mrb[0].mxu0
      %v2899 = vadd.f32 %v655, %v2898
      %v2900 = vpop.f32.mrb[0].mxu0
      %v2901 = vpop.f32.mrb[0].mxu0
      %v2902 = vadd.f32 %v660, %v2901
      %v2903 = vpop.f32.mrb[0].mxu0
      %2904 = vmatprep.mubr.bf16.mxu0 0
      %2905 = vmatmul.mubr.bf16.gmra.mrb[0].mxu0 %v742
      %v2906 = vpop.f32.mrb[0].mxu0
      %v2907 = vadd.f32 %v665, %v2906
      %v2908 = vpop.f32.mrb[0].mxu0
      %v2909 = vpop.f32.mrb[0].mxu0
      %v2910 = vadd.f32 %v670, %v2909
      %v2911 = vpop.f32.mrb[0].mxu0
      %2912 = vmatprep.mubr.bf16.mxu0 0
      %2913 = vmatmul.mubr.bf16.gmra.mrb[0].mxu0 %v745
      %v2914 = vpop.f32.mrb[0].mxu0
      %v2915 = vadd.f32 %v675, %v2914
      %v2916 = vpop.f32.mrb[0].mxu0
      %v2917 = vpop.f32.mrb[0].mxu0
      %v2918 = vadd.f32 %v680, %v2917
      %v2919 = vpop.f32.mrb[0].mxu0
      %2920 = vdwg.mxu0
      %vm2921 = vcmp.gt.f32.partialorder %v2859, 0.0
      %vm2922 = vcmp.gt.f32.partialorder %v2862, 0.0
      %vm2923 = vcmp.gt.f32.partialorder %v2867, 0.0
      %vm2924 = vcmp.gt.f32.partialorder %v2870, 0.0
      %vm2925 = vcmp.gt.f32.partialorder %v2875, 0.0
      %vm2926 = vcmp.gt.f32.partialorder %v2878, 0.0
      %vm2927 = vcmp.gt.f32.partialorder %v2883, 0.0
      %vm2928 = vcmp.gt.f32.partialorder %v2886, 0.0
      %vm2929 = vcmp.gt.f32.partialorder %v2891, 0.0
      %vm2930 = vcmp.gt.f32.partialorder %v2894, 0.0
      %vm2931 = vcmp.gt.f32.partialorder %v2899, 0.0
      %vm2932 = vcmp.gt.f32.partialorder %v2902, 0.0
      %vm2933 = vcmp.gt.f32.partialorder %v2907, 0.0
      %vm2934 = vcmp.gt.f32.partialorder %v2910, 0.0
      %vm2935 = vcmp.gt.f32.partialorder %v2915, 0.0
      %vm2936 = vcmp.gt.f32.partialorder %v2918, 0.0
      %v2937 = vmul.f32 %v2859, 0.2
      %v2938 = vmul.f32 %v2862, 0.2
      %v2939 = vmul.f32 %v2867, 0.2
      %v2940 = vmul.f32 %v2870, 0.2
      %v2941 = vmul.f32 %v2875, 0.2
      %v2942 = vmul.f32 %v2878, 0.2
      %v2943 = vmul.f32 %v2883, 0.2
      %v2944 = vmul.f32 %v2886, 0.2
      %v2945 = vmul.f32 %v2891, 0.2
      %v2946 = vmul.f32 %v2894, 0.2
      %v2947 = vmul.f32 %v2899, 0.2
      %v2948 = vmul.f32 %v2902, 0.2
      %v2949 = vmul.f32 %v2907, 0.2
      %v2950 = vmul.f32 %v2910, 0.2
      %v2951 = vmul.f32 %v2915, 0.2
      %v2952 = vmul.f32 %v2918, 0.2
      %v2953 = vsel %vm2921, %v2859, %v2937
      %v2954 = vsel %vm2922, %v2862, %v2938
      %v2955 = vsel %vm2923, %v2867, %v2939
      %v2956 = vsel %vm2924, %v2870, %v2940
      %v2957 = vsel %vm2925, %v2875, %v2941
      %v2958 = vsel %vm2926, %v2878, %v2942
      %v2959 = vsel %vm2927, %v2883, %v2943
      %v2960 = vsel %vm2928, %v2886, %v2944
      %v2961 = vsel %vm2929, %v2891, %v2945
      %v2962 = vsel %vm2930, %v2894, %v2946
      %v2963 = vsel %vm2931, %v2899, %v2947
      %v2964 = vsel %vm2932, %v2902, %v2948
      %v2965 = vsel %vm2933, %v2907, %v2949
      %v2966 = vsel %vm2934, %v2910, %v2950
      %v2967 = vsel %vm2935, %v2915, %v2951
      %v2968 = vsel %vm2936, %v2918, %v2952
      %v2969 = vmax.f32 %v2670, %v2953
      %v2970 = vmax.f32 %v2671, %v2954
      %v2971 = vmax.f32 %v2672, %v2955
      %v2972 = vmax.f32 %v2673, %v2956
      %v2973 = vmax.f32 %v2674, %v2957
      %v2974 = vmax.f32 %v2675, %v2958
      %v2975 = vmax.f32 %v2676, %v2959
      %v2976 = vmax.f32 %v2677, %v2960
      %v2977 = vmax.f32 %v2678, %v2961
      %v2978 = vmax.f32 %v2679, %v2962
      %v2979 = vmax.f32 %v2680, %v2963
      %v2980 = vmax.f32 %v2681, %v2964
      %v2981 = vmax.f32 %v2682, %v2965
      %v2982 = vmax.f32 %v2683, %v2966
      %v2983 = vmax.f32 %v2684, %v2967
      %v2984 = vmax.f32 %v2685, %v2968
      %v2985 = vld [vmem:[%s5] sm:$0xf]
      %v2986 = vld [vmem:[%s5 + $0x4] sm:$0xf]
      %v2987 = vld [vmem:[%s5 + $0x8] sm:$0xf]
      %v2988 = vld [vmem:[%s5 + $0xc] sm:$0xf]
      %v2989 = vld [vmem:[%s5 + $0x10] sm:$0xf]
      %v2990 = vld [vmem:[%s5 + $0x14] sm:$0xf]
      %v2991 = vld [vmem:[%s5 + $0x18] sm:$0xf]
      %v2992 = vld [vmem:[%s5 + $0x1c] sm:$0xf]
      %v2993 = vld [vmem:[%s5 + $0x20] sm:$0xf]
      %v2994 = vld [vmem:[%s5 + $0x24] sm:$0xf]
      %v2995 = vld [vmem:[%s5 + $0x28] sm:$0xf]
      %v2996 = vld [vmem:[%s5 + $0x2c] sm:$0xf]
      %v2997 = vld [vmem:[%s5 + $0x30] sm:$0xf]
      %v2998 = vld [vmem:[%s5 + $0x34] sm:$0xf]
      %v2999 = vld [vmem:[%s5 + $0x38] sm:$0xf]
      %v3000 = vld [vmem:[%s5 + $0x3c] sm:$0xf]
      %v3001 = vld [vmem:[%s5 + $0x40] sm:$0xf]
      %v3002 = vld [vmem:[%s5 + $0x44] sm:$0xf]
      %v3003 = vld [vmem:[%s5 + $0x48] sm:$0xf]
      %v3004 = vld [vmem:[%s5 + $0x4c] sm:$0xf]
      %v3005 = vld [vmem:[%s5 + $0x50] sm:$0xf]
      %v3006 = vld [vmem:[%s5 + $0x54] sm:$0xf]
      %v3007 = vld [vmem:[%s5 + $0x58] sm:$0xf]
      %v3008 = vld [vmem:[%s5 + $0x5c] sm:$0xf]
      %v3009 = vld [vmem:[%s5 + $0x60] sm:$0xf]
      %v3010 = vld [vmem:[%s5 + $0x64] sm:$0xf]
      %v3011 = vld [vmem:[%s5 + $0x68] sm:$0xf]
      %v3012 = vld [vmem:[%s5 + $0x6c] sm:$0xf]
      %v3013 = vld [vmem:[%s5 + $0x70] sm:$0xf]
      %v3014 = vld [vmem:[%s5 + $0x74] sm:$0xf]
      %v3015 = vld [vmem:[%s5 + $0x78] sm:$0xf]
      %v3016 = vld [vmem:[%s5 + $0x7c] sm:$0xf]
      %v3017 = vpack.c.bf16 %v2970, %v2969
      %v3018 = vpack.c.bf16 %v2972, %v2971
      %v3019 = vpack.c.bf16 %v2974, %v2973
      %v3020 = vpack.c.bf16 %v2976, %v2975
      %v3021 = vpack.c.bf16 %v2978, %v2977
      %v3022 = vpack.c.bf16 %v2980, %v2979
      %v3023 = vpack.c.bf16 %v2982, %v2981
      %v3024 = vpack.c.bf16 %v2984, %v2983
      %v3025 = vld [vmem:[%s6] sm:$0xff]
      %v3026 = vld [vmem:[%s6 + $0x8] sm:$0xff]
      %v3027 = vld [vmem:[%s6 + $0x10] sm:$0xff]
      %v3028 = vld [vmem:[%s6 + $0x18] sm:$0xff]
      %v3029 = vld [vmem:[%s6 + $0x20] sm:$0xff]
      %v3030 = vld [vmem:[%s6 + $0x28] sm:$0xff]
      %v3031 = vld [vmem:[%s6 + $0x30] sm:$0xff]
      %v3032 = vld [vmem:[%s6 + $0x38] sm:$0xff]
      %v3033 = vld [vmem:[%s6 + $0x40] sm:$0xff]
      %v3034 = vld [vmem:[%s6 + $0x48] sm:$0xff]
      %v3035 = vld [vmem:[%s6 + $0x50] sm:$0xff]
      %v3036 = vld [vmem:[%s6 + $0x58] sm:$0xff]
      %v3037 = vld [vmem:[%s6 + $0x60] sm:$0xff]
      %v3038 = vld [vmem:[%s6 + $0x68] sm:$0xff]
      %v3039 = vld [vmem:[%s6 + $0x70] sm:$0xff]
      %v3040 = vld [vmem:[%s6 + $0x78] sm:$0xff]
      %v3041 = vld [vmem:[%s6 + $0x80] sm:$0xff]
      %v3042 = vld [vmem:[%s6 + $0x88] sm:$0xff]
      %v3043 = vld [vmem:[%s6 + $0x90] sm:$0xff]
      %v3044 = vld [vmem:[%s6 + $0x98] sm:$0xff]
      %v3045 = vld [vmem:[%s6 + $0xa0] sm:$0xff]
      %v3046 = vld [vmem:[%s6 + $0xa8] sm:$0xff]
      %v3047 = vld [vmem:[%s6 + $0xb0] sm:$0xff]
      %v3048 = vld [vmem:[%s6 + $0xb8] sm:$0xff]
      %v3049 = vld [vmem:[%s6 + $0xc0] sm:$0xff]
      %v3050 = vld [vmem:[%s6 + $0xc8] sm:$0xff]
      %v3051 = vld [vmem:[%s6 + $0xd0] sm:$0xff]
      %v3052 = vld [vmem:[%s6 + $0xd8] sm:$0xff]
      %v3053 = vld [vmem:[%s6 + $0xe0] sm:$0xff]
      %v3054 = vld [vmem:[%s6 + $0xe8] sm:$0xff]
      %v3055 = vld [vmem:[%s6 + $0xf0] sm:$0xff]
      %v3056 = vld [vmem:[%s6 + $0xf8] sm:$0xff]
      %3058 = vset.pattern.permute.xlu0 0
      %3059 = vperm.xlu0 %3058, %v3025
      %v3060 = vpop.permute.xlu0 %3059
      %3063 = vset.pattern.permute.xlu0 0
      %3064 = vperm.xlu0 %3063, %v3026
      %v3065 = vpop.permute.xlu0 %3064
      %3068 = vset.pattern.permute.xlu0 0
      %3069 = vperm.xlu0 %3068, %v3027
      %v3070 = vpop.permute.xlu0 %3069
      %3073 = vset.pattern.permute.xlu0 0
      %3074 = vperm.xlu0 %3073, %v3028
      %v3075 = vpop.permute.xlu0 %3074
      %3078 = vset.pattern.permute.xlu0 0
      %3079 = vperm.xlu0 %3078, %v3029
      %v3080 = vpop.permute.xlu0 %3079
      %3083 = vset.pattern.permute.xlu0 0
      %3084 = vperm.xlu0 %3083, %v3030
      %v3085 = vpop.permute.xlu0 %3084
      %3088 = vset.pattern.permute.xlu0 0
      %3089 = vperm.xlu0 %3088, %v3031
      %v3090 = vpop.permute.xlu0 %3089
      %3093 = vset.pattern.permute.xlu0 0
      %3094 = vperm.xlu0 %3093, %v3032
      %v3095 = vpop.permute.xlu0 %3094
      %3098 = vset.pattern.permute.xlu0 0
      %3099 = vperm.xlu0 %3098, %v3033
      %v3100 = vpop.permute.xlu0 %3099
      %3103 = vset.pattern.permute.xlu0 0
      %3104 = vperm.xlu0 %3103, %v3034
      %v3105 = vpop.permute.xlu0 %3104
      %3108 = vset.pattern.permute.xlu0 0
      %3109 = vperm.xlu0 %3108, %v3035
      %v3110 = vpop.permute.xlu0 %3109
      %3113 = vset.pattern.permute.xlu0 0
      %3114 = vperm.xlu0 %3113, %v3036
      %v3115 = vpop.permute.xlu0 %3114
      %3118 = vset.pattern.permute.xlu0 0
      %3119 = vperm.xlu0 %3118, %v3037
      %v3120 = vpop.permute.xlu0 %3119
      %3123 = vset.pattern.permute.xlu0 0
      %3124 = vperm.xlu0 %3123, %v3038
      %v3125 = vpop.permute.xlu0 %3124
      %3128 = vset.pattern.permute.xlu0 0
      %3129 = vperm.xlu0 %3128, %v3039
      %v3130 = vpop.permute.xlu0 %3129
      %3133 = vset.pattern.permute.xlu0 0
      %3134 = vperm.xlu0 %3133, %v3040
      %v3135 = vpop.permute.xlu0 %3134
      %3138 = vset.pattern.permute.xlu0 0
      %3139 = vperm.xlu0 %3138, %v3041
      %v3140 = vpop.permute.xlu0 %3139
      %3143 = vset.pattern.permute.xlu0 0
      %3144 = vperm.xlu0 %3143, %v3042
      %v3145 = vpop.permute.xlu0 %3144
      %3148 = vset.pattern.permute.xlu0 0
      %3149 = vperm.xlu0 %3148, %v3043
      %v3150 = vpop.permute.xlu0 %3149
      %3153 = vset.pattern.permute.xlu0 0
      %3154 = vperm.xlu0 %3153, %v3044
      %v3155 = vpop.permute.xlu0 %3154
      %3158 = vset.pattern.permute.xlu0 0
      %3159 = vperm.xlu0 %3158, %v3045
      %v3160 = vpop.permute.xlu0 %3159
      %3163 = vset.pattern.permute.xlu0 0
      %3164 = vperm.xlu0 %3163, %v3046
      %v3165 = vpop.permute.xlu0 %3164
      %3168 = vset.pattern.permute.xlu0 0
      %3169 = vperm.xlu0 %3168, %v3047
      %v3170 = vpop.permute.xlu0 %3169
      %3173 = vset.pattern.permute.xlu0 0
      %3174 = vperm.xlu0 %3173, %v3048
      %v3175 = vpop.permute.xlu0 %3174
      %3178 = vset.pattern.permute.xlu0 0
      %3179 = vperm.xlu0 %3178, %v3049
      %v3180 = vpop.permute.xlu0 %3179
      %3183 = vset.pattern.permute.xlu0 0
      %3184 = vperm.xlu0 %3183, %v3050
      %v3185 = vpop.permute.xlu0 %3184
      %3188 = vset.pattern.permute.xlu0 0
      %3189 = vperm.xlu0 %3188, %v3051
      %v3190 = vpop.permute.xlu0 %3189
      %3193 = vset.pattern.permute.xlu0 0
      %3194 = vperm.xlu0 %3193, %v3052
      %v3195 = vpop.permute.xlu0 %3194
      %3198 = vset.pattern.permute.xlu0 0
      %3199 = vperm.xlu0 %3198, %v3053
      %v3200 = vpop.permute.xlu0 %3199
      %3203 = vset.pattern.permute.xlu0 0
      %3204 = vperm.xlu0 %3203, %v3054
      %v3205 = vpop.permute.xlu0 %3204
      %3208 = vset.pattern.permute.xlu0 0
      %3209 = vperm.xlu0 %3208, %v3055
      %v3210 = vpop.permute.xlu0 %3209
      %3213 = vset.pattern.permute.xlu0 0
      %3214 = vperm.xlu0 %3213, %v3056
      %v3215 = vpop.permute.xlu0 %3214
      %v3249 = vunpack.c.l.b16 %v2985
      %v3250 = vunpack.c.l.b16 %v2986
      %v3251 = vunpack.c.l.b16 %v2987
      %v3252 = vunpack.c.l.b16 %v2988
      %v3253 = vunpack.c.l.b16 %v2989
      %v3254 = vunpack.c.l.b16 %v2990
      %v3255 = vunpack.c.l.b16 %v2991
      %v3256 = vunpack.c.l.b16 %v2992
      %v3257 = vunpack.c.l.b16 %v2993
      %v3258 = vunpack.c.l.b16 %v2994
      %v3259 = vunpack.c.l.b16 %v2995
      %v3260 = vunpack.c.l.b16 %v2996
      %v3261 = vunpack.c.l.b16 %v2997
      %v3262 = vunpack.c.l.b16 %v2998
      %v3263 = vunpack.c.l.b16 %v2999
      %v3264 = vunpack.c.l.b16 %v3000
      %v3265 = vunpack.c.l.b16 %v3001
      %v3266 = vunpack.c.l.b16 %v3002
      %v3267 = vunpack.c.l.b16 %v3003
      %v3268 = vunpack.c.l.b16 %v3004
      %v3269 = vunpack.c.l.b16 %v3005
      %v3270 = vunpack.c.l.b16 %v3006
      %v3271 = vunpack.c.l.b16 %v3007
      %v3272 = vunpack.c.l.b16 %v3008
      %v3273 = vunpack.c.l.b16 %v3009
      %v3274 = vunpack.c.l.b16 %v3010
      %v3275 = vunpack.c.l.b16 %v3011
      %v3276 = vunpack.c.l.b16 %v3012
      %v3277 = vunpack.c.l.b16 %v3013
      %v3278 = vunpack.c.l.b16 %v3014
      %v3279 = vunpack.c.l.b16 %v3015
      %v3280 = vunpack.c.l.b16 %v3016
      %v3281 = vpack.c.b16 %v3250, %v3249
      %v3282 = vpack.c.b16 %v3252, %v3251
      %v3283 = vpack.c.b16 %v3254, %v3253
      %v3284 = vpack.c.b16 %v3256, %v3255
      %v3285 = vpack.c.b16 %v3258, %v3257
      %v3286 = vpack.c.b16 %v3260, %v3259
      %v3287 = vpack.c.b16 %v3262, %v3261
      %v3288 = vpack.c.b16 %v3264, %v3263
      %v3289 = vpack.c.b16 %v3266, %v3265
      %v3290 = vpack.c.b16 %v3268, %v3267
      %v3291 = vpack.c.b16 %v3270, %v3269
      %v3292 = vpack.c.b16 %v3272, %v3271
      %v3293 = vpack.c.b16 %v3274, %v3273
      %v3294 = vpack.c.b16 %v3276, %v3275
      %v3295 = vpack.c.b16 %v3278, %v3277
      %v3296 = vpack.c.b16 %v3280, %v3279
      %3313 = vmatprep.subr.bf16.mxu0 0
      %3314 = vmatpush1.bf16.msra.mxu0 %v3017
      %3315 = vmatprep.subr.bf16.mxu0 0
      %3316 = vmatpush1.bf16.msra.mxu0 %v3018
      %3317 = vmatprep.subr.bf16.mxu0 0
      %3318 = vmatpush1.bf16.msra.mxu0 %v3019
      %3319 = vmatprep.subr.bf16.mxu0 0
      %3320 = vmatpush1.bf16.msra.mxu0 %v3020
      %3321 = vmatprep.subr.bf16.mxu0 0
      %3322 = vmatpush1.bf16.msra.mxu0 %v3021
      %3323 = vmatprep.subr.bf16.mxu0 0
      %3324 = vmatpush1.bf16.msra.mxu0 %v3022
      %3325 = vmatprep.subr.bf16.mxu0 0
      %3326 = vmatpush1.bf16.msra.mxu0 %v3023
      %3327 = vmatprep.subr.bf16.mxu0 0
      %3328 = vmatpush1.bf16.msra.mxu0 %v3024
      %3329 = vmatprep.subr.bf16.mxu0 0
      %3330 = vmatpush1.bf16.msra.mxu0 0
      %3331 = vmatprep.subr.bf16.mxu0 0
      %3332 = vmatpush1.bf16.msra.mxu0 0
      %3333 = vmatprep.subr.bf16.mxu0 0
      %3334 = vmatpush1.bf16.msra.mxu0 0
      %3335 = vmatprep.subr.bf16.mxu0 0
      %3336 = vmatpush1.bf16.msra.mxu0 0
      %3337 = vmatprep.subr.bf16.mxu0 0
      %3338 = vmatpush1.bf16.msra.mxu0 0
      %3339 = vmatprep.subr.bf16.mxu0 0
      %3340 = vmatpush1.bf16.msra.mxu0 0
      %3341 = vmatprep.subr.bf16.mxu0 0
      %3342 = vmatpush1.bf16.msra.mxu0 0
      %3343 = vmatprep.subr.bf16.mxu0 0
      %3344 = vmatpush1.bf16.msra.mxu0 0
      %3345 = vmatprep.mubr.bf16.mxu0 0
      %3346 = vmatmul.mubr.bf16.gmra.mrb[0].mxu0 %v3281
      %v3347 = vpop.f32.mrb[0].mxu0
      %v3348 = vadd.f32 %v3060, %v3347
      %v3349 = vpop.f32.mrb[0].mxu0
      %v3350 = vpop.f32.mrb[0].mxu0
      %v3351 = vadd.f32 %v3065, %v3350
      %v3352 = vpop.f32.mrb[0].mxu0
      %3353 = vmatprep.mubr.bf16.mxu0 0
      %3354 = vmatmul.mubr.bf16.gmra.mrb[0].mxu0 %v3282
      %v3355 = vpop.f32.mrb[0].mxu0
      %v3356 = vadd.f32 %v3070, %v3355
      %v3357 = vpop.f32.mrb[0].mxu0
      %v3358 = vpop.f32.mrb[0].mxu0
      %v3359 = vadd.f32 %v3075, %v3358
      %v3360 = vpop.f32.mrb[0].mxu0
      %3361 = vmatprep.mubr.bf16.mxu0 0
      %3362 = vmatmul.mubr.bf16.gmra.mrb[0].mxu0 %v3283
      %v3363 = vpop.f32.mrb[0].mxu0
      %v3364 = vadd.f32 %v3080, %v3363
      %v3365 = vpop.f32.mrb[0].mxu0
      %v3366 = vpop.f32.mrb[0].mxu0
      %v3367 = vadd.f32 %v3085, %v3366
      %v3368 = vpop.f32.mrb[0].mxu0
      %3369 = vmatprep.mubr.bf16.mxu0 0
      %3370 = vmatmul.mubr.bf16.gmra.mrb[0].mxu0 %v3284
      %v3371 = vpop.f32.mrb[0].mxu0
      %v3372 = vadd.f32 %v3090, %v3371
      %v3373 = vpop.f32.mrb[0].mxu0
      %v3374 = vpop.f32.mrb[0].mxu0
      %v3375 = vadd.f32 %v3095, %v3374
      %v3376 = vpop.f32.mrb[0].mxu0
      %3377 = vmatprep.mubr.bf16.mxu0 0
      %3378 = vmatmul.mubr.bf16.gmra.mrb[0].mxu0 %v3285
      %v3379 = vpop.f32.mrb[0].mxu0
      %v3380 = vadd.f32 %v3100, %v3379
      %v3381 = vpop.f32.mrb[0].mxu0
      %v3382 = vpop.f32.mrb[0].mxu0
      %v3383 = vadd.f32 %v3105, %v3382
      %v3384 = vpop.f32.mrb[0].mxu0
      %3385 = vmatprep.mubr.bf16.mxu0 0
      %3386 = vmatmul.mubr.bf16.gmra.mrb[0].mxu0 %v3286
      %v3387 = vpop.f32.mrb[0].mxu0
      %v3388 = vadd.f32 %v3110, %v3387
      %v3389 = vpop.f32.mrb[0].mxu0
      %v3390 = vpop.f32.mrb[0].mxu0
      %v3391 = vadd.f32 %v3115, %v3390
      %v3392 = vpop.f32.mrb[0].mxu0
      %3393 = vmatprep.mubr.bf16.mxu0 0
      %3394 = vmatmul.mubr.bf16.gmra.mrb[0].mxu0 %v3287
      %v3395 = vpop.f32.mrb[0].mxu0
      %v3396 = vadd.f32 %v3120, %v3395
      %v3397 = vpop.f32.mrb[0].mxu0
      %v3398 = vpop.f32.mrb[0].mxu0
      %v3399 = vadd.f32 %v3125, %v3398
      %v3400 = vpop.f32.mrb[0].mxu0
      %3401 = vmatprep.mubr.bf16.mxu0 0
      %3402 = vmatmul.mubr.bf16.gmra.mrb[0].mxu0 %v3288
      %v3403 = vpop.f32.mrb[0].mxu0
      %v3404 = vadd.f32 %v3130, %v3403
      %v3405 = vpop.f32.mrb[0].mxu0
      %v3406 = vpop.f32.mrb[0].mxu0
      %v3407 = vadd.f32 %v3135, %v3406
      %v3408 = vpop.f32.mrb[0].mxu0
      %3409 = vmatprep.mubr.bf16.mxu0 0
      %3410 = vmatmul.mubr.bf16.gmra.mrb[0].mxu0 %v3289
      %v3411 = vpop.f32.mrb[0].mxu0
      %v3412 = vadd.f32 %v3140, %v3411
      %v3413 = vpop.f32.mrb[0].mxu0
      %v3414 = vpop.f32.mrb[0].mxu0
      %v3415 = vadd.f32 %v3145, %v3414
      %v3416 = vpop.f32.mrb[0].mxu0
      %3417 = vmatprep.mubr.bf16.mxu0 0
      %3418 = vmatmul.mubr.bf16.gmra.mrb[0].mxu0 %v3290
      %v3419 = vpop.f32.mrb[0].mxu0
      %v3420 = vadd.f32 %v3150, %v3419
      %v3421 = vpop.f32.mrb[0].mxu0
      %v3422 = vpop.f32.mrb[0].mxu0
      %v3423 = vadd.f32 %v3155, %v3422
      %v3424 = vpop.f32.mrb[0].mxu0
      %3425 = vmatprep.mubr.bf16.mxu0 0
      %3426 = vmatmul.mubr.bf16.gmra.mrb[0].mxu0 %v3291
      %v3427 = vpop.f32.mrb[0].mxu0
      %v3428 = vadd.f32 %v3160, %v3427
      %v3429 = vpop.f32.mrb[0].mxu0
      %v3430 = vpop.f32.mrb[0].mxu0
      %v3431 = vadd.f32 %v3165, %v3430
      %v3432 = vpop.f32.mrb[0].mxu0
      %3433 = vmatprep.mubr.bf16.mxu0 0
      %3434 = vmatmul.mubr.bf16.gmra.mrb[0].mxu0 %v3292
      %v3435 = vpop.f32.mrb[0].mxu0
      %v3436 = vadd.f32 %v3170, %v3435
      %v3437 = vpop.f32.mrb[0].mxu0
      %v3438 = vpop.f32.mrb[0].mxu0
      %v3439 = vadd.f32 %v3175, %v3438
      %v3440 = vpop.f32.mrb[0].mxu0
      %3441 = vmatprep.mubr.bf16.mxu0 0
      %3442 = vmatmul.mubr.bf16.gmra.mrb[0].mxu0 %v3293
      %v3443 = vpop.f32.mrb[0].mxu0
      %v3444 = vadd.f32 %v3180, %v3443
      %v3445 = vpop.f32.mrb[0].mxu0
      %v3446 = vpop.f32.mrb[0].mxu0
      %v3447 = vadd.f32 %v3185, %v3446
      %v3448 = vpop.f32.mrb[0].mxu0
      %3449 = vmatprep.mubr.bf16.mxu0 0
      %3450 = vmatmul.mubr.bf16.gmra.mrb[0].mxu0 %v3294
      %v3451 = vpop.f32.mrb[0].mxu0
      %v3452 = vadd.f32 %v3190, %v3451
      %v3453 = vpop.f32.mrb[0].mxu0
      %v3454 = vpop.f32.mrb[0].mxu0
      %v3455 = vadd.f32 %v3195, %v3454
      %v3456 = vpop.f32.mrb[0].mxu0
      %3457 = vmatprep.mubr.bf16.mxu0 0
      %3458 = vmatmul.mubr.bf16.gmra.mrb[0].mxu0 %v3295
      %v3459 = vpop.f32.mrb[0].mxu0
      %v3460 = vadd.f32 %v3200, %v3459
      %v3461 = vpop.f32.mrb[0].mxu0
      %v3462 = vpop.f32.mrb[0].mxu0
      %v3463 = vadd.f32 %v3205, %v3462
      %v3464 = vpop.f32.mrb[0].mxu0
      %3465 = vmatprep.mubr.bf16.mxu0 0
      %3466 = vmatmul.mubr.bf16.gmra.mrb[0].mxu0 %v3296
      %v3467 = vpop.f32.mrb[0].mxu0
      %v3468 = vadd.f32 %v3210, %v3467
      %v3469 = vpop.f32.mrb[0].mxu0
      %v3470 = vpop.f32.mrb[0].mxu0
      %v3471 = vadd.f32 %v3215, %v3470
      %v3472 = vpop.f32.mrb[0].mxu0
      %3473 = vdwg.mxu0
      %vm3474 = vcmp.gt.f32.partialorder %v3348, 0.0
      %vm3475 = vcmp.gt.f32.partialorder %v3351, 0.0
      %vm3476 = vcmp.gt.f32.partialorder %v3356, 0.0
      %vm3477 = vcmp.gt.f32.partialorder %v3359, 0.0
      %vm3478 = vcmp.gt.f32.partialorder %v3364, 0.0
      %vm3479 = vcmp.gt.f32.partialorder %v3367, 0.0
      %vm3480 = vcmp.gt.f32.partialorder %v3372, 0.0
      %vm3481 = vcmp.gt.f32.partialorder %v3375, 0.0
      %vm3482 = vcmp.gt.f32.partialorder %v3380, 0.0
      %vm3483 = vcmp.gt.f32.partialorder %v3383, 0.0
      %vm3484 = vcmp.gt.f32.partialorder %v3388, 0.0
      %vm3485 = vcmp.gt.f32.partialorder %v3391, 0.0
      %vm3486 = vcmp.gt.f32.partialorder %v3396, 0.0
      %vm3487 = vcmp.gt.f32.partialorder %v3399, 0.0
      %vm3488 = vcmp.gt.f32.partialorder %v3404, 0.0
      %vm3489 = vcmp.gt.f32.partialorder %v3407, 0.0
      %vm3490 = vcmp.gt.f32.partialorder %v3412, 0.0
      %vm3491 = vcmp.gt.f32.partialorder %v3415, 0.0
      %vm3492 = vcmp.gt.f32.partialorder %v3420, 0.0
      %vm3493 = vcmp.gt.f32.partialorder %v3423, 0.0
      %vm3494 = vcmp.gt.f32.partialorder %v3428, 0.0
      %vm3495 = vcmp.gt.f32.partialorder %v3431, 0.0
      %vm3496 = vcmp.gt.f32.partialorder %v3436, 0.0
      %vm3497 = vcmp.gt.f32.partialorder %v3439, 0.0
      %vm3498 = vcmp.gt.f32.partialorder %v3444, 0.0
      %vm3499 = vcmp.gt.f32.partialorder %v3447, 0.0
      %vm3500 = vcmp.gt.f32.partialorder %v3452, 0.0
      %vm3501 = vcmp.gt.f32.partialorder %v3455, 0.0
      %vm3502 = vcmp.gt.f32.partialorder %v3460, 0.0
      %vm3503 = vcmp.gt.f32.partialorder %v3463, 0.0
      %vm3504 = vcmp.gt.f32.partialorder %v3468, 0.0
      %vm3505 = vcmp.gt.f32.partialorder %v3471, 0.0
      %v3506 = vmul.f32 %v3348, 0.2
      %v3507 = vmul.f32 %v3351, 0.2
      %v3508 = vmul.f32 %v3356, 0.2
      %v3509 = vmul.f32 %v3359, 0.2
      %v3510 = vmul.f32 %v3364, 0.2
      %v3511 = vmul.f32 %v3367, 0.2
      %v3512 = vmul.f32 %v3372, 0.2
      %v3513 = vmul.f32 %v3375, 0.2
      %v3514 = vmul.f32 %v3380, 0.2
      %v3515 = vmul.f32 %v3383, 0.2
      %v3516 = vmul.f32 %v3388, 0.2
      %v3517 = vmul.f32 %v3391, 0.2
      %v3518 = vmul.f32 %v3396, 0.2
      %v3519 = vmul.f32 %v3399, 0.2
      %v3520 = vmul.f32 %v3404, 0.2
      %v3521 = vmul.f32 %v3407, 0.2
      %v3522 = vmul.f32 %v3412, 0.2
      %v3523 = vmul.f32 %v3415, 0.2
      %v3524 = vmul.f32 %v3420, 0.2
      %v3525 = vmul.f32 %v3423, 0.2
      %v3526 = vmul.f32 %v3428, 0.2
      %v3527 = vmul.f32 %v3431, 0.2
      %v3528 = vmul.f32 %v3436, 0.2
      %v3529 = vmul.f32 %v3439, 0.2
      %v3530 = vmul.f32 %v3444, 0.2
      %v3531 = vmul.f32 %v3447, 0.2
      %v3532 = vmul.f32 %v3452, 0.2
      %v3533 = vmul.f32 %v3455, 0.2
      %v3534 = vmul.f32 %v3460, 0.2
      %v3535 = vmul.f32 %v3463, 0.2
      %v3536 = vmul.f32 %v3468, 0.2
      %v3537 = vmul.f32 %v3471, 0.2
      %v3538 = vsel %vm3474, %v3348, %v3506
      %v3539 = vsel %vm3475, %v3351, %v3507
      %v3540 = vsel %vm3476, %v3356, %v3508
      %v3541 = vsel %vm3477, %v3359, %v3509
      %v3542 = vsel %vm3478, %v3364, %v3510
      %v3543 = vsel %vm3479, %v3367, %v3511
      %v3544 = vsel %vm3480, %v3372, %v3512
      %v3545 = vsel %vm3481, %v3375, %v3513
      %v3546 = vsel %vm3482, %v3380, %v3514
      %v3547 = vsel %vm3483, %v3383, %v3515
      %v3548 = vsel %vm3484, %v3388, %v3516
      %v3549 = vsel %vm3485, %v3391, %v3517
      %v3550 = vsel %vm3486, %v3396, %v3518
      %v3551 = vsel %vm3487, %v3399, %v3519
      %v3552 = vsel %vm3488, %v3404, %v3520
      %v3553 = vsel %vm3489, %v3407, %v3521
      %v3554 = vsel %vm3490, %v3412, %v3522
      %v3555 = vsel %vm3491, %v3415, %v3523
      %v3556 = vsel %vm3492, %v3420, %v3524
      %v3557 = vsel %vm3493, %v3423, %v3525
      %v3558 = vsel %vm3494, %v3428, %v3526
      %v3559 = vsel %vm3495, %v3431, %v3527
      %v3560 = vsel %vm3496, %v3436, %v3528
      %v3561 = vsel %vm3497, %v3439, %v3529
      %v3562 = vsel %vm3498, %v3444, %v3530
      %v3563 = vsel %vm3499, %v3447, %v3531
      %v3564 = vsel %vm3500, %v3452, %v3532
      %v3565 = vsel %vm3501, %v3455, %v3533
      %v3566 = vsel %vm3502, %v3460, %v3534
      %v3567 = vsel %vm3503, %v3463, %v3535
      %v3568 = vsel %vm3504, %v3468, %v3536
      %v3569 = vsel %vm3505, %v3471, %v3537
      %v3570 = vpack.c.bf16 %v3539, %v3538
      %v3571 = vpack.c.bf16 %v3541, %v3540
      %v3572 = vpack.c.bf16 %v3543, %v3542
      %v3573 = vpack.c.bf16 %v3545, %v3544
      %v3574 = vpack.c.bf16 %v3547, %v3546
      %v3575 = vpack.c.bf16 %v3549, %v3548
      %v3576 = vpack.c.bf16 %v3551, %v3550
      %v3577 = vpack.c.bf16 %v3553, %v3552
      %v3578 = vpack.c.bf16 %v3555, %v3554
      %v3579 = vpack.c.bf16 %v3557, %v3556
      %v3580 = vpack.c.bf16 %v3559, %v3558
      %v3581 = vpack.c.bf16 %v3561, %v3560
      %v3582 = vpack.c.bf16 %v3563, %v3562
      %v3583 = vpack.c.bf16 %v3565, %v3564
      %v3584 = vpack.c.bf16 %v3567, %v3566
      %v3585 = vpack.c.bf16 %v3569, %v3568
      %v3602 = vunpack.c.l.b16 %v3570
      %v3603 = vunpack.c.h.b16 %v3570
      %v3604 = vunpack.c.l.b16 %v3571
      %v3605 = vunpack.c.h.b16 %v3571
      %v3606 = vunpack.c.l.b16 %v3572
      %v3607 = vunpack.c.h.b16 %v3572
      %v3608 = vunpack.c.l.b16 %v3573
      %v3609 = vunpack.c.h.b16 %v3573
      %v3610 = vunpack.c.l.b16 %v3574
      %v3611 = vunpack.c.h.b16 %v3574
      %v3612 = vunpack.c.l.b16 %v3575
      %v3613 = vunpack.c.h.b16 %v3575
      %v3614 = vunpack.c.l.b16 %v3576
      %v3615 = vunpack.c.h.b16 %v3576
      %v3616 = vunpack.c.l.b16 %v3577
      %v3617 = vunpack.c.h.b16 %v3577
      %v3618 = vunpack.c.l.b16 %v3578
      %v3619 = vunpack.c.h.b16 %v3578
      %v3620 = vunpack.c.l.b16 %v3579
      %v3621 = vunpack.c.h.b16 %v3579
      %v3622 = vunpack.c.l.b16 %v3580
      %v3623 = vunpack.c.h.b16 %v3580
      %v3624 = vunpack.c.l.b16 %v3581
      %v3625 = vunpack.c.h.b16 %v3581
      %v3626 = vunpack.c.l.b16 %v3582
      %v3627 = vunpack.c.h.b16 %v3582
      %v3628 = vunpack.c.l.b16 %v3583
      %v3629 = vunpack.c.h.b16 %v3583
      %v3630 = vunpack.c.l.b16 %v3584
      %v3631 = vunpack.c.h.b16 %v3584
      %v3632 = vunpack.c.l.b16 %v3585
      %v3633 = vunpack.c.h.b16 %v3585
      %v3634 = vpack.c.b16 %v3602, %v3602
      %v3635 = vpack.c.b16 %v3603, %v3603
      %v3636 = vpack.c.b16 %v3604, %v3604
      %v3637 = vpack.c.b16 %v3605, %v3605
      %v3638 = vpack.c.b16 %v3606, %v3606
      %v3639 = vpack.c.b16 %v3607, %v3607
      %v3640 = vpack.c.b16 %v3608, %v3608
      %v3641 = vpack.c.b16 %v3609, %v3609
      %v3642 = vpack.c.b16 %v3610, %v3610
      %v3643 = vpack.c.b16 %v3611, %v3611
      %v3644 = vpack.c.b16 %v3612, %v3612
      %v3645 = vpack.c.b16 %v3613, %v3613
      %v3646 = vpack.c.b16 %v3614, %v3614
      %v3647 = vpack.c.b16 %v3615, %v3615
      %v3648 = vpack.c.b16 %v3616, %v3616
      %v3649 = vpack.c.b16 %v3617, %v3617
      %v3650 = vpack.c.b16 %v3618, %v3618
      %v3651 = vpack.c.b16 %v3619, %v3619
      %v3652 = vpack.c.b16 %v3620, %v3620
      %v3653 = vpack.c.b16 %v3621, %v3621
      %v3654 = vpack.c.b16 %v3622, %v3622
      %v3655 = vpack.c.b16 %v3623, %v3623
      %v3656 = vpack.c.b16 %v3624, %v3624
      %v3657 = vpack.c.b16 %v3625, %v3625
      %v3658 = vpack.c.b16 %v3626, %v3626
      %v3659 = vpack.c.b16 %v3627, %v3627
      %v3660 = vpack.c.b16 %v3628, %v3628
      %v3661 = vpack.c.b16 %v3629, %v3629
      %v3662 = vpack.c.b16 %v3630, %v3630
      %v3663 = vpack.c.b16 %v3631, %v3631
      %v3664 = vpack.c.b16 %v3632, %v3632
      %v3665 = vpack.c.b16 %v3633, %v3633
      %vm3698 = vcmask 125952
      %3699 = vst.msk [vmem:[%s344] sm:$0xf] %vm3698, %v3634
      %3700 = vst.msk [vmem:[%s344 + $0x4] sm:$0xf] %vm3698, %v3635
      %3701 = vst.msk [vmem:[%s344 + $0x8] sm:$0xf] %vm3698, %v3636
      %3702 = vst.msk [vmem:[%s344 + $0xc] sm:$0xf] %vm3698, %v3637
      %3703 = vst.msk [vmem:[%s344 + $0x10] sm:$0xf] %vm3698, %v3638
      %3704 = vst.msk [vmem:[%s344 + $0x14] sm:$0xf] %vm3698, %v3639
      %3705 = vst.msk [vmem:[%s344 + $0x18] sm:$0xf] %vm3698, %v3640
      %3706 = vst.msk [vmem:[%s344 + $0x1c] sm:$0xf] %vm3698, %v3641
      %3707 = vst.msk [vmem:[%s344 + $0x20] sm:$0xf] %vm3698, %v3642
      %3708 = vst.msk [vmem:[%s344 + $0x24] sm:$0xf] %vm3698, %v3643
      %3709 = vst.msk [vmem:[%s344 + $0x28] sm:$0xf] %vm3698, %v3644
      %3710 = vst.msk [vmem:[%s344 + $0x2c] sm:$0xf] %vm3698, %v3645
      %3711 = vst.msk [vmem:[%s344 + $0x30] sm:$0xf] %vm3698, %v3646
      %3712 = vst.msk [vmem:[%s344 + $0x34] sm:$0xf] %vm3698, %v3647
      %3713 = vst.msk [vmem:[%s344 + $0x38] sm:$0xf] %vm3698, %v3648
      %3714 = vst.msk [vmem:[%s344 + $0x3c] sm:$0xf] %vm3698, %v3649
      %3715 = vst.msk [vmem:[%s344 + $0x40] sm:$0xf] %vm3698, %v3650
      %3716 = vst.msk [vmem:[%s344 + $0x44] sm:$0xf] %vm3698, %v3651
      %3717 = vst.msk [vmem:[%s344 + $0x48] sm:$0xf] %vm3698, %v3652
      %3718 = vst.msk [vmem:[%s344 + $0x4c] sm:$0xf] %vm3698, %v3653
      %3719 = vst.msk [vmem:[%s344 + $0x50] sm:$0xf] %vm3698, %v3654
      %3720 = vst.msk [vmem:[%s344 + $0x54] sm:$0xf] %vm3698, %v3655
      %3721 = vst.msk [vmem:[%s344 + $0x58] sm:$0xf] %vm3698, %v3656
      %3722 = vst.msk [vmem:[%s344 + $0x5c] sm:$0xf] %vm3698, %v3657
      %3723 = vst.msk [vmem:[%s344 + $0x60] sm:$0xf] %vm3698, %v3658
      %3724 = vst.msk [vmem:[%s344 + $0x64] sm:$0xf] %vm3698, %v3659
      %3725 = vst.msk [vmem:[%s344 + $0x68] sm:$0xf] %vm3698, %v3660
      %3726 = vst.msk [vmem:[%s344 + $0x6c] sm:$0xf] %vm3698, %v3661
      %3727 = vst.msk [vmem:[%s344 + $0x70] sm:$0xf] %vm3698, %v3662
      %3728 = vst.msk [vmem:[%s344 + $0x74] sm:$0xf] %vm3698, %v3663
      %3729 = vst.msk [vmem:[%s344 + $0x78] sm:$0xf] %vm3698, %v3664
      %3730 = vst.msk [vmem:[%s344 + $0x7c] sm:$0xf] %vm3698, %v3665
      %vm3731 = vcmask 130048
      %v3732 = vsel %vm3731, %v3538, -inf
      %3733 = vmax.xlane.f32.xlu0 %v3732
      %v3734 = vpop.xlane.xlu0 %3733
      %v3735 = vsel %vm3731, %v3539, -inf
      %3736 = vmax.xlane.f32.xlu0 %v3735
      %v3737 = vpop.xlane.xlu0 %3736
      %v3738 = vsel %vm3731, %v3540, -inf
      %3739 = vmax.xlane.f32.xlu0 %v3738
      %v3740 = vpop.xlane.xlu0 %3739
      %v3741 = vsel %vm3731, %v3541, -inf
      %3742 = vmax.xlane.f32.xlu0 %v3741
      %v3743 = vpop.xlane.xlu0 %3742
      %v3744 = vsel %vm3731, %v3542, -inf
      %3745 = vmax.xlane.f32.xlu0 %v3744
      %v3746 = vpop.xlane.xlu0 %3745
      %v3747 = vsel %vm3731, %v3543, -inf
      %3748 = vmax.xlane.f32.xlu0 %v3747
      %v3749 = vpop.xlane.xlu0 %3748
      %v3750 = vsel %vm3731, %v3544, -inf
      %3751 = vmax.xlane.f32.xlu0 %v3750
      %v3752 = vpop.xlane.xlu0 %3751
      %v3753 = vsel %vm3731, %v3545, -inf
      %3754 = vmax.xlane.f32.xlu0 %v3753
      %v3755 = vpop.xlane.xlu0 %3754
      %v3756 = vsel %vm3731, %v3546, -inf
      %3757 = vmax.xlane.f32.xlu0 %v3756
      %v3758 = vpop.xlane.xlu0 %3757
      %v3759 = vsel %vm3731, %v3547, -inf
      %3760 = vmax.xlane.f32.xlu0 %v3759
      %v3761 = vpop.xlane.xlu0 %3760
      %v3762 = vsel %vm3731, %v3548, -inf
      %3763 = vmax.xlane.f32.xlu0 %v3762
      %v3764 = vpop.xlane.xlu0 %3763
      %v3765 = vsel %vm3731, %v3549, -inf
      %3766 = vmax.xlane.f32.xlu0 %v3765
      %v3767 = vpop.xlane.xlu0 %3766
      %v3768 = vsel %vm3731, %v3550, -inf
      %3769 = vmax.xlane.f32.xlu0 %v3768
      %v3770 = vpop.xlane.xlu0 %3769
      %v3771 = vsel %vm3731, %v3551, -inf
      %3772 = vmax.xlane.f32.xlu0 %v3771
      %v3773 = vpop.xlane.xlu0 %3772
      %v3774 = vsel %vm3731, %v3552, -inf
      %3775 = vmax.xlane.f32.xlu0 %v3774
      %v3776 = vpop.xlane.xlu0 %3775
      %v3777 = vsel %vm3731, %v3553, -inf
      %3778 = vmax.xlane.f32.xlu0 %v3777
      %v3779 = vpop.xlane.xlu0 %3778
      %v3780 = vsel %vm3731, %v3554, -inf
      %3781 = vmax.xlane.f32.xlu0 %v3780
      %v3782 = vpop.xlane.xlu0 %3781
      %v3783 = vsel %vm3731, %v3555, -inf
      %3784 = vmax.xlane.f32.xlu0 %v3783
      %v3785 = vpop.xlane.xlu0 %3784
      %v3786 = vsel %vm3731, %v3556, -inf
      %3787 = vmax.xlane.f32.xlu0 %v3786
      %v3788 = vpop.xlane.xlu0 %3787
      %v3789 = vsel %vm3731, %v3557, -inf
      %3790 = vmax.xlane.f32.xlu0 %v3789
      %v3791 = vpop.xlane.xlu0 %3790
      %v3792 = vsel %vm3731, %v3558, -inf
      %3793 = vmax.xlane.f32.xlu0 %v3792
      %v3794 = vpop.xlane.xlu0 %3793
      %v3795 = vsel %vm3731, %v3559, -inf
      %3796 = vmax.xlane.f32.xlu0 %v3795
      %v3797 = vpop.xlane.xlu0 %3796
      %v3798 = vsel %vm3731, %v3560, -inf
      %3799 = vmax.xlane.f32.xlu0 %v3798
      %v3800 = vpop.xlane.xlu0 %3799
      %v3801 = vsel %vm3731, %v3561, -inf
      %3802 = vmax.xlane.f32.xlu0 %v3801
      %v3803 = vpop.xlane.xlu0 %3802
      %v3804 = vsel %vm3731, %v3562, -inf
      %3805 = vmax.xlane.f32.xlu0 %v3804
      %v3806 = vpop.xlane.xlu0 %3805
      %v3807 = vsel %vm3731, %v3563, -inf
      %3808 = vmax.xlane.f32.xlu0 %v3807
      %v3809 = vpop.xlane.xlu0 %3808
      %v3810 = vsel %vm3731, %v3564, -inf
      %3811 = vmax.xlane.f32.xlu0 %v3810
      %v3812 = vpop.xlane.xlu0 %3811
      %v3813 = vsel %vm3731, %v3565, -inf
      %3814 = vmax.xlane.f32.xlu0 %v3813
      %v3815 = vpop.xlane.xlu0 %3814
      %v3816 = vsel %vm3731, %v3566, -inf
      %3817 = vmax.xlane.f32.xlu0 %v3816
      %v3818 = vpop.xlane.xlu0 %3817
      %v3819 = vsel %vm3731, %v3567, -inf
      %3820 = vmax.xlane.f32.xlu0 %v3819
      %v3821 = vpop.xlane.xlu0 %3820
      %v3822 = vsel %vm3731, %v3568, -inf
      %3823 = vmax.xlane.f32.xlu0 %v3822
      %v3824 = vpop.xlane.xlu0 %3823
      %v3825 = vsel %vm3731, %v3569, -inf
      %3826 = vmax.xlane.f32.xlu0 %v3825
      %v3827 = vpop.xlane.xlu0 %3826
      %p3828 = scmp.eq.s32.totalorder %s25, 0
      // Predicated region
      $region49: #{point_shift_net.2} parent=47 // pred_check
        %p3829 = pneg %p3828
      $region50: #{point_shift_net.2} parent=47 // pred_check_branch
        %3831 = sbr.rel (%p3829) target = $region52
      $region51: #{point_shift_net.2} parent=47 // pred_region
        %vm3832 = vcmask 7168
        %3833 = vst.msk [vmem:[%s349] sm:$0xff] %vm3832, -inf
        %3834 = vst.msk [vmem:[%s349 + $0x8] sm:$0xff] %vm3832, -inf
        %3835 = vst.msk [vmem:[%s349 + $0x10] sm:$0xff] %vm3832, -inf
        %3836 = vst.msk [vmem:[%s349 + $0x18] sm:$0xff] %vm3832, -inf
        %3837 = vst.msk [vmem:[%s349 + $0x20] sm:$0xff] %vm3832, -inf
        %3838 = vst.msk [vmem:[%s349 + $0x28] sm:$0xff] %vm3832, -inf
        %3839 = vst.msk [vmem:[%s349 + $0x30] sm:$0xff] %vm3832, -inf
        %3840 = vst.msk [vmem:[%s349 + $0x38] sm:$0xff] %vm3832, -inf
        %3841 = vst.msk [vmem:[%s349 + $0x40] sm:$0xff] %vm3832, -inf
        %3842 = vst.msk [vmem:[%s349 + $0x48] sm:$0xff] %vm3832, -inf
        %3843 = vst.msk [vmem:[%s349 + $0x50] sm:$0xff] %vm3832, -inf
        %3844 = vst.msk [vmem:[%s349 + $0x58] sm:$0xff] %vm3832, -inf
        %3845 = vst.msk [vmem:[%s349 + $0x60] sm:$0xff] %vm3832, -inf
        %3846 = vst.msk [vmem:[%s349 + $0x68] sm:$0xff] %vm3832, -inf
        %3847 = vst.msk [vmem:[%s349 + $0x70] sm:$0xff] %vm3832, -inf
        %3848 = vst.msk [vmem:[%s349 + $0x78] sm:$0xff] %vm3832, -inf
        %3849 = vst.msk [vmem:[%s349 + $0x80] sm:$0xff] %vm3832, -inf
        %3850 = vst.msk [vmem:[%s349 + $0x88] sm:$0xff] %vm3832, -inf
        %3851 = vst.msk [vmem:[%s349 + $0x90] sm:$0xff] %vm3832, -inf
        %3852 = vst.msk [vmem:[%s349 + $0x98] sm:$0xff] %vm3832, -inf
        %3853 = vst.msk [vmem:[%s349 + $0xa0] sm:$0xff] %vm3832, -inf
        %3854 = vst.msk [vmem:[%s349 + $0xa8] sm:$0xff] %vm3832, -inf
        %3855 = vst.msk [vmem:[%s349 + $0xb0] sm:$0xff] %vm3832, -inf
        %3856 = vst.msk [vmem:[%s349 + $0xb8] sm:$0xff] %vm3832, -inf
        %3857 = vst.msk [vmem:[%s349 + $0xc0] sm:$0xff] %vm3832, -inf
        %3858 = vst.msk [vmem:[%s349 + $0xc8] sm:$0xff] %vm3832, -inf
        %3859 = vst.msk [vmem:[%s349 + $0xd0] sm:$0xff] %vm3832, -inf
        %3860 = vst.msk [vmem:[%s349 + $0xd8] sm:$0xff] %vm3832, -inf
        %3861 = vst.msk [vmem:[%s349 + $0xe0] sm:$0xff] %vm3832, -inf
        %3862 = vst.msk [vmem:[%s349 + $0xe8] sm:$0xff] %vm3832, -inf
        %3863 = vst.msk [vmem:[%s349 + $0xf0] sm:$0xff] %vm3832, -inf
        %3864 = vst.msk [vmem:[%s349 + $0xf8] sm:$0xff] %vm3832, -inf
      $region52: #{point_shift_net.2} parent=47 // pred_fallthru
        _
      %v3865 = vld [vmem:[%s349] sm:$0xff]
      %v3866 = vld [vmem:[%s349 + $0x8] sm:$0xff]
      %v3867 = vld [vmem:[%s349 + $0x10] sm:$0xff]
      %v3868 = vld [vmem:[%s349 + $0x18] sm:$0xff]
      %v3869 = vld [vmem:[%s349 + $0x20] sm:$0xff]
      %v3870 = vld [vmem:[%s349 + $0x28] sm:$0xff]
      %v3871 = vld [vmem:[%s349 + $0x30] sm:$0xff]
      %v3872 = vld [vmem:[%s349 + $0x38] sm:$0xff]
      %v3873 = vld [vmem:[%s349 + $0x40] sm:$0xff]
      %v3874 = vld [vmem:[%s349 + $0x48] sm:$0xff]
      %v3875 = vld [vmem:[%s349 + $0x50] sm:$0xff]
      %v3876 = vld [vmem:[%s349 + $0x58] sm:$0xff]
      %v3877 = vld [vmem:[%s349 + $0x60] sm:$0xff]
      %v3878 = vld [vmem:[%s349 + $0x68] sm:$0xff]
      %v3879 = vld [vmem:[%s349 + $0x70] sm:$0xff]
      %v3880 = vld [vmem:[%s349 + $0x78] sm:$0xff]
      %v3881 = vld [vmem:[%s349 + $0x80] sm:$0xff]
      %v3882 = vld [vmem:[%s349 + $0x88] sm:$0xff]
      %v3883 = vld [vmem:[%s349 + $0x90] sm:$0xff]
      %v3884 = vld [vmem:[%s349 + $0x98] sm:$0xff]
      %v3885 = vld [vmem:[%s349 + $0xa0] sm:$0xff]
      %v3886 = vld [vmem:[%s349 + $0xa8] sm:$0xff]
      %v3887 = vld [vmem:[%s349 + $0xb0] sm:$0xff]
      %v3888 = vld [vmem:[%s349 + $0xb8] sm:$0xff]
      %v3889 = vld [vmem:[%s349 + $0xc0] sm:$0xff]
      %v3890 = vld [vmem:[%s349 + $0xc8] sm:$0xff]
      %v3891 = vld [vmem:[%s349 + $0xd0] sm:$0xff]
      %v3892 = vld [vmem:[%s349 + $0xd8] sm:$0xff]
      %v3893 = vld [vmem:[%s349 + $0xe0] sm:$0xff]
      %v3894 = vld [vmem:[%s349 + $0xe8] sm:$0xff]
      %v3895 = vld [vmem:[%s349 + $0xf0] sm:$0xff]
      %v3896 = vld [vmem:[%s349 + $0xf8] sm:$0xff]
      %v3897 = vmax.f32 %v3865, %v3734
      %v3898 = vmax.f32 %v3866, %v3737
      %v3899 = vmax.f32 %v3867, %v3740
      %v3900 = vmax.f32 %v3868, %v3743
      %v3901 = vmax.f32 %v3869, %v3746
      %v3902 = vmax.f32 %v3870, %v3749
      %v3903 = vmax.f32 %v3871, %v3752
      %v3904 = vmax.f32 %v3872, %v3755
      %v3905 = vmax.f32 %v3873, %v3758
      %v3906 = vmax.f32 %v3874, %v3761
      %v3907 = vmax.f32 %v3875, %v3764
      %v3908 = vmax.f32 %v3876, %v3767
      %v3909 = vmax.f32 %v3877, %v3770
      %v3910 = vmax.f32 %v3878, %v3773
      %v3911 = vmax.f32 %v3879, %v3776
      %v3912 = vmax.f32 %v3880, %v3779
      %v3913 = vmax.f32 %v3881, %v3782
      %v3914 = vmax.f32 %v3882, %v3785
      %v3915 = vmax.f32 %v3883, %v3788
      %v3916 = vmax.f32 %v3884, %v3791
      %v3917 = vmax.f32 %v3885, %v3794
      %v3918 = vmax.f32 %v3886, %v3797
      %v3919 = vmax.f32 %v3887, %v3800
      %v3920 = vmax.f32 %v3888, %v3803
      %v3921 = vmax.f32 %v3889, %v3806
      %v3922 = vmax.f32 %v3890, %v3809
      %v3923 = vmax.f32 %v3891, %v3812
      %v3924 = vmax.f32 %v3892, %v3815
      %v3925 = vmax.f32 %v3893, %v3818
      %v3926 = vmax.f32 %v3894, %v3821
      %v3927 = vmax.f32 %v3895, %v3824
      %v3928 = vmax.f32 %v3896, %v3827
      %vm3929 = vcmask 7168
      %3930 = vst.msk [vmem:[%s349] sm:$0xff] %vm3929, %v3897
      %3931 = vst.msk [vmem:[%s349 + $0x8] sm:$0xff] %vm3929, %v3898
      %3932 = vst.msk [vmem:[%s349 + $0x10] sm:$0xff] %vm3929, %v3899
      %3933 = vst.msk [vmem:[%s349 + $0x18] sm:$0xff] %vm3929, %v3900
      %3934 = vst.msk [vmem:[%s349 + $0x20] sm:$0xff] %vm3929, %v3901
      %3935 = vst.msk [vmem:[%s349 + $0x28] sm:$0xff] %vm3929, %v3902
      %3936 = vst.msk [vmem:[%s349 + $0x30] sm:$0xff] %vm3929, %v3903
      %3937 = vst.msk [vmem:[%s349 + $0x38] sm:$0xff] %vm3929, %v3904
      %3938 = vst.msk [vmem:[%s349 + $0x40] sm:$0xff] %vm3929, %v3905
      %3939 = vst.msk [vmem:[%s349 + $0x48] sm:$0xff] %vm3929, %v3906
      %3940 = vst.msk [vmem:[%s349 + $0x50] sm:$0xff] %vm3929, %v3907
      %3941 = vst.msk [vmem:[%s349 + $0x58] sm:$0xff] %vm3929, %v3908
      %3942 = vst.msk [vmem:[%s349 + $0x60] sm:$0xff] %vm3929, %v3909
      %3943 = vst.msk [vmem:[%s349 + $0x68] sm:$0xff] %vm3929, %v3910
      %3944 = vst.msk [vmem:[%s349 + $0x70] sm:$0xff] %vm3929, %v3911
      %3945 = vst.msk [vmem:[%s349 + $0x78] sm:$0xff] %vm3929, %v3912
      %3946 = vst.msk [vmem:[%s349 + $0x80] sm:$0xff] %vm3929, %v3913
      %3947 = vst.msk [vmem:[%s349 + $0x88] sm:$0xff] %vm3929, %v3914
      %3948 = vst.msk [vmem:[%s349 + $0x90] sm:$0xff] %vm3929, %v3915
      %3949 = vst.msk [vmem:[%s349 + $0x98] sm:$0xff] %vm3929, %v3916
      %3950 = vst.msk [vmem:[%s349 + $0xa0] sm:$0xff] %vm3929, %v3917
      %3951 = vst.msk [vmem:[%s349 + $0xa8] sm:$0xff] %vm3929, %v3918
      %3952 = vst.msk [vmem:[%s349 + $0xb0] sm:$0xff] %vm3929, %v3919
      %3953 = vst.msk [vmem:[%s349 + $0xb8] sm:$0xff] %vm3929, %v3920
      %3954 = vst.msk [vmem:[%s349 + $0xc0] sm:$0xff] %vm3929, %v3921
      %3955 = vst.msk [vmem:[%s349 + $0xc8] sm:$0xff] %vm3929, %v3922
      %3956 = vst.msk [vmem:[%s349 + $0xd0] sm:$0xff] %vm3929, %v3923
      %3957 = vst.msk [vmem:[%s349 + $0xd8] sm:$0xff] %vm3929, %v3924
      %3958 = vst.msk [vmem:[%s349 + $0xe0] sm:$0xff] %vm3929, %v3925
      %3959 = vst.msk [vmem:[%s349 + $0xe8] sm:$0xff] %vm3929, %v3926
      %3960 = vst.msk [vmem:[%s349 + $0xf0] sm:$0xff] %vm3929, %v3927
      %3961 = vst.msk [vmem:[%s349 + $0xf8] sm:$0xff] %vm3929, %v3928
      %p3962 = scmp.lt.s32.totalorder %s24, 1
      %s3963 = scalar_select %p3962, %s24, 1
      %p3964 = scmp.lt.s32.totalorder %s25, 0
      %s3965 = scalar_select %p3964, %s25, 0
      %s3966 = smul.addr %s3963, 32
      %s3967 = sadd.s32 %s3965, %s3966
      %s3968 = smul.addr %s3967, 4
      %s3969 = scalar_lea.vmem %s7, %s3968
      %p3970 = scmp.lt.s32.totalorder %s24, 1
      %s3971 = scalar_select %p3970, %s24, 1
      %s3972 = smul.addr %s3971, 32
      %s3973 = smul.addr %s3972, 8
      %s3974 = scalar_lea.vmem %s8, %s3973
      // Predicated region
      $region53: #{point_shift_net.2} parent=47 // pred_check
        %p3975 = pneg %p206
      $region54: #{point_shift_net.2} parent=47 // pred_check_branch
        %3977 = sbr.rel (%p3975) target = $region56
      $region55: #{point_shift_net.2} parent=47 // pred_region
        _
      $region56: #{point_shift_net.2} parent=47 // pred_fallthru
        _
      // Predicated region
      $region57: #{point_shift_net.2} parent=47 // pred_check
        %p3978 = pneg %p232
      $region58: #{point_shift_net.2} parent=47 // pred_check_branch
        %3980 = sbr.rel (%p3978) target = $region60
      $region59: #{point_shift_net.2} parent=47 // pred_region
        _
      $region60: #{point_shift_net.2} parent=47 // pred_fallthru
        _
    $region48: #{point_shift_net.2} parent=5 // pred_fallthru
      _
    %p3981 = scmp.le.s32.totalorder 2, %s15
    // Predicated region
    $region61: #{point_shift_net.2} parent=5 // pred_check
      %p3982 = pneg %p3981
    $region62: #{point_shift_net.2} parent=5 // pred_check_branch
      %3984 = sbr.rel (%p3982) target = $region64
    $region63: #{point_shift_net.2} parent=5 // pred_region
      %s3985 = ssub.s32 %s15, 2
      // Predicated region
      $region65: #{point_shift_net.2} parent=63 // pred_check
        %p3986 = pneg %p212
      $region66: #{point_shift_net.2} parent=63 // pred_check_branch
        %3988 = sbr.rel (%p3986) target = $region68
      $region67: #{point_shift_net.2} parent=63 // pred_region
        %p3989 = scmp.lt.s32.totalorder %s26, 1
        %s3990 = scalar_select %p3989, %s26, 1
        %p3991 = scmp.lt.s32.totalorder %s27, 0
        %s3992 = scalar_select %p3991, %s27, 0
        %s3993 = smul.addr %s3990, 32
        %s3994 = sadd.s32 %s3992, %s3993
        %s3995 = smul.addr %s3994, 4
        %s3996 = scalar_lea.vmem %s7, %s3995
      $region68: #{point_shift_net.2} parent=63 // pred_fallthru
        _
      // Predicated region
      $region69: #{point_shift_net.2} parent=63 // pred_check
        %p3997 = pneg %p238
      $region70: #{point_shift_net.2} parent=63 // pred_check_branch
        %3999 = sbr.rel (%p3997) target = $region72
      $region71: #{point_shift_net.2} parent=63 // pred_region
        %p4000 = scmp.lt.s32.totalorder %s26, 1
        %s4001 = scalar_select %p4000, %s26, 1
        %s4002 = smul.addr %s4001, 32
        %s4003 = smul.addr %s4002, 8
        %s4004 = scalar_lea.vmem %s8, %s4003
      $region72: #{point_shift_net.2} parent=63 // pred_fallthru
        _
    $region64: #{point_shift_net.2} parent=5 // pred_fallthru
      _
  $region6: #{point_shift_net.2} parent=0 // loop_footer
    %s19 = sadd.s32 1, %s15
  $region7: #{point_shift_net.2} parent=0 // loop_footer_branch
    %14 = sbr.rel target = $region3
  $region8: #{point_shift_net.2} parent=0 // loop_exit
    _

</llo_original>
